<compile_context>
chip_gen: v6e
topology: v6e:2x2x1
jax: 0.10.0
libtpu: 0.0.40
codegen_flags: <defaults>
</compile_context>

<pallas_src>
import jax
import jax.numpy as jnp
from jax.experimental import pallas as pl
from jax.experimental.pallas import tpu as pltpu

HIGHEST = jax.lax.Precision.HIGHEST


def _round_up(n, m):
    return ((n + m - 1) // m) * m


def _fold_convs(w0, b0, w1, b1, V, L):
    """Fold the two k=3 / pad=1 Conv1d layers into dense matmul operands."""
    jl = jnp.arange(L)
    diff = jl[:, None] - jl[None, :]            # [j, l] = j - l
    tap = diff + 1
    valid = (tap >= 0) & (tap <= 2)
    tap_c = jnp.clip(tap, 0, 2)
    # conv0:  pro[b, l]      = b0    + sum_{v,j} x[b, v*L+j] * w0[v, j-l+1]
    M0 = jnp.where(valid[None], w0[:, tap_c], 0.0).reshape(V * L, L)
    # conv1:  xbar[b, v*L+l] = b1[v] + sum_j    xb[b, j]     * w1[v, j-l+1]
    M1 = jnp.transpose(jnp.where(valid[None], w1[:, tap_c], 0.0),
                       (1, 0, 2)).reshape(L, V * L)
    b0_row = jnp.full((L,), b0[0], dtype=jnp.float32)
    b1_row = jnp.repeat(b1.astype(jnp.float32), L)
    return M0, b0_row, M1, b1_row


def ae_forward(x, params, *, validate_padding=False):
    """Runs the AE forward pass as one Pallas kernel.  Returns
    (x_bar, enc_h1, enc_h2, enc_h3, z, pro_x) like the PyTorch module."""
    (w0, b0, w1, b1,
     we1, be1, we2, be2, we3, be3,
     wz, bz, wd1, bd1, wd2, bd2, wd3, bd3, wxb, bxb) = params

    B, V, L = x.shape
    M0, b0_row, M1, b1_row = _fold_convs(w0, b0, w1, b1, V, L)

    # Layer order: conv0, enc1, enc2, enc3, z, dec1, dec2, dec3, x_bar, conv1.
    raw_w = (M0, we1, we2, we3, wz, wd1, wd2, wd3, wxb, M1)
    raw_b = (b0_row, be1, be2, be3, bz, bd1, bd2, bd3, bxb, b1_row)
    RELU = (False, True, True, True, False, True, True, True, True, False)
    STORE = (0, 1, 2, 3, 4, None, None, None, None, 5)   # output-slab slot

    n_layers = len(raw_w)
    in_dim = [int(w.shape[0]) for w in raw_w]
    out_dim = [int(w.shape[1]) for w in raw_w]
    in_pad = [_round_up(d, 128) for d in in_dim]
    out_pad = [_round_up(d, 128) for d in out_dim]

    # --- per-layer padded operands: bf16 weights, f32 biases ---
    def pad_w(w, rp, cp):
        w = w.astype(jnp.float32)
        w = jnp.pad(w, ((0, rp - w.shape[0]), (0, cp - w.shape[1])))
        return w.astype(jnp.bfloat16)

    def pad_b(b, cp):
        b = jnp.ravel(b).astype(jnp.float32)
        return jnp.pad(b, (0, cp - b.shape[0])).reshape(1, cp)

    w_list = [pad_w(w, in_pad[i], out_pad[i]) for i, w in enumerate(raw_w)]
    b_list = [pad_b(b, out_pad[i]) for i, b in enumerate(raw_b)]

    # --- packed output slab: per-output widths rounded to 128 (not uniform P) ---
    store_layers = [0, 1, 2, 3, 4, 9]
    out_real = [out_dim[i] for i in store_layers]
    out_w = [out_pad[i] for i in store_layers]
    offs = [0]
    for w_ in out_w:
        offs.append(offs[-1] + w_)
    OUT_TOTAL = offs[-1]

    # --- batch tiling ---
    if B > 512:
        TB = 512                                  # big tiles amortize step overhead
    elif B > 8:
        TB = _round_up((B + 1) // 2, 8)           # 2 grid steps -> both v7x TCs busy
    else:
        TB = _round_up(B, 8)                      # tiny batch: single step
    B_pad = _round_up(B, TB)
    grid = (B_pad // TB,)

    IN0P = in_pad[0]
    x_flat = x.reshape(B, V * L).astype(jnp.float32)
    x_p = jnp.pad(x_flat, ((0, B_pad - B), (0, IN0P - V * L))).astype(jnp.bfloat16)

    # --- scoped VMEM budget: weights (worst case double-buffered) + I/O tiles ---
    w_bytes = sum(int(w.size) * 2 for w in w_list) + sum(int(b.size) * 4 for b in b_list)
    io_bytes = 2 * TB * IN0P * 2 + 2 * TB * OUT_TOTAL * 4
    need = 2 * w_bytes + io_bytes + (2 << 20)
    vmem_limit = int(min(max(need, 32 << 20), 128 << 20))

    def kernel(*refs):
        x_ref = refs[0]
        w_refs = refs[1:1 + n_layers]
        b_refs = refs[1 + n_layers:1 + 2 * n_layers]
        out_ref = refs[1 + 2 * n_layers]
        h = x_ref[...]                                         # bf16 (TB, IN0P)
        for i in range(n_layers):
            acc = jnp.dot(h, w_refs[i][...],
                          preferred_element_type=jnp.float32)  # f32 accumulate
            acc = acc + b_refs[i][...]
            if RELU[i]:
                acc = jnp.maximum(acc, 0.0)
            s = STORE[i]
            if s is not None:
                # 128-aligned, lane-dense f32 store into the packed output slab.
                out_ref[:, offs[s]:offs[s] + out_w[s]] = acc
            h = acc.astype(jnp.bfloat16)                       # bf16 carry

    def run(single_buffer_weights):
        res = {}
        if single_buffer_weights:
            # Constant index_map -> weights never re-DMA; request 1 buffer.
            res = dict(pipeline_mode=pl.Buffered(1))
        x_spec = pl.BlockSpec((TB, IN0P), lambda i: (i, 0))
        w_specs = [pl.BlockSpec(tuple(w.shape), lambda i: (0, 0), **res)
                   for w in w_list]
        b_specs = [pl.BlockSpec(tuple(b.shape), lambda i: (0, 0), **res)
                   for b in b_list]
        out_spec = pl.BlockSpec((TB, OUT_TOTAL), lambda i: (i, 0))
        fn = pl.pallas_call(
            kernel,
            out_shape=jax.ShapeDtypeStruct((B_pad, OUT_TOTAL), jnp.float32),
            grid=grid,
            in_specs=[x_spec] + w_specs + b_specs,
            out_specs=out_spec,
            compiler_params=pltpu.CompilerParams(
                dimension_semantics=("parallel",),
                vmem_limit_bytes=vmem_limit),
        )
        return fn(x_p, *w_list, *b_list)

    try:
        out = jax.block_until_ready(run(True))
    except Exception:
        # pl.Buffered(1) not supported by this jax version -> fall back to the
        # default double-buffered resident weights (identical results).
        out = jax.block_until_ready(run(False))

    if validate_padding:
        # Padded lanes must be exactly zero (zero weight cols / bias lanes).
        for s in range(6):
            pad_cols = out[:B, offs[s] + out_real[s]:offs[s] + out_w[s]]
            if pad_cols.size:
                assert not bool(jnp.any(pad_cols != 0.0)), \
                    f"nonzero padded lanes in output slot {s}"

    pro = out[:B, offs[0]:offs[0] + L]
    h1 = out[:B, offs[1]:offs[1] + out_dim[1]]
    h2 = out[:B, offs[2]:offs[2] + out_dim[2]]
    h3 = out[:B, offs[3]:offs[3] + out_dim[3]]
    z = out[:B, offs[4]:offs[4] + out_dim[4]]
    xbar = out[:B, offs[5]:offs[5] + V * L].reshape(B, V, L)
    return xbar, h1, h2, h3, z, pro


def ae_reference(x, params):
    """Pure-JAX f32 reference mirroring the PyTorch forward (eval mode)."""
    (w0, b0, w1, b1,
     we1, be1, we2, be2, we3, be3,
     wz, bz, wd1, bd1, wd2, bd2, wd3, bd3, wxb, bxb) = params
    B, V, L = x.shape
    relu = lambda t: jnp.maximum(t, 0.0)
    dot = lambda a, b: jnp.dot(a, b, precision=HIGHEST)

    xp = jnp.pad(x, ((0, 0), (0, 0), (1, 1)))
    pro = b0[0] + sum(jnp.einsum('bvl,v->bl', xp[:, :, k:k + L], w0[:, k],
                                 precision=HIGHEST) for k in range(3))
    h1 = relu(dot(pro, we1) + be1)
    h2 = relu(dot(h1, we2) + be2)
    h3 = relu(dot(h2, we3) + be3)
    z = dot(h3, wz) + bz
    d1 = relu(dot(z, wd1) + bd1)
    d2 = relu(dot(d1, wd2) + bd2)
    d3 = relu(dot(d2, wd3) + bd3)
    xb = relu(dot(d3, wxb) + bxb)
    xbp = jnp.pad(xb, ((0, 0), (1, 1)))
    xbar = jnp.stack(
        [sum(w1[v, k] * xbp[:, k:k + L] for k in range(3)) + b1[v]
         for v in range(V)], axis=1)
    return xbar, h1, h2, h3, z, pro


def make_params(key, variable_num, n_input, n_enc_1, n_enc_2, n_enc_3,
                n_z, n_dec_1, n_dec_2, n_dec_3):
    ks = jax.random.split(key, 20)
    u = lambda k, shape, s=0.2: jax.random.uniform(k, shape, jnp.float32, -s, s)
    # Conv1d weights: conv0 (1, V, 3) stored as (V, 3); conv1 (V, 1, 3) as (V, 3).
    w0, b0 = u(ks[0], (variable_num, 3)), u(ks[1], (1,))
    w1, b1 = u(ks[2], (variable_num, 3)), u(ks[3], (variable_num,))

    # Linear weights stored transposed (in, out); biases as (1, out).
    def lin_p(kw, kb, n_in, n_out):
        return u(kw, (n_in, n_out)), u(kb, (1, n_out))

    we1, be1 = lin_p(ks[4], ks[5], n_input, n_enc_1)
    we2, be2 = lin_p(ks[6], ks[7], n_enc_1, n_enc_2)
    we3, be3 = lin_p(ks[8], ks[9], n_enc_2, n_enc_3)
    wz, bz = lin_p(ks[10], ks[11], n_enc_3, n_z)
    wd1, bd1 = lin_p(ks[12], ks[13], n_z, n_dec_1)
    wd2, bd2 = lin_p(ks[14], ks[15], n_dec_1, n_dec_2)
    wd3, bd3 = lin_p(ks[16], ks[17], n_dec_2, n_dec_3)
    wxb, bxb = lin_p(ks[18], ks[19], n_dec_3, n_input)
    return (w0, b0, w1, b1, we1, be1, we2, be2, we3, be3,
            wz, bz, wd1, bd1, wd2, bd2, wd3, bd3, wxb, bxb)


if __name__ == "__main__":
    # Small shapes consistent with the module: x is (batch, variable_num, n_input).
    B, variable_num, n_input = 2, 4, 16
    n_enc_1 = n_enc_2 = n_enc_3 = 32
    n_dec_1 = n_dec_2 = n_dec_3 = 32
    n_z = 8

    key = jax.random.PRNGKey(0)
    kx, kp = jax.random.split(key)
    x = jax.random.normal(kx, (B, variable_num, n_input), dtype=jnp.float32)
    params = make_params(kp, variable_num, n_input, n_enc_1, n_enc_2, n_enc_3,
                         n_z, n_dec_1, n_dec_2, n_dec_3)

    outs = ae_forward(x, params, validate_padding=True)
    outs = jax.block_until_ready(outs)

    refs = ae_reference(x, params)
    names = ("x_bar", "enc_h1", "enc_h2", "enc_h3", "z", "pro_x")
    # Kernel uses bf16 storage + default MXU precision (bf16 mantissa);
    # tolerance is relaxed accordingly vs the f32 HIGHEST-precision reference.
    for name, o, r in zip(names, outs, refs):
        assert o.shape == r.shape, (name, o.shape, r.shape)
        err = float(jnp.max(jnp.abs(o - r)))
        assert jnp.allclose(o, r, rtol=2e-2, atol=2e-2), (name, err)

    print("KERNEL_OK")
</pallas_src>

<mosaic_0001>
module attributes {stable_mosaic.version = 11 : i64} {
  func.func @kernel(%arg0: i32, %arg1: memref<8x128xbf16, #tpu.memory_space<vmem>>, %arg2: memref<128x128xbf16, #tpu.memory_space<vmem>>, %arg3: memref<128x128xbf16, #tpu.memory_space<vmem>>, %arg4: memref<128x128xbf16, #tpu.memory_space<vmem>>, %arg5: memref<128x128xbf16, #tpu.memory_space<vmem>>, %arg6: memref<128x128xbf16, #tpu.memory_space<vmem>>, %arg7: memref<128x128xbf16, #tpu.memory_space<vmem>>, %arg8: memref<128x128xbf16, #tpu.memory_space<vmem>>, %arg9: memref<128x128xbf16, #tpu.memory_space<vmem>>, %arg10: memref<128x128xbf16, #tpu.memory_space<vmem>>, %arg11: memref<128x128xbf16, #tpu.memory_space<vmem>>, %arg12: memref<1x128xf32, #tpu.memory_space<vmem>>, %arg13: memref<1x128xf32, #tpu.memory_space<vmem>>, %arg14: memref<1x128xf32, #tpu.memory_space<vmem>>, %arg15: memref<1x128xf32, #tpu.memory_space<vmem>>, %arg16: memref<1x128xf32, #tpu.memory_space<vmem>>, %arg17: memref<1x128xf32, #tpu.memory_space<vmem>>, %arg18: memref<1x128xf32, #tpu.memory_space<vmem>>, %arg19: memref<1x128xf32, #tpu.memory_space<vmem>>, %arg20: memref<1x128xf32, #tpu.memory_space<vmem>>, %arg21: memref<1x128xf32, #tpu.memory_space<vmem>>, %arg22: memref<8x768xf32, #tpu.memory_space<vmem>>) attributes {dimension_semantics = [#tpu.dimension_semantics<parallel>], iteration_bounds = array<i64: 1>, scalar_prefetch = 0 : i64, scratch_operands = 0 : i64, tpu.core_type = #tpu.core_type<tc>, window_params = [{transform_indices = @transform_0, window_bounds = array<i64: 8, 128>}, {pipeline_mode = #tpu.pipeline_mode<synchronous>, transform_indices = @transform_1, window_bounds = array<i64: 128, 128>}, {pipeline_mode = #tpu.pipeline_mode<synchronous>, transform_indices = @transform_2, window_bounds = array<i64: 128, 128>}, {pipeline_mode = #tpu.pipeline_mode<synchronous>, transform_indices = @transform_3, window_bounds = array<i64: 128, 128>}, {pipeline_mode = #tpu.pipeline_mode<synchronous>, transform_indices = @transform_4, window_bounds = array<i64: 128, 128>}, {pipeline_mode = #tpu.pipeline_mode<synchronous>, transform_indices = @transform_5, window_bounds = array<i64: 128, 128>}, {pipeline_mode = #tpu.pipeline_mode<synchronous>, transform_indices = @transform_6, window_bounds = array<i64: 128, 128>}, {pipeline_mode = #tpu.pipeline_mode<synchronous>, transform_indices = @transform_7, window_bounds = array<i64: 128, 128>}, {pipeline_mode = #tpu.pipeline_mode<synchronous>, transform_indices = @transform_8, window_bounds = array<i64: 128, 128>}, {pipeline_mode = #tpu.pipeline_mode<synchronous>, transform_indices = @transform_9, window_bounds = array<i64: 128, 128>}, {pipeline_mode = #tpu.pipeline_mode<synchronous>, transform_indices = @transform_10, window_bounds = array<i64: 128, 128>}, {pipeline_mode = #tpu.pipeline_mode<synchronous>, transform_indices = @transform_11, window_bounds = array<i64: 1, 128>}, {pipeline_mode = #tpu.pipeline_mode<synchronous>, transform_indices = @transform_12, window_bounds = array<i64: 1, 128>}, {pipeline_mode = #tpu.pipeline_mode<synchronous>, transform_indices = @transform_13, window_bounds = array<i64: 1, 128>}, {pipeline_mode = #tpu.pipeline_mode<synchronous>, transform_indices = @transform_14, window_bounds = array<i64: 1, 128>}, {pipeline_mode = #tpu.pipeline_mode<synchronous>, transform_indices = @transform_15, window_bounds = array<i64: 1, 128>}, {pipeline_mode = #tpu.pipeline_mode<synchronous>, transform_indices = @transform_16, window_bounds = array<i64: 1, 128>}, {pipeline_mode = #tpu.pipeline_mode<synchronous>, transform_indices = @transform_17, window_bounds = array<i64: 1, 128>}, {pipeline_mode = #tpu.pipeline_mode<synchronous>, transform_indices = @transform_18, window_bounds = array<i64: 1, 128>}, {pipeline_mode = #tpu.pipeline_mode<synchronous>, transform_indices = @transform_19, window_bounds = array<i64: 1, 128>}, {pipeline_mode = #tpu.pipeline_mode<synchronous>, transform_indices = @transform_20, window_bounds = array<i64: 1, 128>}, {transform_indices = @transform_21, window_bounds = array<i64: 8, 768>}]} {
    %c0 = arith.constant 0 : index
    %c0_0 = arith.constant 0 : index
    %0 = vector.load %arg1[%c0, %c0_0] : memref<8x128xbf16, #tpu.memory_space<vmem>>, vector<8x128xbf16>
    %c0_1 = arith.constant 0 : index
    %c0_2 = arith.constant 0 : index
    %1 = vector.load %arg2[%c0_1, %c0_2] : memref<128x128xbf16, #tpu.memory_space<vmem>>, vector<128x128xbf16>
    %cst = arith.constant dense<0.000000e+00> : vector<8x128xf32>
    %2 = tpu.matmul %0, %1, %cst {dimension_numbers = #tpu.dot_dimension_numbers<[1], [0], [0], [1], [0, 0, 1, 1], [], []>} : vector<8x128xbf16>, vector<128x128xbf16>, vector<8x128xf32> -> vector<8x128xf32>
    %c0_3 = arith.constant 0 : index
    %c0_4 = arith.constant 0 : index
    %3 = vector.load %arg12[%c0_3, %c0_4] : memref<1x128xf32, #tpu.memory_space<vmem>>, vector<1x128xf32>
    %4 = vector.broadcast %3 : vector<1x128xf32> to vector<8x128xf32>
    %5 = arith.addf %2, %4 : vector<8x128xf32>
    %c0_5 = arith.constant 0 : index
    %c0_6 = arith.constant 0 : index
    %6 = vector.load %arg22[%c0_5, %c0_6] : memref<8x768xf32, #tpu.memory_space<vmem>>, vector<8x128xf32>
    tpu.vector_store %arg22[%c0_5, %c0_6], %5 {strides = array<i32>} : memref<8x768xf32, #tpu.memory_space<vmem>>, vector<8x128xf32>,
    %7 = arith.truncf %5 : vector<8x128xf32> to vector<8x128xbf16>
    %c0_7 = arith.constant 0 : index
    %c0_8 = arith.constant 0 : index
    %8 = vector.load %arg3[%c0_7, %c0_8] : memref<128x128xbf16, #tpu.memory_space<vmem>>, vector<128x128xbf16>
    %cst_9 = arith.constant dense<0.000000e+00> : vector<8x128xf32>
    %9 = tpu.matmul %7, %8, %cst_9 {dimension_numbers = #tpu.dot_dimension_numbers<[1], [0], [0], [1], [0, 0, 1, 1], [], []>} : vector<8x128xbf16>, vector<128x128xbf16>, vector<8x128xf32> -> vector<8x128xf32>
    %c0_10 = arith.constant 0 : index
    %c0_11 = arith.constant 0 : index
    %10 = vector.load %arg13[%c0_10, %c0_11] : memref<1x128xf32, #tpu.memory_space<vmem>>, vector<1x128xf32>
    %11 = vector.broadcast %10 : vector<1x128xf32> to vector<8x128xf32>
    %12 = arith.addf %9, %11 : vector<8x128xf32>
    %cst_12 = arith.constant 0.000000e+00 : f32
    %13 = vector.broadcast %cst_12 : f32 to vector<8x128xf32>
    %14 = arith.maximumf %12, %13 : vector<8x128xf32>
    %c0_13 = arith.constant 0 : index
    %c128 = arith.constant 128 : index
    %15 = vector.load %arg22[%c0_13, %c128] : memref<8x768xf32, #tpu.memory_space<vmem>>, vector<8x128xf32>
    tpu.vector_store %arg22[%c0_13, %c128], %14 {strides = array<i32>} : memref<8x768xf32, #tpu.memory_space<vmem>>, vector<8x128xf32>,
    %16 = arith.truncf %14 : vector<8x128xf32> to vector<8x128xbf16>
    %c0_14 = arith.constant 0 : index
    %c0_15 = arith.constant 0 : index
    %17 = vector.load %arg4[%c0_14, %c0_15] : memref<128x128xbf16, #tpu.memory_space<vmem>>, vector<128x128xbf16>
    %cst_16 = arith.constant dense<0.000000e+00> : vector<8x128xf32>
    %18 = tpu.matmul %16, %17, %cst_16 {dimension_numbers = #tpu.dot_dimension_numbers<[1], [0], [0], [1], [0, 0, 1, 1], [], []>} : vector<8x128xbf16>, vector<128x128xbf16>, vector<8x128xf32> -> vector<8x128xf32>
    %c0_17 = arith.constant 0 : index
    %c0_18 = arith.constant 0 : index
    %19 = vector.load %arg14[%c0_17, %c0_18] : memref<1x128xf32, #tpu.memory_space<vmem>>, vector<1x128xf32>
    %20 = vector.broadcast %19 : vector<1x128xf32> to vector<8x128xf32>
    %21 = arith.addf %18, %20 : vector<8x128xf32>
    %cst_19 = arith.constant 0.000000e+00 : f32
    %22 = vector.broadcast %cst_19 : f32 to vector<8x128xf32>
    %23 = arith.maximumf %21, %22 : vector<8x128xf32>
    %c0_20 = arith.constant 0 : index
    %c256 = arith.constant 256 : index
    %24 = vector.load %arg22[%c0_20, %c256] : memref<8x768xf32, #tpu.memory_space<vmem>>, vector<8x128xf32>
    tpu.vector_store %arg22[%c0_20, %c256], %23 {strides = array<i32>} : memref<8x768xf32, #tpu.memory_space<vmem>>, vector<8x128xf32>,
    %25 = arith.truncf %23 : vector<8x128xf32> to vector<8x128xbf16>
    %c0_21 = arith.constant 0 : index
    %c0_22 = arith.constant 0 : index
    %26 = vector.load %arg5[%c0_21, %c0_22] : memref<128x128xbf16, #tpu.memory_space<vmem>>, vector<128x128xbf16>
    %cst_23 = arith.constant dense<0.000000e+00> : vector<8x128xf32>
    %27 = tpu.matmul %25, %26, %cst_23 {dimension_numbers = #tpu.dot_dimension_numbers<[1], [0], [0], [1], [0, 0, 1, 1], [], []>} : vector<8x128xbf16>, vector<128x128xbf16>, vector<8x128xf32> -> vector<8x128xf32>
    %c0_24 = arith.constant 0 : index
    %c0_25 = arith.constant 0 : index
    %28 = vector.load %arg15[%c0_24, %c0_25] : memref<1x128xf32, #tpu.memory_space<vmem>>, vector<1x128xf32>
    %29 = vector.broadcast %28 : vector<1x128xf32> to vector<8x128xf32>
    %30 = arith.addf %27, %29 : vector<8x128xf32>
    %cst_26 = arith.constant 0.000000e+00 : f32
    %31 = vector.broadcast %cst_26 : f32 to vector<8x128xf32>
    %32 = arith.maximumf %30, %31 : vector<8x128xf32>
    %c0_27 = arith.constant 0 : index
    %c384 = arith.constant 384 : index
    %33 = vector.load %arg22[%c0_27, %c384] : memref<8x768xf32, #tpu.memory_space<vmem>>, vector<8x128xf32>
    tpu.vector_store %arg22[%c0_27, %c384], %32 {strides = array<i32>} : memref<8x768xf32, #tpu.memory_space<vmem>>, vector<8x128xf32>,
    %34 = arith.truncf %32 : vector<8x128xf32> to vector<8x128xbf16>
    %c0_28 = arith.constant 0 : index
    %c0_29 = arith.constant 0 : index
    %35 = vector.load %arg6[%c0_28, %c0_29] : memref<128x128xbf16, #tpu.memory_space<vmem>>, vector<128x128xbf16>
    %cst_30 = arith.constant dense<0.000000e+00> : vector<8x128xf32>
    %36 = tpu.matmul %34, %35, %cst_30 {dimension_numbers = #tpu.dot_dimension_numbers<[1], [0], [0], [1], [0, 0, 1, 1], [], []>} : vector<8x128xbf16>, vector<128x128xbf16>, vector<8x128xf32> -> vector<8x128xf32>
    %c0_31 = arith.constant 0 : index
    %c0_32 = arith.constant 0 : index
    %37 = vector.load %arg16[%c0_31, %c0_32] : memref<1x128xf32, #tpu.memory_space<vmem>>, vector<1x128xf32>
    %38 = vector.broadcast %37 : vector<1x128xf32> to vector<8x128xf32>
    %39 = arith.addf %36, %38 : vector<8x128xf32>
    %c0_33 = arith.constant 0 : index
    %c512 = arith.constant 512 : index
    %40 = vector.load %arg22[%c0_33, %c512] : memref<8x768xf32, #tpu.memory_space<vmem>>, vector<8x128xf32>
    tpu.vector_store %arg22[%c0_33, %c512], %39 {strides = array<i32>} : memref<8x768xf32, #tpu.memory_space<vmem>>, vector<8x128xf32>,
    %41 = arith.truncf %39 : vector<8x128xf32> to vector<8x128xbf16>
    %c0_34 = arith.constant 0 : index
    %c0_35 = arith.constant 0 : index
    %42 = vector.load %arg7[%c0_34, %c0_35] : memref<128x128xbf16, #tpu.memory_space<vmem>>, vector<128x128xbf16>
    %cst_36 = arith.constant dense<0.000000e+00> : vector<8x128xf32>
    %43 = tpu.matmul %41, %42, %cst_36 {dimension_numbers = #tpu.dot_dimension_numbers<[1], [0], [0], [1], [0, 0, 1, 1], [], []>} : vector<8x128xbf16>, vector<128x128xbf16>, vector<8x128xf32> -> vector<8x128xf32>
    %c0_37 = arith.constant 0 : index
    %c0_38 = arith.constant 0 : index
    %44 = vector.load %arg17[%c0_37, %c0_38] : memref<1x128xf32, #tpu.memory_space<vmem>>, vector<1x128xf32>
    %45 = vector.broadcast %44 : vector<1x128xf32> to vector<8x128xf32>
    %46 = arith.addf %43, %45 : vector<8x128xf32>
    %cst_39 = arith.constant 0.000000e+00 : f32
    %47 = vector.broadcast %cst_39 : f32 to vector<8x128xf32>
    %48 = arith.maximumf %46, %47 : vector<8x128xf32>
    %49 = arith.truncf %48 : vector<8x128xf32> to vector<8x128xbf16>
    %c0_40 = arith.constant 0 : index
    %c0_41 = arith.constant 0 : index
    %50 = vector.load %arg8[%c0_40, %c0_41] : memref<128x128xbf16, #tpu.memory_space<vmem>>, vector<128x128xbf16>
    %cst_42 = arith.constant dense<0.000000e+00> : vector<8x128xf32>
    %51 = tpu.matmul %49, %50, %cst_42 {dimension_numbers = #tpu.dot_dimension_numbers<[1], [0], [0], [1], [0, 0, 1, 1], [], []>} : vector<8x128xbf16>, vector<128x128xbf16>, vector<8x128xf32> -> vector<8x128xf32>
    %c0_43 = arith.constant 0 : index
    %c0_44 = arith.constant 0 : index
    %52 = vector.load %arg18[%c0_43, %c0_44] : memref<1x128xf32, #tpu.memory_space<vmem>>, vector<1x128xf32>
    %53 = vector.broadcast %52 : vector<1x128xf32> to vector<8x128xf32>
    %54 = arith.addf %51, %53 : vector<8x128xf32>
    %cst_45 = arith.constant 0.000000e+00 : f32
    %55 = vector.broadcast %cst_45 : f32 to vector<8x128xf32>
    %56 = arith.maximumf %54, %55 : vector<8x128xf32>
    %57 = arith.truncf %56 : vector<8x128xf32> to vector<8x128xbf16>
    %c0_46 = arith.constant 0 : index
    %c0_47 = arith.constant 0 : index
    %58 = vector.load %arg9[%c0_46, %c0_47] : memref<128x128xbf16, #tpu.memory_space<vmem>>, vector<128x128xbf16>
    %cst_48 = arith.constant dense<0.000000e+00> : vector<8x128xf32>
    %59 = tpu.matmul %57, %58, %cst_48 {dimension_numbers = #tpu.dot_dimension_numbers<[1], [0], [0], [1], [0, 0, 1, 1], [], []>} : vector<8x128xbf16>, vector<128x128xbf16>, vector<8x128xf32> -> vector<8x128xf32>
    %c0_49 = arith.constant 0 : index
    %c0_50 = arith.constant 0 : index
    %60 = vector.load %arg19[%c0_49, %c0_50] : memref<1x128xf32, #tpu.memory_space<vmem>>, vector<1x128xf32>
    %61 = vector.broadcast %60 : vector<1x128xf32> to vector<8x128xf32>
    %62 = arith.addf %59, %61 : vector<8x128xf32>
    %cst_51 = arith.constant 0.000000e+00 : f32
    %63 = vector.broadcast %cst_51 : f32 to vector<8x128xf32>
    %64 = arith.maximumf %62, %63 : vector<8x128xf32>
    %65 = arith.truncf %64 : vector<8x128xf32> to vector<8x128xbf16>
    %c0_52 = arith.constant 0 : index
    %c0_53 = arith.constant 0 : index
    %66 = vector.load %arg10[%c0_52, %c0_53] : memref<128x128xbf16, #tpu.memory_space<vmem>>, vector<128x128xbf16>
    %cst_54 = arith.constant dense<0.000000e+00> : vector<8x128xf32>
    %67 = tpu.matmul %65, %66, %cst_54 {dimension_numbers = #tpu.dot_dimension_numbers<[1], [0], [0], [1], [0, 0, 1, 1], [], []>} : vector<8x128xbf16>, vector<128x128xbf16>, vector<8x128xf32> -> vector<8x128xf32>
    %c0_55 = arith.constant 0 : index
    %c0_56 = arith.constant 0 : index
    %68 = vector.load %arg20[%c0_55, %c0_56] : memref<1x128xf32, #tpu.memory_space<vmem>>, vector<1x128xf32>
    %69 = vector.broadcast %68 : vector<1x128xf32> to vector<8x128xf32>
    %70 = arith.addf %67, %69 : vector<8x128xf32>
    %cst_57 = arith.constant 0.000000e+00 : f32
    %71 = vector.broadcast %cst_57 : f32 to vector<8x128xf32>
    %72 = arith.maximumf %70, %71 : vector<8x128xf32>
    %73 = arith.truncf %72 : vector<8x128xf32> to vector<8x128xbf16>
    %c0_58 = arith.constant 0 : index
    %c0_59 = arith.constant 0 : index
    %74 = vector.load %arg11[%c0_58, %c0_59] : memref<128x128xbf16, #tpu.memory_space<vmem>>, vector<128x128xbf16>
    %cst_60 = arith.constant dense<0.000000e+00> : vector<8x128xf32>
    %75 = tpu.matmul %73, %74, %cst_60 {dimension_numbers = #tpu.dot_dimension_numbers<[1], [0], [0], [1], [0, 0, 1, 1], [], []>} : vector<8x128xbf16>, vector<128x128xbf16>, vector<8x128xf32> -> vector<8x128xf32>
    %c0_61 = arith.constant 0 : index
    %c0_62 = arith.constant 0 : index
    %76 = vector.load %arg21[%c0_61, %c0_62] : memref<1x128xf32, #tpu.memory_space<vmem>>, vector<1x128xf32>
    %77 = vector.broadcast %76 : vector<1x128xf32> to vector<8x128xf32>
    %78 = arith.addf %75, %77 : vector<8x128xf32>
    %c0_63 = arith.constant 0 : index
    %c640 = arith.constant 640 : index
    %79 = vector.load %arg22[%c0_63, %c640] : memref<8x768xf32, #tpu.memory_space<vmem>>, vector<8x128xf32>
    tpu.vector_store %arg22[%c0_63, %c640], %78 {strides = array<i32>} : memref<8x768xf32, #tpu.memory_space<vmem>>, vector<8x128xf32>,
    return
  }
  func.func @transform_0(%arg0: i32) -> (i32, i32) {
    %c0_i32 = arith.constant 0 : i32
    %c0_i32_0 = arith.constant 0 : i32
    return %arg0, %c0_i32 : i32, i32
  }
  func.func @transform_1(%arg0: i32) -> (i32, i32) {
    %c0_i32 = arith.constant 0 : i32
    %c0_i32_0 = arith.constant 0 : i32
    %c0_i32_1 = arith.constant 0 : i32
    return %c0_i32, %c0_i32_0 : i32, i32
  }
  func.func @transform_2(%arg0: i32) -> (i32, i32) {
    %c0_i32 = arith.constant 0 : i32
    %c0_i32_0 = arith.constant 0 : i32
    %c0_i32_1 = arith.constant 0 : i32
    return %c0_i32, %c0_i32_0 : i32, i32
  }
  func.func @transform_3(%arg0: i32) -> (i32, i32) {
    %c0_i32 = arith.constant 0 : i32
    %c0_i32_0 = arith.constant 0 : i32
    %c0_i32_1 = arith.constant 0 : i32
    return %c0_i32, %c0_i32_0 : i32, i32
  }
  func.func @transform_4(%arg0: i32) -> (i32, i32) {
    %c0_i32 = arith.constant 0 : i32
    %c0_i32_0 = arith.constant 0 : i32
    %c0_i32_1 = arith.constant 0 : i32
    return %c0_i32, %c0_i32_0 : i32, i32
  }
  func.func @transform_5(%arg0: i32) -> (i32, i32) {
    %c0_i32 = arith.constant 0 : i32
    %c0_i32_0 = arith.constant 0 : i32
    %c0_i32_1 = arith.constant 0 : i32
    return %c0_i32, %c0_i32_0 : i32, i32
  }
  func.func @transform_6(%arg0: i32) -> (i32, i32) {
    %c0_i32 = arith.constant 0 : i32
    %c0_i32_0 = arith.constant 0 : i32
    %c0_i32_1 = arith.constant 0 : i32
    return %c0_i32, %c0_i32_0 : i32, i32
  }
  func.func @transform_7(%arg0: i32) -> (i32, i32) {
    %c0_i32 = arith.constant 0 : i32
    %c0_i32_0 = arith.constant 0 : i32
    %c0_i32_1 = arith.constant 0 : i32
    return %c0_i32, %c0_i32_0 : i32, i32
  }
  func.func @transform_8(%arg0: i32) -> (i32, i32) {
    %c0_i32 = arith.constant 0 : i32
    %c0_i32_0 = arith.constant 0 : i32
    %c0_i32_1 = arith.constant 0 : i32
    return %c0_i32, %c0_i32_0 : i32, i32
  }
  func.func @transform_9(%arg0: i32) -> (i32, i32) {
    %c0_i32 = arith.constant 0 : i32
    %c0_i32_0 = arith.constant 0 : i32
    %c0_i32_1 = arith.constant 0 : i32
    return %c0_i32, %c0_i32_0 : i32, i32
  }
  func.func @transform_10(%arg0: i32) -> (i32, i32) {
    %c0_i32 = arith.constant 0 : i32
    %c0_i32_0 = arith.constant 0 : i32
    %c0_i32_1 = arith.constant 0 : i32
    return %c0_i32, %c0_i32_0 : i32, i32
  }
  func.func @transform_11(%arg0: i32) -> (i32, i32) {
    %c0_i32 = arith.constant 0 : i32
    %c0_i32_0 = arith.constant 0 : i32
    %c0_i32_1 = arith.constant 0 : i32
    return %c0_i32, %c0_i32_0 : i32, i32
  }
  func.func @transform_12(%arg0: i32) -> (i32, i32) {
    %c0_i32 = arith.constant 0 : i32
    %c0_i32_0 = arith.constant 0 : i32
    %c0_i32_1 = arith.constant 0 : i32
    return %c0_i32, %c0_i32_0 : i32, i32
  }
  func.func @transform_13(%arg0: i32) -> (i32, i32) {
    %c0_i32 = arith.constant 0 : i32
    %c0_i32_0 = arith.constant 0 : i32
    %c0_i32_1 = arith.constant 0 : i32
    return %c0_i32, %c0_i32_0 : i32, i32
  }
  func.func @transform_14(%arg0: i32) -> (i32, i32) {
    %c0_i32 = arith.constant 0 : i32
    %c0_i32_0 = arith.constant 0 : i32
    %c0_i32_1 = arith.constant 0 : i32
    return %c0_i32, %c0_i32_0 : i32, i32
  }
  func.func @transform_15(%arg0: i32) -> (i32, i32) {
    %c0_i32 = arith.constant 0 : i32
    %c0_i32_0 = arith.constant 0 : i32
    %c0_i32_1 = arith.constant 0 : i32
    return %c0_i32, %c0_i32_0 : i32, i32
  }
  func.func @transform_16(%arg0: i32) -> (i32, i32) {
    %c0_i32 = arith.constant 0 : i32
    %c0_i32_0 = arith.constant 0 : i32
    %c0_i32_1 = arith.constant 0 : i32
    return %c0_i32, %c0_i32_0 : i32, i32
  }
  func.func @transform_17(%arg0: i32) -> (i32, i32) {
    %c0_i32 = arith.constant 0 : i32
    %c0_i32_0 = arith.constant 0 : i32
    %c0_i32_1 = arith.constant 0 : i32
    return %c0_i32, %c0_i32_0 : i32, i32
  }
  func.func @transform_18(%arg0: i32) -> (i32, i32) {
    %c0_i32 = arith.constant 0 : i32
    %c0_i32_0 = arith.constant 0 : i32
    %c0_i32_1 = arith.constant 0 : i32
    return %c0_i32, %c0_i32_0 : i32, i32
  }
  func.func @transform_19(%arg0: i32) -> (i32, i32) {
    %c0_i32 = arith.constant 0 : i32
    %c0_i32_0 = arith.constant 0 : i32
    %c0_i32_1 = arith.constant 0 : i32
    return %c0_i32, %c0_i32_0 : i32, i32
  }
  func.func @transform_20(%arg0: i32) -> (i32, i32) {
    %c0_i32 = arith.constant 0 : i32
    %c0_i32_0 = arith.constant 0 : i32
    %c0_i32_1 = arith.constant 0 : i32
    return %c0_i32, %c0_i32_0 : i32, i32
  }
  func.func @transform_21(%arg0: i32) -> (i32, i32) {
    %c0_i32 = arith.constant 0 : i32
    %c0_i32_0 = arith.constant 0 : i32
    return %arg0, %c0_i32 : i32, i32
  }
}

module attributes {stable_mosaic.version = 11 : i64} {
  func.func @kernel(%arg0: i32, %arg1: memref<8x128xbf16, #tpu.memory_space<vmem>>, %arg2: memref<128x128xbf16, #tpu.memory_space<vmem>>, %arg3: memref<128x128xbf16, #tpu.memory_space<vmem>>, %arg4: memref<128x128xbf16, #tpu.memory_space<vmem>>, %arg5: memref<128x128xbf16, #tpu.memory_space<vmem>>, %arg6: memref<128x128xbf16, #tpu.memory_space<vmem>>, %arg7: memref<128x128xbf16, #tpu.memory_space<vmem>>, %arg8: memref<128x128xbf16, #tpu.memory_space<vmem>>, %arg9: memref<128x128xbf16, #tpu.memory_space<vmem>>, %arg10: memref<128x128xbf16, #tpu.memory_space<vmem>>, %arg11: memref<128x128xbf16, #tpu.memory_space<vmem>>, %arg12: memref<1x128xf32, #tpu.memory_space<vmem>>, %arg13: memref<1x128xf32, #tpu.memory_space<vmem>>, %arg14: memref<1x128xf32, #tpu.memory_space<vmem>>, %arg15: memref<1x128xf32, #tpu.memory_space<vmem>>, %arg16: memref<1x128xf32, #tpu.memory_space<vmem>>, %arg17: memref<1x128xf32, #tpu.memory_space<vmem>>, %arg18: memref<1x128xf32, #tpu.memory_space<vmem>>, %arg19: memref<1x128xf32, #tpu.memory_space<vmem>>, %arg20: memref<1x128xf32, #tpu.memory_space<vmem>>, %arg21: memref<1x128xf32, #tpu.memory_space<vmem>>, %arg22: memref<8x768xf32, #tpu.memory_space<vmem>>) attributes {dimension_semantics = [#tpu.dimension_semantics<parallel>], iteration_bounds = array<i64: 1>, scalar_prefetch = 0 : i64, scratch_operands = 0 : i64, tpu.core_type = #tpu.core_type<tc>, window_params = [{transform_indices = @transform_0, window_bounds = array<i64: 8, 128>}, {pipeline_mode = #tpu.pipeline_mode<synchronous>, transform_indices = @transform_1, window_bounds = array<i64: 128, 128>}, {pipeline_mode = #tpu.pipeline_mode<synchronous>, transform_indices = @transform_2, window_bounds = array<i64: 128, 128>}, {pipeline_mode = #tpu.pipeline_mode<synchronous>, transform_indices = @transform_3, window_bounds = array<i64: 128, 128>}, {pipeline_mode = #tpu.pipeline_mode<synchronous>, transform_indices = @transform_4, window_bounds = array<i64: 128, 128>}, {pipeline_mode = #tpu.pipeline_mode<synchronous>, transform_indices = @transform_5, window_bounds = array<i64: 128, 128>}, {pipeline_mode = #tpu.pipeline_mode<synchronous>, transform_indices = @transform_6, window_bounds = array<i64: 128, 128>}, {pipeline_mode = #tpu.pipeline_mode<synchronous>, transform_indices = @transform_7, window_bounds = array<i64: 128, 128>}, {pipeline_mode = #tpu.pipeline_mode<synchronous>, transform_indices = @transform_8, window_bounds = array<i64: 128, 128>}, {pipeline_mode = #tpu.pipeline_mode<synchronous>, transform_indices = @transform_9, window_bounds = array<i64: 128, 128>}, {pipeline_mode = #tpu.pipeline_mode<synchronous>, transform_indices = @transform_10, window_bounds = array<i64: 128, 128>}, {pipeline_mode = #tpu.pipeline_mode<synchronous>, transform_indices = @transform_11, window_bounds = array<i64: 1, 128>}, {pipeline_mode = #tpu.pipeline_mode<synchronous>, transform_indices = @transform_12, window_bounds = array<i64: 1, 128>}, {pipeline_mode = #tpu.pipeline_mode<synchronous>, transform_indices = @transform_13, window_bounds = array<i64: 1, 128>}, {pipeline_mode = #tpu.pipeline_mode<synchronous>, transform_indices = @transform_14, window_bounds = array<i64: 1, 128>}, {pipeline_mode = #tpu.pipeline_mode<synchronous>, transform_indices = @transform_15, window_bounds = array<i64: 1, 128>}, {pipeline_mode = #tpu.pipeline_mode<synchronous>, transform_indices = @transform_16, window_bounds = array<i64: 1, 128>}, {pipeline_mode = #tpu.pipeline_mode<synchronous>, transform_indices = @transform_17, window_bounds = array<i64: 1, 128>}, {pipeline_mode = #tpu.pipeline_mode<synchronous>, transform_indices = @transform_18, window_bounds = array<i64: 1, 128>}, {pipeline_mode = #tpu.pipeline_mode<synchronous>, transform_indices = @transform_19, window_bounds = array<i64: 1, 128>}, {pipeline_mode = #tpu.pipeline_mode<synchronous>, transform_indices = @transform_20, window_bounds = array<i64: 1, 128>}, {transform_indices = @transform_21, window_bounds = array<i64: 8, 768>}]} {
    %c0 = arith.constant 0 : index
    %c0_0 = arith.constant 0 : index
    %0 = vector.load %arg1[%c0, %c0_0] : memref<8x128xbf16, #tpu.memory_space<vmem>>, vector<8x128xbf16>
    %c0_1 = arith.constant 0 : index
    %c0_2 = arith.constant 0 : index
    %1 = vector.load %arg2[%c0_1, %c0_2] : memref<128x128xbf16, #tpu.memory_space<vmem>>, vector<128x128xbf16>
    %cst = arith.constant dense<0.000000e+00> : vector<8x128xf32>
    %2 = tpu.matmul %0, %1, %cst {dimension_numbers = #tpu.dot_dimension_numbers<[1], [0], [0], [1], [0, 0, 1, 1], [], []>} : vector<8x128xbf16>, vector<128x128xbf16>, vector<8x128xf32> -> vector<8x128xf32>
    %c0_3 = arith.constant 0 : index
    %c0_4 = arith.constant 0 : index
    %3 = vector.load %arg12[%c0_3, %c0_4] : memref<1x128xf32, #tpu.memory_space<vmem>>, vector<1x128xf32>
    %4 = vector.broadcast %3 : vector<1x128xf32> to vector<8x128xf32>
    %5 = arith.addf %2, %4 : vector<8x128xf32>
    %c0_5 = arith.constant 0 : index
    %c0_6 = arith.constant 0 : index
    %6 = vector.load %arg22[%c0_5, %c0_6] : memref<8x768xf32, #tpu.memory_space<vmem>>, vector<8x128xf32>
    tpu.vector_store %arg22[%c0_5, %c0_6], %5 {strides = array<i32>} : memref<8x768xf32, #tpu.memory_space<vmem>>, vector<8x128xf32>,
    %7 = arith.truncf %5 : vector<8x128xf32> to vector<8x128xbf16>
    %c0_7 = arith.constant 0 : index
    %c0_8 = arith.constant 0 : index
    %8 = vector.load %arg3[%c0_7, %c0_8] : memref<128x128xbf16, #tpu.memory_space<vmem>>, vector<128x128xbf16>
    %cst_9 = arith.constant dense<0.000000e+00> : vector<8x128xf32>
    %9 = tpu.matmul %7, %8, %cst_9 {dimension_numbers = #tpu.dot_dimension_numbers<[1], [0], [0], [1], [0, 0, 1, 1], [], []>} : vector<8x128xbf16>, vector<128x128xbf16>, vector<8x128xf32> -> vector<8x128xf32>
    %c0_10 = arith.constant 0 : index
    %c0_11 = arith.constant 0 : index
    %10 = vector.load %arg13[%c0_10, %c0_11] : memref<1x128xf32, #tpu.memory_space<vmem>>, vector<1x128xf32>
    %11 = vector.broadcast %10 : vector<1x128xf32> to vector<8x128xf32>
    %12 = arith.addf %9, %11 : vector<8x128xf32>
    %cst_12 = arith.constant 0.000000e+00 : f32
    %13 = vector.broadcast %cst_12 : f32 to vector<8x128xf32>
    %14 = arith.maximumf %12, %13 : vector<8x128xf32>
    %c0_13 = arith.constant 0 : index
    %c128 = arith.constant 128 : index
    %15 = vector.load %arg22[%c0_13, %c128] : memref<8x768xf32, #tpu.memory_space<vmem>>, vector<8x128xf32>
    tpu.vector_store %arg22[%c0_13, %c128], %14 {strides = array<i32>} : memref<8x768xf32, #tpu.memory_space<vmem>>, vector<8x128xf32>,
    %16 = arith.truncf %14 : vector<8x128xf32> to vector<8x128xbf16>
    %c0_14 = arith.constant 0 : index
    %c0_15 = arith.constant 0 : index
    %17 = vector.load %arg4[%c0_14, %c0_15] : memref<128x128xbf16, #tpu.memory_space<vmem>>, vector<128x128xbf16>
    %cst_16 = arith.constant dense<0.000000e+00> : vector<8x128xf32>
    %18 = tpu.matmul %16, %17, %cst_16 {dimension_numbers = #tpu.dot_dimension_numbers<[1], [0], [0], [1], [0, 0, 1, 1], [], []>} : vector<8x128xbf16>, vector<128x128xbf16>, vector<8x128xf32> -> vector<8x128xf32>
    %c0_17 = arith.constant 0 : index
    %c0_18 = arith.constant 0 : index
    %19 = vector.load %arg14[%c0_17, %c0_18] : memref<1x128xf32, #tpu.memory_space<vmem>>, vector<1x128xf32>
    %20 = vector.broadcast %19 : vector<1x128xf32> to vector<8x128xf32>
    %21 = arith.addf %18, %20 : vector<8x128xf32>
    %cst_19 = arith.constant 0.000000e+00 : f32
    %22 = vector.broadcast %cst_19 : f32 to vector<8x128xf32>
    %23 = arith.maximumf %21, %22 : vector<8x128xf32>
    %c0_20 = arith.constant 0 : index
    %c256 = arith.constant 256 : index
    %24 = vector.load %arg22[%c0_20, %c256] : memref<8x768xf32, #tpu.memory_space<vmem>>, vector<8x128xf32>
    tpu.vector_store %arg22[%c0_20, %c256], %23 {strides = array<i32>} : memref<8x768xf32, #tpu.memory_space<vmem>>, vector<8x128xf32>,
    %25 = arith.truncf %23 : vector<8x128xf32> to vector<8x128xbf16>
    %c0_21 = arith.constant 0 : index
    %c0_22 = arith.constant 0 : index
    %26 = vector.load %arg5[%c0_21, %c0_22] : memref<128x128xbf16, #tpu.memory_space<vmem>>, vector<128x128xbf16>
    %cst_23 = arith.constant dense<0.000000e+00> : vector<8x128xf32>
    %27 = tpu.matmul %25, %26, %cst_23 {dimension_numbers = #tpu.dot_dimension_numbers<[1], [0], [0], [1], [0, 0, 1, 1], [], []>} : vector<8x128xbf16>, vector<128x128xbf16>, vector<8x128xf32> -> vector<8x128xf32>
    %c0_24 = arith.constant 0 : index
    %c0_25 = arith.constant 0 : index
    %28 = vector.load %arg15[%c0_24, %c0_25] : memref<1x128xf32, #tpu.memory_space<vmem>>, vector<1x128xf32>
    %29 = vector.broadcast %28 : vector<1x128xf32> to vector<8x128xf32>
    %30 = arith.addf %27, %29 : vector<8x128xf32>
    %cst_26 = arith.constant 0.000000e+00 : f32
    %31 = vector.broadcast %cst_26 : f32 to vector<8x128xf32>
    %32 = arith.maximumf %30, %31 : vector<8x128xf32>
    %c0_27 = arith.constant 0 : index
    %c384 = arith.constant 384 : index
    %33 = vector.load %arg22[%c0_27, %c384] : memref<8x768xf32, #tpu.memory_space<vmem>>, vector<8x128xf32>
    tpu.vector_store %arg22[%c0_27, %c384], %32 {strides = array<i32>} : memref<8x768xf32, #tpu.memory_space<vmem>>, vector<8x128xf32>,
    %34 = arith.truncf %32 : vector<8x128xf32> to vector<8x128xbf16>
    %c0_28 = arith.constant 0 : index
    %c0_29 = arith.constant 0 : index
    %35 = vector.load %arg6[%c0_28, %c0_29] : memref<128x128xbf16, #tpu.memory_space<vmem>>, vector<128x128xbf16>
    %cst_30 = arith.constant dense<0.000000e+00> : vector<8x128xf32>
    %36 = tpu.matmul %34, %35, %cst_30 {dimension_numbers = #tpu.dot_dimension_numbers<[1], [0], [0], [1], [0, 0, 1, 1], [], []>} : vector<8x128xbf16>, vector<128x128xbf16>, vector<8x128xf32> -> vector<8x128xf32>
    %c0_31 = arith.constant 0 : index
    %c0_32 = arith.constant 0 : index
    %37 = vector.load %arg16[%c0_31, %c0_32] : memref<1x128xf32, #tpu.memory_space<vmem>>, vector<1x128xf32>
    %38 = vector.broadcast %37 : vector<1x128xf32> to vector<8x128xf32>
    %39 = arith.addf %36, %38 : vector<8x128xf32>
    %c0_33 = arith.constant 0 : index
    %c512 = arith.constant 512 : index
    %40 = vector.load %arg22[%c0_33, %c512] : memref<8x768xf32, #tpu.memory_space<vmem>>, vector<8x128xf32>
    tpu.vector_store %arg22[%c0_33, %c512], %39 {strides = array<i32>} : memref<8x768xf32, #tpu.memory_space<vmem>>, vector<8x128xf32>,
    %41 = arith.truncf %39 : vector<8x128xf32> to vector<8x128xbf16>
    %c0_34 = arith.constant 0 : index
    %c0_35 = arith.constant 0 : index
    %42 = vector.load %arg7[%c0_34, %c0_35] : memref<128x128xbf16, #tpu.memory_space<vmem>>, vector<128x128xbf16>
    %cst_36 = arith.constant dense<0.000000e+00> : vector<8x128xf32>
    %43 = tpu.matmul %41, %42, %cst_36 {dimension_numbers = #tpu.dot_dimension_numbers<[1], [0], [0], [1], [0, 0, 1, 1], [], []>} : vector<8x128xbf16>, vector<128x128xbf16>, vector<8x128xf32> -> vector<8x128xf32>
    %c0_37 = arith.constant 0 : index
    %c0_38 = arith.constant 0 : index
    %44 = vector.load %arg17[%c0_37, %c0_38] : memref<1x128xf32, #tpu.memory_space<vmem>>, vector<1x128xf32>
    %45 = vector.broadcast %44 : vector<1x128xf32> to vector<8x128xf32>
    %46 = arith.addf %43, %45 : vector<8x128xf32>
    %cst_39 = arith.constant 0.000000e+00 : f32
    %47 = vector.broadcast %cst_39 : f32 to vector<8x128xf32>
    %48 = arith.maximumf %46, %47 : vector<8x128xf32>
    %49 = arith.truncf %48 : vector<8x128xf32> to vector<8x128xbf16>
    %c0_40 = arith.constant 0 : index
    %c0_41 = arith.constant 0 : index
    %50 = vector.load %arg8[%c0_40, %c0_41] : memref<128x128xbf16, #tpu.memory_space<vmem>>, vector<128x128xbf16>
    %cst_42 = arith.constant dense<0.000000e+00> : vector<8x128xf32>
    %51 = tpu.matmul %49, %50, %cst_42 {dimension_numbers = #tpu.dot_dimension_numbers<[1], [0], [0], [1], [0, 0, 1, 1], [], []>} : vector<8x128xbf16>, vector<128x128xbf16>, vector<8x128xf32> -> vector<8x128xf32>
    %c0_43 = arith.constant 0 : index
    %c0_44 = arith.constant 0 : index
    %52 = vector.load %arg18[%c0_43, %c0_44] : memref<1x128xf32, #tpu.memory_space<vmem>>, vector<1x128xf32>
    %53 = vector.broadcast %52 : vector<1x128xf32> to vector<8x128xf32>
    %54 = arith.addf %51, %53 : vector<8x128xf32>
    %cst_45 = arith.constant 0.000000e+00 : f32
    %55 = vector.broadcast %cst_45 : f32 to vector<8x128xf32>
    %56 = arith.maximumf %54, %55 : vector<8x128xf32>
    %57 = arith.truncf %56 : vector<8x128xf32> to vector<8x128xbf16>
    %c0_46 = arith.constant 0 : index
    %c0_47 = arith.constant 0 : index
    %58 = vector.load %arg9[%c0_46, %c0_47] : memref<128x128xbf16, #tpu.memory_space<vmem>>, vector<128x128xbf16>
    %cst_48 = arith.constant dense<0.000000e+00> : vector<8x128xf32>
    %59 = tpu.matmul %57, %58, %cst_48 {dimension_numbers = #tpu.dot_dimension_numbers<[1], [0], [0], [1], [0, 0, 1, 1], [], []>} : vector<8x128xbf16>, vector<128x128xbf16>, vector<8x128xf32> -> vector<8x128xf32>
    %c0_49 = arith.constant 0 : index
    %c0_50 = arith.constant 0 : index
    %60 = vector.load %arg19[%c0_49, %c0_50] : memref<1x128xf32, #tpu.memory_space<vmem>>, vector<1x128xf32>
    %61 = vector.broadcast %60 : vector<1x128xf32> to vector<8x128xf32>
    %62 = arith.addf %59, %61 : vector<8x128xf32>
    %cst_51 = arith.constant 0.000000e+00 : f32
    %63 = vector.broadcast %cst_51 : f32 to vector<8x128xf32>
    %64 = arith.maximumf %62, %63 : vector<8x128xf32>
    %65 = arith.truncf %64 : vector<8x128xf32> to vector<8x128xbf16>
    %c0_52 = arith.constant 0 : index
    %c0_53 = arith.constant 0 : index
    %66 = vector.load %arg10[%c0_52, %c0_53] : memref<128x128xbf16, #tpu.memory_space<vmem>>, vector<128x128xbf16>
    %cst_54 = arith.constant dense<0.000000e+00> : vector<8x128xf32>
    %67 = tpu.matmul %65, %66, %cst_54 {dimension_numbers = #tpu.dot_dimension_numbers<[1], [0], [0], [1], [0, 0, 1, 1], [], []>} : vector<8x128xbf16>, vector<128x128xbf16>, vector<8x128xf32> -> vector<8x128xf32>
    %c0_55 = arith.constant 0 : index
    %c0_56 = arith.constant 0 : index
    %68 = vector.load %arg20[%c0_55, %c0_56] : memref<1x128xf32, #tpu.memory_space<vmem>>, vector<1x128xf32>
    %69 = vector.broadcast %68 : vector<1x128xf32> to vector<8x128xf32>
    %70 = arith.addf %67, %69 : vector<8x128xf32>
    %cst_57 = arith.constant 0.000000e+00 : f32
    %71 = vector.broadcast %cst_57 : f32 to vector<8x128xf32>
    %72 = arith.maximumf %70, %71 : vector<8x128xf32>
    %73 = arith.truncf %72 : vector<8x128xf32> to vector<8x128xbf16>
    %c0_58 = arith.constant 0 : index
    %c0_59 = arith.constant 0 : index
    %74 = vector.load %arg11[%c0_58, %c0_59] : memref<128x128xbf16, #tpu.memory_space<vmem>>, vector<128x128xbf16>
    %cst_60 = arith.constant dense<0.000000e+00> : vector<8x128xf32>
    %75 = tpu.matmul %73, %74, %cst_60 {dimension_numbers = #tpu.dot_dimension_numbers<[1], [0], [0], [1], [0, 0, 1, 1], [], []>} : vector<8x128xbf16>, vector<128x128xbf16>, vector<8x128xf32> -> vector<8x128xf32>
    %c0_61 = arith.constant 0 : index
    %c0_62 = arith.constant 0 : index
    %76 = vector.load %arg21[%c0_61, %c0_62] : memref<1x128xf32, #tpu.memory_space<vmem>>, vector<1x128xf32>
    %77 = vector.broadcast %76 : vector<1x128xf32> to vector<8x128xf32>
    %78 = arith.addf %75, %77 : vector<8x128xf32>
    %c0_63 = arith.constant 0 : index
    %c640 = arith.constant 640 : index
    %79 = vector.load %arg22[%c0_63, %c640] : memref<8x768xf32, #tpu.memory_space<vmem>>, vector<8x128xf32>
    tpu.vector_store %arg22[%c0_63, %c640], %78 {strides = array<i32>} : memref<8x768xf32, #tpu.memory_space<vmem>>, vector<8x128xf32>,
    return
  }
  func.func @transform_0(%arg0: i32) -> (i32, i32) {
    %c0_i32 = arith.constant 0 : i32
    %c0_i32_0 = arith.constant 0 : i32
    return %arg0, %c0_i32 : i32, i32
  }
  func.func @transform_1(%arg0: i32) -> (i32, i32) {
    %c0_i32 = arith.constant 0 : i32
    %c0_i32_0 = arith.constant 0 : i32
    %c0_i32_1 = arith.constant 0 : i32
    return %c0_i32, %c0_i32_0 : i32, i32
  }
  func.func @transform_2(%arg0: i32) -> (i32, i32) {
    %c0_i32 = arith.constant 0 : i32
    %c0_i32_0 = arith.constant 0 : i32
    %c0_i32_1 = arith.constant 0 : i32
    return %c0_i32, %c0_i32_0 : i32, i32
  }
  func.func @transform_3(%arg0: i32) -> (i32, i32) {
    %c0_i32 = arith.constant 0 : i32
    %c0_i32_0 = arith.constant 0 : i32
    %c0_i32_1 = arith.constant 0 : i32
    return %c0_i32, %c0_i32_0 : i32, i32
  }
  func.func @transform_4(%arg0: i32) -> (i32, i32) {
    %c0_i32 = arith.constant 0 : i32
    %c0_i32_0 = arith.constant 0 : i32
    %c0_i32_1 = arith.constant 0 : i32
    return %c0_i32, %c0_i32_0 : i32, i32
  }
  func.func @transform_5(%arg0: i32) -> (i32, i32) {
    %c0_i32 = arith.constant 0 : i32
    %c0_i32_0 = arith.constant 0 : i32
    %c0_i32_1 = arith.constant 0 : i32
    return %c0_i32, %c0_i32_0 : i32, i32
  }
  func.func @transform_6(%arg0: i32) -> (i32, i32) {
    %c0_i32 = arith.constant 0 : i32
    %c0_i32_0 = arith.constant 0 : i32
    %c0_i32_1 = arith.constant 0 : i32
    return %c0_i32, %c0_i32_0 : i32, i32
  }
  func.func @transform_7(%arg0: i32) -> (i32, i32) {
    %c0_i32 = arith.constant 0 : i32
    %c0_i32_0 = arith.constant 0 : i32
    %c0_i32_1 = arith.constant 0 : i32
    return %c0_i32, %c0_i32_0 : i32, i32
  }
  func.func @transform_8(%arg0: i32) -> (i32, i32) {
    %c0_i32 = arith.constant 0 : i32
    %c0_i32_0 = arith.constant 0 : i32
    %c0_i32_1 = arith.constant 0 : i32
    return %c0_i32, %c0_i32_0 : i32, i32
  }
  func.func @transform_9(%arg0: i32) -> (i32, i32) {
    %c0_i32 = arith.constant 0 : i32
    %c0_i32_0 = arith.constant 0 : i32
    %c0_i32_1 = arith.constant 0 : i32
    return %c0_i32, %c0_i32_0 : i32, i32
  }
  func.func @transform_10(%arg0: i32) -> (i32, i32) {
    %c0_i32 = arith.constant 0 : i32
    %c0_i32_0 = arith.constant 0 : i32
    %c0_i32_1 = arith.constant 0 : i32
    return %c0_i32, %c0_i32_0 : i32, i32
  }
  func.func @transform_11(%arg0: i32) -> (i32, i32) {
    %c0_i32 = arith.constant 0 : i32
    %c0_i32_0 = arith.constant 0 : i32
    %c0_i32_1 = arith.constant 0 : i32
    return %c0_i32, %c0_i32_0 : i32, i32
  }
  func.func @transform_12(%arg0: i32) -> (i32, i32) {
    %c0_i32 = arith.constant 0 : i32
    %c0_i32_0 = arith.constant 0 : i32
    %c0_i32_1 = arith.constant 0 : i32
    return %c0_i32, %c0_i32_0 : i32, i32
  }
  func.func @transform_13(%arg0: i32) -> (i32, i32) {
    %c0_i32 = arith.constant 0 : i32
    %c0_i32_0 = arith.constant 0 : i32
    %c0_i32_1 = arith.constant 0 : i32
    return %c0_i32, %c0_i32_0 : i32, i32
  }
  func.func @transform_14(%arg0: i32) -> (i32, i32) {
    %c0_i32 = arith.constant 0 : i32
    %c0_i32_0 = arith.constant 0 : i32
    %c0_i32_1 = arith.constant 0 : i32
    return %c0_i32, %c0_i32_0 : i32, i32
  }
  func.func @transform_15(%arg0: i32) -> (i32, i32) {
    %c0_i32 = arith.constant 0 : i32
    %c0_i32_0 = arith.constant 0 : i32
    %c0_i32_1 = arith.constant 0 : i32
    return %c0_i32, %c0_i32_0 : i32, i32
  }
  func.func @transform_16(%arg0: i32) -> (i32, i32) {
    %c0_i32 = arith.constant 0 : i32
    %c0_i32_0 = arith.constant 0 : i32
    %c0_i32_1 = arith.constant 0 : i32
    return %c0_i32, %c0_i32_0 : i32, i32
  }
  func.func @transform_17(%arg0: i32) -> (i32, i32) {
    %c0_i32 = arith.constant 0 : i32
    %c0_i32_0 = arith.constant 0 : i32
    %c0_i32_1 = arith.constant 0 : i32
    return %c0_i32, %c0_i32_0 : i32, i32
  }
  func.func @transform_18(%arg0: i32) -> (i32, i32) {
    %c0_i32 = arith.constant 0 : i32
    %c0_i32_0 = arith.constant 0 : i32
    %c0_i32_1 = arith.constant 0 : i32
    return %c0_i32, %c0_i32_0 : i32, i32
  }
  func.func @transform_19(%arg0: i32) -> (i32, i32) {
    %c0_i32 = arith.constant 0 : i32
    %c0_i32_0 = arith.constant 0 : i32
    %c0_i32_1 = arith.constant 0 : i32
    return %c0_i32, %c0_i32_0 : i32, i32
  }
  func.func @transform_20(%arg0: i32) -> (i32, i32) {
    %c0_i32 = arith.constant 0 : i32
    %c0_i32_0 = arith.constant 0 : i32
    %c0_i32_1 = arith.constant 0 : i32
    return %c0_i32, %c0_i32_0 : i32, i32
  }
  func.func @transform_21(%arg0: i32) -> (i32, i32) {
    %c0_i32 = arith.constant 0 : i32
    %c0_i32_0 = arith.constant 0 : i32
    return %arg0, %c0_i32 : i32, i32
  }
}

</mosaic_0001>

<llo_original>
// kernel: tpu_custom_call.1
$region0: #{tpu_custom_call.1}
  #allocation0 [shape = 'u32[]', space=smem, size = 0x4, offset = 0x4, fixed_abs, tag = 'smem constant byte address 0x4 - core index']
  #allocation1 [shape = 'u32[144,128]{1,0:T(1,128)}', space=vmem, size = 0x12000, scoped, tag = 'internal scratch']
  %s0 = inlined_call_operand.hbm [shape: bf16[8,128], index: 0, kind: input, shape index: {}]
  %s1 = inlined_call_operand.hbm [shape: bf16[128,128], index: 1, kind: input, shape index: {}]
  %s2 = inlined_call_operand.hbm [shape: bf16[128,128], index: 2, kind: input, shape index: {}]
  %s3 = inlined_call_operand.hbm [shape: bf16[128,128], index: 3, kind: input, shape index: {}]
  %s4 = inlined_call_operand.hbm [shape: bf16[128,128], index: 4, kind: input, shape index: {}]
  %s5 = inlined_call_operand.hbm [shape: bf16[128,128], index: 5, kind: input, shape index: {}]
  %s6 = inlined_call_operand.hbm [shape: bf16[128,128], index: 6, kind: input, shape index: {}]
  %s7 = inlined_call_operand.hbm [shape: bf16[128,128], index: 7, kind: input, shape index: {}]
  %s8 = inlined_call_operand.hbm [shape: bf16[128,128], index: 8, kind: input, shape index: {}]
  %s9 = inlined_call_operand.hbm [shape: bf16[128,128], index: 9, kind: input, shape index: {}]
  %s10 = inlined_call_operand.hbm [shape: bf16[128,128], index: 10, kind: input, shape index: {}]
  %s11 = inlined_call_operand.vmem [shape: f32[1,128], index: 11, kind: input, shape index: {}]
  %s12 = inlined_call_operand.vmem [shape: f32[1,128], index: 12, kind: input, shape index: {}]
  %s13 = inlined_call_operand.vmem [shape: f32[1,128], index: 13, kind: input, shape index: {}]
  %s14 = inlined_call_operand.vmem [shape: f32[1,128], index: 14, kind: input, shape index: {}]
  %s15 = inlined_call_operand.vmem [shape: f32[1,128], index: 15, kind: input, shape index: {}]
  %s16 = inlined_call_operand.vmem [shape: f32[1,128], index: 16, kind: input, shape index: {}]
  %s17 = inlined_call_operand.vmem [shape: f32[1,128], index: 17, kind: input, shape index: {}]
  %s18 = inlined_call_operand.vmem [shape: f32[1,128], index: 18, kind: input, shape index: {}]
  %s19 = inlined_call_operand.vmem [shape: f32[1,128], index: 19, kind: input, shape index: {}]
  %s20 = inlined_call_operand.vmem [shape: f32[1,128], index: 20, kind: input, shape index: {}]
  %s21 = inlined_call_operand.hbm [shape: f32[8,768], index: 21, kind: output, shape index: {}]
  %s22 = sld [smem:[#allocation0]]
  $region138: #{tpu_custom_call.1} parent=0
    _
  %s24 = ssub.s32 1, %s22
  %s25 = scalar_select 0, %s24, %s22
  $region1: #{tpu_custom_call.1} parent=0
    #allocation2 [shape = 'u8[2048]{0}', space=vmem, size = 0x800, scoped, tag = 'input window, operand 0, single buffered']
    #allocation3 [shape = 's32[1]{0}', space=sflag, size = 0x4, scoped, tag = 'scoped memory for tpu_custom_call.1']
    #allocation4 [shape = 's32[1]{0}', space=sflag, size = 0x4, scoped, tag = 'scoped memory for tpu_custom_call.1']
    #allocation5 [shape = 'u8[32768]{0}', space=vmem, size = 0x8000, scoped, tag = 'input window, operand 1, single buffered']
    #allocation6 [shape = 's32[1]{0}', space=sflag, size = 0x4, scoped, tag = 'scoped memory for tpu_custom_call.1']
    #allocation7 [shape = 'u8[32768]{0}', space=vmem, size = 0x8000, scoped, tag = 'input window, operand 2, single buffered']
    #allocation8 [shape = 'u8[32768]{0}', space=vmem, size = 0x8000, scoped, tag = 'input window, operand 3, single buffered']
    #allocation9 [shape = 's32[1]{0}', space=sflag, size = 0x4, scoped, tag = 'scoped memory for tpu_custom_call.1']
    #allocation10 [shape = 'u8[32768]{0}', space=vmem, size = 0x8000, scoped, tag = 'input window, operand 4, single buffered']
    #allocation11 [shape = 'u8[32768]{0}', space=vmem, size = 0x8000, scoped, tag = 'input window, operand 5, single buffered']
    #allocation12 [shape = 's32[1]{0}', space=sflag, size = 0x4, scoped, tag = 'scoped memory for tpu_custom_call.1']
    #allocation13 [shape = 'u8[32768]{0}', space=vmem, size = 0x8000, scoped, tag = 'input window, operand 6, single buffered']
    #allocation14 [shape = 'u8[32768]{0}', space=vmem, size = 0x8000, scoped, tag = 'input window, operand 7, single buffered']
    #allocation15 [shape = 's32[1]{0}', space=sflag, size = 0x4, scoped, tag = 'scoped memory for tpu_custom_call.1']
    #allocation16 [shape = 'u8[32768]{0}', space=vmem, size = 0x8000, scoped, tag = 'input window, operand 8, single buffered']
    #allocation17 [shape = 'u8[32768]{0}', space=vmem, size = 0x8000, scoped, tag = 'input window, operand 9, single buffered']
    #allocation18 [shape = 's32[1]{0}', space=sflag, size = 0x4, scoped, tag = 'scoped memory for tpu_custom_call.1']
    #allocation19 [shape = 'u8[32768]{0}', space=vmem, size = 0x8000, scoped, tag = 'input window, operand 10, single buffered']
    #allocation20 [shape = 'u8[24576]{0}', space=vmem, size = 0x6000, scoped, tag = 'output window, operand 0, single buffered']
    %26 = vsyncpa [#allocation3], 0
    %27 = vsyncpa [#allocation6], 0
    %28 = vsyncpa [#allocation9], 0
    %29 = vsyncpa [#allocation12], 0
    %30 = vsyncpa [#allocation15], 0
    %31 = vsyncpa [#allocation18], 0
    %32 = vsyncpa [#allocation4], 0
    // Predicated region
    $region2: #{tpu_custom_call.1} parent=1 // pred_check
      _
    $region3: #{tpu_custom_call.1} parent=1 // pred_check_branch
      %34 = sbr.rel (0) target = $region5
    $region4: #{tpu_custom_call.1} parent=1 // pred_region
      %s36 = ssub.s32 64, 64
      %37 = vsyncadd [#allocation3], %s36
      %s39 = sshll.u32 [#allocation2], 4
      %s40 = int_to_ptr.vmem [resolvable:$true] %s39
      %42 = dma.hbm_to_vmem [thread:$0]  %s0, 64, %s40, [#allocation3]
    $region5: #{tpu_custom_call.1} parent=1 // pred_fallthru
      _
    // Predicated region
    $region6: #{tpu_custom_call.1} parent=1 // pred_check
      _
    $region7: #{tpu_custom_call.1} parent=1 // pred_check_branch
      %44 = sbr.rel (0) target = $region9
    $region8: #{tpu_custom_call.1} parent=1 // pred_region
      %s46 = ssub.s32 1024, 1024
      %47 = vsyncadd [#allocation6], %s46
      %s48 = sshll.u32 [#allocation5], 4
      %s49 = int_to_ptr.vmem [resolvable:$true] %s48
      %54 = dma.hbm_to_vmem [thread:$0]  %s1, 1024, %s49, [#allocation6], 64, 64, 4
    $region9: #{tpu_custom_call.1} parent=1 // pred_fallthru
      _
    // Predicated region
    $region10: #{tpu_custom_call.1} parent=1 // pred_check
      _
    $region11: #{tpu_custom_call.1} parent=1 // pred_check_branch
      %56 = sbr.rel (0) target = $region13
    $region12: #{tpu_custom_call.1} parent=1 // pred_region
      %s58 = ssub.s32 1024, 1024
      %59 = vsyncadd [#allocation6], %s58
      %s60 = sshll.u32 [#allocation7], 4
      %s61 = int_to_ptr.vmem [resolvable:$true] %s60
      %66 = dma.hbm_to_vmem [thread:$0]  %s2, 1024, %s61, [#allocation6], 64, 64, 4
    $region13: #{tpu_custom_call.1} parent=1 // pred_fallthru
      _
    // Predicated region
    $region14: #{tpu_custom_call.1} parent=1 // pred_check
      _
    $region15: #{tpu_custom_call.1} parent=1 // pred_check_branch
      %68 = sbr.rel (0) target = $region17
    $region16: #{tpu_custom_call.1} parent=1 // pred_region
      %s70 = ssub.s32 1024, 1024
      %71 = vsyncadd [#allocation9], %s70
      %s72 = sshll.u32 [#allocation8], 4
      %s73 = int_to_ptr.vmem [resolvable:$true] %s72
      %78 = dma.hbm_to_vmem [thread:$0]  %s3, 1024, %s73, [#allocation9], 64, 64, 4
    $region17: #{tpu_custom_call.1} parent=1 // pred_fallthru
      _
    // Predicated region
    $region18: #{tpu_custom_call.1} parent=1 // pred_check
      _
    $region19: #{tpu_custom_call.1} parent=1 // pred_check_branch
      %80 = sbr.rel (0) target = $region21
    $region20: #{tpu_custom_call.1} parent=1 // pred_region
      %s82 = ssub.s32 1024, 1024
      %83 = vsyncadd [#allocation9], %s82
      %s84 = sshll.u32 [#allocation10], 4
      %s85 = int_to_ptr.vmem [resolvable:$true] %s84
      %90 = dma.hbm_to_vmem [thread:$0]  %s4, 1024, %s85, [#allocation9], 64, 64, 4
    $region21: #{tpu_custom_call.1} parent=1 // pred_fallthru
      _
    // Predicated region
    $region22: #{tpu_custom_call.1} parent=1 // pred_check
      _
    $region23: #{tpu_custom_call.1} parent=1 // pred_check_branch
      %92 = sbr.rel (0) target = $region25
    $region24: #{tpu_custom_call.1} parent=1 // pred_region
      %s94 = ssub.s32 1024, 1024
      %95 = vsyncadd [#allocation12], %s94
      %s96 = sshll.u32 [#allocation11], 4
      %s97 = int_to_ptr.vmem [resolvable:$true] %s96
      %102 = dma.hbm_to_vmem [thread:$0]  %s5, 1024, %s97, [#allocation12], 64, 64, 4
    $region25: #{tpu_custom_call.1} parent=1 // pred_fallthru
      _
    // Predicated region
    $region26: #{tpu_custom_call.1} parent=1 // pred_check
      _
    $region27: #{tpu_custom_call.1} parent=1 // pred_check_branch
      %104 = sbr.rel (0) target = $region29
    $region28: #{tpu_custom_call.1} parent=1 // pred_region
      %s106 = ssub.s32 1024, 1024
      %107 = vsyncadd [#allocation12], %s106
      %s108 = sshll.u32 [#allocation13], 4
      %s109 = int_to_ptr.vmem [resolvable:$true] %s108
      %114 = dma.hbm_to_vmem [thread:$0]  %s6, 1024, %s109, [#allocation12], 64, 64, 4
    $region29: #{tpu_custom_call.1} parent=1 // pred_fallthru
      _
    // Predicated region
    $region30: #{tpu_custom_call.1} parent=1 // pred_check
      _
    $region31: #{tpu_custom_call.1} parent=1 // pred_check_branch
      %116 = sbr.rel (0) target = $region33
    $region32: #{tpu_custom_call.1} parent=1 // pred_region
      %s118 = ssub.s32 1024, 1024
      %119 = vsyncadd [#allocation15], %s118
      %s120 = sshll.u32 [#allocation14], 4
      %s121 = int_to_ptr.vmem [resolvable:$true] %s120
      %126 = dma.hbm_to_vmem [thread:$0]  %s7, 1024, %s121, [#allocation15], 64, 64, 4
    $region33: #{tpu_custom_call.1} parent=1 // pred_fallthru
      _
    // Predicated region
    $region34: #{tpu_custom_call.1} parent=1 // pred_check
      _
    $region35: #{tpu_custom_call.1} parent=1 // pred_check_branch
      %128 = sbr.rel (0) target = $region37
    $region36: #{tpu_custom_call.1} parent=1 // pred_region
      %s130 = ssub.s32 1024, 1024
      %131 = vsyncadd [#allocation15], %s130
      %s132 = sshll.u32 [#allocation16], 4
      %s133 = int_to_ptr.vmem [resolvable:$true] %s132
      %138 = dma.hbm_to_vmem [thread:$0]  %s8, 1024, %s133, [#allocation15], 64, 64, 4
    $region37: #{tpu_custom_call.1} parent=1 // pred_fallthru
      _
    // Predicated region
    $region38: #{tpu_custom_call.1} parent=1 // pred_check
      _
    $region39: #{tpu_custom_call.1} parent=1 // pred_check_branch
      %140 = sbr.rel (0) target = $region41
    $region40: #{tpu_custom_call.1} parent=1 // pred_region
      %s142 = ssub.s32 1024, 1024
      %143 = vsyncadd [#allocation18], %s142
      %s144 = sshll.u32 [#allocation17], 4
      %s145 = int_to_ptr.vmem [resolvable:$true] %s144
      %150 = dma.hbm_to_vmem [thread:$0]  %s9, 1024, %s145, [#allocation18], 64, 64, 4
    $region41: #{tpu_custom_call.1} parent=1 // pred_fallthru
      _
    // Predicated region
    $region42: #{tpu_custom_call.1} parent=1 // pred_check
      _
    $region43: #{tpu_custom_call.1} parent=1 // pred_check_branch
      %152 = sbr.rel (0) target = $region45
    $region44: #{tpu_custom_call.1} parent=1 // pred_region
      %s154 = ssub.s32 1024, 1024
      %155 = vsyncadd [#allocation18], %s154
      %s156 = sshll.u32 [#allocation19], 4
      %s157 = int_to_ptr.vmem [resolvable:$true] %s156
      %162 = dma.hbm_to_vmem [thread:$0]  %s10, 1024, %s157, [#allocation18], 64, 64, 4
    $region45: #{tpu_custom_call.1} parent=1 // pred_fallthru
      _
    // Predicated region
    $region46: #{tpu_custom_call.1} parent=1 // pred_check
      _
    $region47: #{tpu_custom_call.1} parent=1 // pred_check_branch
      %164 = sbr.rel (0) target = $region49
    $region48: #{tpu_custom_call.1} parent=1 // pred_region
      _
    $region49: #{tpu_custom_call.1} parent=1 // pred_fallthru
      _
    // Predicated region
    $region50: #{tpu_custom_call.1} parent=1 // pred_check
      _
    $region51: #{tpu_custom_call.1} parent=1 // pred_check_branch
      %166 = sbr.rel (0) target = $region53
    $region52: #{tpu_custom_call.1} parent=1 // pred_region
      _
    $region53: #{tpu_custom_call.1} parent=1 // pred_fallthru
      _
    // Predicated region
    $region54: #{tpu_custom_call.1} parent=1 // pred_check
      _
    $region55: #{tpu_custom_call.1} parent=1 // pred_check_branch
      %168 = sbr.rel (0) target = $region57
    $region56: #{tpu_custom_call.1} parent=1 // pred_region
      _
    $region57: #{tpu_custom_call.1} parent=1 // pred_fallthru
      _
    // Predicated region
    $region58: #{tpu_custom_call.1} parent=1 // pred_check
      _
    $region59: #{tpu_custom_call.1} parent=1 // pred_check_branch
      %170 = sbr.rel (0) target = $region61
    $region60: #{tpu_custom_call.1} parent=1 // pred_region
      _
    $region61: #{tpu_custom_call.1} parent=1 // pred_fallthru
      _
    // Predicated region
    $region62: #{tpu_custom_call.1} parent=1 // pred_check
      _
    $region63: #{tpu_custom_call.1} parent=1 // pred_check_branch
      %172 = sbr.rel (0) target = $region65
    $region64: #{tpu_custom_call.1} parent=1 // pred_region
      _
    $region65: #{tpu_custom_call.1} parent=1 // pred_fallthru
      _
    // Predicated region
    $region66: #{tpu_custom_call.1} parent=1 // pred_check
      _
    $region67: #{tpu_custom_call.1} parent=1 // pred_check_branch
      %174 = sbr.rel (0) target = $region69
    $region68: #{tpu_custom_call.1} parent=1 // pred_region
      _
    $region69: #{tpu_custom_call.1} parent=1 // pred_fallthru
      _
    // Predicated region
    $region70: #{tpu_custom_call.1} parent=1 // pred_check
      _
    $region71: #{tpu_custom_call.1} parent=1 // pred_check_branch
      %176 = sbr.rel (0) target = $region73
    $region72: #{tpu_custom_call.1} parent=1 // pred_region
      _
    $region73: #{tpu_custom_call.1} parent=1 // pred_fallthru
      _
    // Predicated region
    $region74: #{tpu_custom_call.1} parent=1 // pred_check
      _
    $region75: #{tpu_custom_call.1} parent=1 // pred_check_branch
      %178 = sbr.rel (0) target = $region77
    $region76: #{tpu_custom_call.1} parent=1 // pred_region
      _
    $region77: #{tpu_custom_call.1} parent=1 // pred_fallthru
      _
    // Predicated region
    $region78: #{tpu_custom_call.1} parent=1 // pred_check
      _
    $region79: #{tpu_custom_call.1} parent=1 // pred_check_branch
      %180 = sbr.rel (0) target = $region81
    $region80: #{tpu_custom_call.1} parent=1 // pred_region
      _
    $region81: #{tpu_custom_call.1} parent=1 // pred_fallthru
      _
    // Predicated region
    $region82: #{tpu_custom_call.1} parent=1 // pred_check
      _
    $region83: #{tpu_custom_call.1} parent=1 // pred_check_branch
      %182 = sbr.rel (0) target = $region85
    $region84: #{tpu_custom_call.1} parent=1 // pred_region
      _
    $region85: #{tpu_custom_call.1} parent=1 // pred_fallthru
      _
    // Predicated region
    $region86: #{tpu_custom_call.1} parent=1 // pred_check
      _
    $region87: #{tpu_custom_call.1} parent=1 // pred_check_branch
      %184 = sbr.rel (0) target = $region89
    $region88: #{tpu_custom_call.1} parent=1 // pred_region
      %185 = dma.done [#allocation3], 64
    $region89: #{tpu_custom_call.1} parent=1 // pred_fallthru
      _
    // Predicated region
    $region90: #{tpu_custom_call.1} parent=1 // pred_check
      _
    $region91: #{tpu_custom_call.1} parent=1 // pred_check_branch
      %187 = sbr.rel (0) target = $region93
    $region92: #{tpu_custom_call.1} parent=1 // pred_region
      %188 = dma.done [#allocation6], 1024
    $region93: #{tpu_custom_call.1} parent=1 // pred_fallthru
      _
    // Predicated region
    $region94: #{tpu_custom_call.1} parent=1 // pred_check
      _
    $region95: #{tpu_custom_call.1} parent=1 // pred_check_branch
      %190 = sbr.rel (0) target = $region97
    $region96: #{tpu_custom_call.1} parent=1 // pred_region
      %191 = dma.done [#allocation6], 1024
    $region97: #{tpu_custom_call.1} parent=1 // pred_fallthru
      _
    // Predicated region
    $region98: #{tpu_custom_call.1} parent=1 // pred_check
      _
    $region99: #{tpu_custom_call.1} parent=1 // pred_check_branch
      %193 = sbr.rel (0) target = $region101
    $region100: #{tpu_custom_call.1} parent=1 // pred_region
      %194 = dma.done [#allocation9], 1024
    $region101: #{tpu_custom_call.1} parent=1 // pred_fallthru
      _
    // Predicated region
    $region102: #{tpu_custom_call.1} parent=1 // pred_check
      _
    $region103: #{tpu_custom_call.1} parent=1 // pred_check_branch
      %196 = sbr.rel (0) target = $region105
    $region104: #{tpu_custom_call.1} parent=1 // pred_region
      %197 = dma.done [#allocation9], 1024
    $region105: #{tpu_custom_call.1} parent=1 // pred_fallthru
      _
    // Predicated region
    $region106: #{tpu_custom_call.1} parent=1 // pred_check
      _
    $region107: #{tpu_custom_call.1} parent=1 // pred_check_branch
      %199 = sbr.rel (0) target = $region109
    $region108: #{tpu_custom_call.1} parent=1 // pred_region
      %200 = dma.done [#allocation12], 1024
    $region109: #{tpu_custom_call.1} parent=1 // pred_fallthru
      _
    // Predicated region
    $region110: #{tpu_custom_call.1} parent=1 // pred_check
      _
    $region111: #{tpu_custom_call.1} parent=1 // pred_check_branch
      %202 = sbr.rel (0) target = $region113
    $region112: #{tpu_custom_call.1} parent=1 // pred_region
      %203 = dma.done [#allocation12], 1024
    $region113: #{tpu_custom_call.1} parent=1 // pred_fallthru
      _
    // Predicated region
    $region114: #{tpu_custom_call.1} parent=1 // pred_check
      _
    $region115: #{tpu_custom_call.1} parent=1 // pred_check_branch
      %205 = sbr.rel (0) target = $region117
    $region116: #{tpu_custom_call.1} parent=1 // pred_region
      %206 = dma.done [#allocation15], 1024
    $region117: #{tpu_custom_call.1} parent=1 // pred_fallthru
      _
    // Predicated region
    $region118: #{tpu_custom_call.1} parent=1 // pred_check
      _
    $region119: #{tpu_custom_call.1} parent=1 // pred_check_branch
      %208 = sbr.rel (0) target = $region121
    $region120: #{tpu_custom_call.1} parent=1 // pred_region
      %209 = dma.done [#allocation15], 1024
    $region121: #{tpu_custom_call.1} parent=1 // pred_fallthru
      _
    // Predicated region
    $region122: #{tpu_custom_call.1} parent=1 // pred_check
      _
    $region123: #{tpu_custom_call.1} parent=1 // pred_check_branch
      %211 = sbr.rel (0) target = $region125
    $region124: #{tpu_custom_call.1} parent=1 // pred_region
      %212 = dma.done [#allocation18], 1024
    $region125: #{tpu_custom_call.1} parent=1 // pred_fallthru
      _
    // Predicated region
    $region126: #{tpu_custom_call.1} parent=1 // pred_check
      _
    $region127: #{tpu_custom_call.1} parent=1 // pred_check_branch
      %214 = sbr.rel (0) target = $region129
    $region128: #{tpu_custom_call.1} parent=1 // pred_region
      %215 = dma.done [#allocation18], 1024
    $region129: #{tpu_custom_call.1} parent=1 // pred_fallthru
      _
    %v217 = vld [vmem:[#allocation2] sm:$0xf]
    %v218 = vld [vmem:[#allocation5] sm:$0xf]
    %v219 = vld [vmem:[#allocation5 + $0x4] sm:$0xf]
    %v220 = vld [vmem:[#allocation5 + $0x8] sm:$0xf]
    %v221 = vld [vmem:[#allocation5 + $0xc] sm:$0xf]
    %v222 = vld [vmem:[#allocation5 + $0x10] sm:$0xf]
    %v223 = vld [vmem:[#allocation5 + $0x14] sm:$0xf]
    %v224 = vld [vmem:[#allocation5 + $0x18] sm:$0xf]
    %v225 = vld [vmem:[#allocation5 + $0x1c] sm:$0xf]
    %v226 = vld [vmem:[#allocation5 + $0x20] sm:$0xf]
    %v227 = vld [vmem:[#allocation5 + $0x24] sm:$0xf]
    %v228 = vld [vmem:[#allocation5 + $0x28] sm:$0xf]
    %v229 = vld [vmem:[#allocation5 + $0x2c] sm:$0xf]
    %v230 = vld [vmem:[#allocation5 + $0x30] sm:$0xf]
    %v231 = vld [vmem:[#allocation5 + $0x34] sm:$0xf]
    %v232 = vld [vmem:[#allocation5 + $0x38] sm:$0xf]
    %v233 = vld [vmem:[#allocation5 + $0x3c] sm:$0xf]
    %v234 = vld [vmem:[%s11] sm:$0x1]
    %v236 = vlaneseq
    %v237 = vshrl.u32 %v236, 7
    %v238 = vsub.s32 0, %v237
    %v239 = vrot.slane %v234, %v238
    %v257 = vunpack.c.l.b16 %v218
    %v258 = vunpack.c.l.b16 %v219
    %v259 = vunpack.c.l.b16 %v220
    %v260 = vunpack.c.l.b16 %v221
    %v261 = vunpack.c.l.b16 %v222
    %v262 = vunpack.c.l.b16 %v223
    %v263 = vunpack.c.l.b16 %v224
    %v264 = vunpack.c.l.b16 %v225
    %v265 = vunpack.c.l.b16 %v226
    %v266 = vunpack.c.l.b16 %v227
    %v267 = vunpack.c.l.b16 %v228
    %v268 = vunpack.c.l.b16 %v229
    %v269 = vunpack.c.l.b16 %v230
    %v270 = vunpack.c.l.b16 %v231
    %v271 = vunpack.c.l.b16 %v232
    %v272 = vunpack.c.l.b16 %v233
    %v273 = vpack.c.b16 %v258, %v257
    %v274 = vpack.c.b16 %v260, %v259
    %v275 = vpack.c.b16 %v262, %v261
    %v276 = vpack.c.b16 %v264, %v263
    %v277 = vpack.c.b16 %v266, %v265
    %v278 = vpack.c.b16 %v268, %v267
    %v279 = vpack.c.b16 %v270, %v269
    %v280 = vpack.c.b16 %v272, %v271
    %289 = vmatprep.subr.bf16.mxu0 0
    %290 = vmatpush1.bf16.msra.mxu0 %v280
    %291 = vmatprep.subr.bf16.mxu0 0
    %292 = vmatpush1.bf16.msra.mxu0 %v279
    %293 = vmatprep.subr.bf16.mxu0 0
    %294 = vmatpush1.bf16.msra.mxu0 %v278
    %295 = vmatprep.subr.bf16.mxu0 0
    %296 = vmatpush1.bf16.msra.mxu0 %v277
    %297 = vmatprep.subr.bf16.mxu0 0
    %298 = vmatpush1.bf16.msra.mxu0 %v276
    %299 = vmatprep.subr.bf16.mxu0 0
    %300 = vmatpush1.bf16.msra.mxu0 %v275
    %301 = vmatprep.subr.bf16.mxu0 0
    %302 = vmatpush1.bf16.msra.mxu0 %v274
    %303 = vmatprep.subr.bf16.mxu0 0
    %304 = vmatpush1.bf16.msra.mxu0 %v273
    %305 = vmatprep.subr.bf16.mxu0 0
    %306 = vmatpush2.bf16.msra.mxu0 0
    %307 = vmatprep.subr.bf16.mxu0 0
    %308 = vmatpush2.bf16.msra.mxu0 0
    %309 = vmatprep.subr.bf16.mxu0 0
    %310 = vmatpush2.bf16.msra.mxu0 0
    %311 = vmatprep.subr.bf16.mxu0 0
    %312 = vmatpush2.bf16.msra.mxu0 0
    %313 = vmatprep.subr.bf16.mxu0 0
    %314 = vmatpush2.bf16.msra.mxu0 0
    %315 = vmatprep.subr.bf16.mxu0 0
    %316 = vmatpush2.bf16.msra.mxu0 0
    %317 = vmatprep.subr.bf16.mxu0 0
    %318 = vmatpush2.bf16.msra.mxu0 0
    %319 = vmatprep.subr.bf16.mxu0 0
    %320 = vmatpush2.bf16.msra.mxu0 0
    %321 = vmatprep.mubr.bf16.mxu0 0
    %322 = vmatmul.mubr.bf16.gmra.mxu0 %v217
    %v323 = vpop.f32.mrf.mxu0
    %v324 = vadd.f32 %v239, %v323
    %v325 = vpop.f32.mrf.mxu0
    %v326 = vpop.f32.mrf.mxu0
    %v327 = vpop.f32.mrf.mxu0
    %328 = vdwg.mxu0
    %329 = vst [vmem:[#allocation20] sm:$0xff] %v324
    %v330 = vpack.c.bf16 %v324, %v324
    %v331 = vld [vmem:[#allocation7] sm:$0xf]
    %v332 = vld [vmem:[#allocation7 + $0x4] sm:$0xf]
    %v333 = vld [vmem:[#allocation7 + $0x8] sm:$0xf]
    %v334 = vld [vmem:[#allocation7 + $0xc] sm:$0xf]
    %v335 = vld [vmem:[#allocation7 + $0x10] sm:$0xf]
    %v336 = vld [vmem:[#allocation7 + $0x14] sm:$0xf]
    %v337 = vld [vmem:[#allocation7 + $0x18] sm:$0xf]
    %v338 = vld [vmem:[#allocation7 + $0x1c] sm:$0xf]
    %v339 = vld [vmem:[#allocation7 + $0x20] sm:$0xf]
    %v340 = vld [vmem:[#allocation7 + $0x24] sm:$0xf]
    %v341 = vld [vmem:[#allocation7 + $0x28] sm:$0xf]
    %v342 = vld [vmem:[#allocation7 + $0x2c] sm:$0xf]
    %v343 = vld [vmem:[#allocation7 + $0x30] sm:$0xf]
    %v344 = vld [vmem:[#allocation7 + $0x34] sm:$0xf]
    %v345 = vld [vmem:[#allocation7 + $0x38] sm:$0xf]
    %v346 = vld [vmem:[#allocation7 + $0x3c] sm:$0xf]
    %v347 = vld [vmem:[%s12] sm:$0x1]
    %v349 = vlaneseq
    %v350 = vshrl.u32 %v349, 7
    %v351 = vsub.s32 0, %v350
    %v352 = vrot.slane %v347, %v351
    %v370 = vunpack.c.l.b16 %v331
    %v371 = vunpack.c.l.b16 %v332
    %v372 = vunpack.c.l.b16 %v333
    %v373 = vunpack.c.l.b16 %v334
    %v374 = vunpack.c.l.b16 %v335
    %v375 = vunpack.c.l.b16 %v336
    %v376 = vunpack.c.l.b16 %v337
    %v377 = vunpack.c.l.b16 %v338
    %v378 = vunpack.c.l.b16 %v339
    %v379 = vunpack.c.l.b16 %v340
    %v380 = vunpack.c.l.b16 %v341
    %v381 = vunpack.c.l.b16 %v342
    %v382 = vunpack.c.l.b16 %v343
    %v383 = vunpack.c.l.b16 %v344
    %v384 = vunpack.c.l.b16 %v345
    %v385 = vunpack.c.l.b16 %v346
    %v386 = vpack.c.b16 %v371, %v370
    %v387 = vpack.c.b16 %v373, %v372
    %v388 = vpack.c.b16 %v375, %v374
    %v389 = vpack.c.b16 %v377, %v376
    %v390 = vpack.c.b16 %v379, %v378
    %v391 = vpack.c.b16 %v381, %v380
    %v392 = vpack.c.b16 %v383, %v382
    %v393 = vpack.c.b16 %v385, %v384
    %402 = vmatprep.subr.bf16.mxu0 0
    %403 = vmatpush1.bf16.msra.mxu0 %v393
    %404 = vmatprep.subr.bf16.mxu0 0
    %405 = vmatpush1.bf16.msra.mxu0 %v392
    %406 = vmatprep.subr.bf16.mxu0 0
    %407 = vmatpush1.bf16.msra.mxu0 %v391
    %408 = vmatprep.subr.bf16.mxu0 0
    %409 = vmatpush1.bf16.msra.mxu0 %v390
    %410 = vmatprep.subr.bf16.mxu0 0
    %411 = vmatpush1.bf16.msra.mxu0 %v389
    %412 = vmatprep.subr.bf16.mxu0 0
    %413 = vmatpush1.bf16.msra.mxu0 %v388
    %414 = vmatprep.subr.bf16.mxu0 0
    %415 = vmatpush1.bf16.msra.mxu0 %v387
    %416 = vmatprep.subr.bf16.mxu0 0
    %417 = vmatpush1.bf16.msra.mxu0 %v386
    %418 = vmatprep.subr.bf16.mxu0 0
    %419 = vmatpush2.bf16.msra.mxu0 0
    %420 = vmatprep.subr.bf16.mxu0 0
    %421 = vmatpush2.bf16.msra.mxu0 0
    %422 = vmatprep.subr.bf16.mxu0 0
    %423 = vmatpush2.bf16.msra.mxu0 0
    %424 = vmatprep.subr.bf16.mxu0 0
    %425 = vmatpush2.bf16.msra.mxu0 0
    %426 = vmatprep.subr.bf16.mxu0 0
    %427 = vmatpush2.bf16.msra.mxu0 0
    %428 = vmatprep.subr.bf16.mxu0 0
    %429 = vmatpush2.bf16.msra.mxu0 0
    %430 = vmatprep.subr.bf16.mxu0 0
    %431 = vmatpush2.bf16.msra.mxu0 0
    %432 = vmatprep.subr.bf16.mxu0 0
    %433 = vmatpush2.bf16.msra.mxu0 0
    %434 = vmatprep.mubr.bf16.mxu0 0
    %435 = vmatmul.mubr.bf16.gmra.mxu0 %v330
    %v436 = vpop.f32.mrf.mxu0
    %v437 = vadd.f32 %v352, %v436
    %v438 = vpop.f32.mrf.mxu0
    %v439 = vpop.f32.mrf.mxu0
    %v440 = vpop.f32.mrf.mxu0
    %441 = vdwg.mxu0
    %v442 = vmax.f32 %v437, 0.0
    %443 = vst [vmem:[#allocation20 + $0x8] sm:$0xff] %v442
    %v444 = vpack.c.bf16 %v442, %v442
    %v445 = vld [vmem:[#allocation8] sm:$0xf]
    %v446 = vld [vmem:[#allocation8 + $0x4] sm:$0xf]
    %v447 = vld [vmem:[#allocation8 + $0x8] sm:$0xf]
    %v448 = vld [vmem:[#allocation8 + $0xc] sm:$0xf]
    %v449 = vld [vmem:[#allocation8 + $0x10] sm:$0xf]
    %v450 = vld [vmem:[#allocation8 + $0x14] sm:$0xf]
    %v451 = vld [vmem:[#allocation8 + $0x18] sm:$0xf]
    %v452 = vld [vmem:[#allocation8 + $0x1c] sm:$0xf]
    %v453 = vld [vmem:[#allocation8 + $0x20] sm:$0xf]
    %v454 = vld [vmem:[#allocation8 + $0x24] sm:$0xf]
    %v455 = vld [vmem:[#allocation8 + $0x28] sm:$0xf]
    %v456 = vld [vmem:[#allocation8 + $0x2c] sm:$0xf]
    %v457 = vld [vmem:[#allocation8 + $0x30] sm:$0xf]
    %v458 = vld [vmem:[#allocation8 + $0x34] sm:$0xf]
    %v459 = vld [vmem:[#allocation8 + $0x38] sm:$0xf]
    %v460 = vld [vmem:[#allocation8 + $0x3c] sm:$0xf]
    %v461 = vld [vmem:[%s13] sm:$0x1]
    %v463 = vlaneseq
    %v464 = vshrl.u32 %v463, 7
    %v465 = vsub.s32 0, %v464
    %v466 = vrot.slane %v461, %v465
    %v484 = vunpack.c.l.b16 %v445
    %v485 = vunpack.c.l.b16 %v446
    %v486 = vunpack.c.l.b16 %v447
    %v487 = vunpack.c.l.b16 %v448
    %v488 = vunpack.c.l.b16 %v449
    %v489 = vunpack.c.l.b16 %v450
    %v490 = vunpack.c.l.b16 %v451
    %v491 = vunpack.c.l.b16 %v452
    %v492 = vunpack.c.l.b16 %v453
    %v493 = vunpack.c.l.b16 %v454
    %v494 = vunpack.c.l.b16 %v455
    %v495 = vunpack.c.l.b16 %v456
    %v496 = vunpack.c.l.b16 %v457
    %v497 = vunpack.c.l.b16 %v458
    %v498 = vunpack.c.l.b16 %v459
    %v499 = vunpack.c.l.b16 %v460
    %v500 = vpack.c.b16 %v485, %v484
    %v501 = vpack.c.b16 %v487, %v486
    %v502 = vpack.c.b16 %v489, %v488
    %v503 = vpack.c.b16 %v491, %v490
    %v504 = vpack.c.b16 %v493, %v492
    %v505 = vpack.c.b16 %v495, %v494
    %v506 = vpack.c.b16 %v497, %v496
    %v507 = vpack.c.b16 %v499, %v498
    %516 = vmatprep.subr.bf16.mxu0 0
    %517 = vmatpush1.bf16.msra.mxu0 %v507
    %518 = vmatprep.subr.bf16.mxu0 0
    %519 = vmatpush1.bf16.msra.mxu0 %v506
    %520 = vmatprep.subr.bf16.mxu0 0
    %521 = vmatpush1.bf16.msra.mxu0 %v505
    %522 = vmatprep.subr.bf16.mxu0 0
    %523 = vmatpush1.bf16.msra.mxu0 %v504
    %524 = vmatprep.subr.bf16.mxu0 0
    %525 = vmatpush1.bf16.msra.mxu0 %v503
    %526 = vmatprep.subr.bf16.mxu0 0
    %527 = vmatpush1.bf16.msra.mxu0 %v502
    %528 = vmatprep.subr.bf16.mxu0 0
    %529 = vmatpush1.bf16.msra.mxu0 %v501
    %530 = vmatprep.subr.bf16.mxu0 0
    %531 = vmatpush1.bf16.msra.mxu0 %v500
    %532 = vmatprep.subr.bf16.mxu0 0
    %533 = vmatpush2.bf16.msra.mxu0 0
    %534 = vmatprep.subr.bf16.mxu0 0
    %535 = vmatpush2.bf16.msra.mxu0 0
    %536 = vmatprep.subr.bf16.mxu0 0
    %537 = vmatpush2.bf16.msra.mxu0 0
    %538 = vmatprep.subr.bf16.mxu0 0
    %539 = vmatpush2.bf16.msra.mxu0 0
    %540 = vmatprep.subr.bf16.mxu0 0
    %541 = vmatpush2.bf16.msra.mxu0 0
    %542 = vmatprep.subr.bf16.mxu0 0
    %543 = vmatpush2.bf16.msra.mxu0 0
    %544 = vmatprep.subr.bf16.mxu0 0
    %545 = vmatpush2.bf16.msra.mxu0 0
    %546 = vmatprep.subr.bf16.mxu0 0
    %547 = vmatpush2.bf16.msra.mxu0 0
    %548 = vmatprep.mubr.bf16.mxu0 0
    %549 = vmatmul.mubr.bf16.gmra.mxu0 %v444
    %v550 = vpop.f32.mrf.mxu0
    %v551 = vadd.f32 %v466, %v550
    %v552 = vpop.f32.mrf.mxu0
    %v553 = vpop.f32.mrf.mxu0
    %v554 = vpop.f32.mrf.mxu0
    %555 = vdwg.mxu0
    %v556 = vmax.f32 %v551, 0.0
    %557 = vst [vmem:[#allocation20 + $0x10] sm:$0xff] %v556
    %v558 = vpack.c.bf16 %v556, %v556
    %v559 = vld [vmem:[#allocation10] sm:$0xf]
    %v560 = vld [vmem:[#allocation10 + $0x4] sm:$0xf]
    %v561 = vld [vmem:[#allocation10 + $0x8] sm:$0xf]
    %v562 = vld [vmem:[#allocation10 + $0xc] sm:$0xf]
    %v563 = vld [vmem:[#allocation10 + $0x10] sm:$0xf]
    %v564 = vld [vmem:[#allocation10 + $0x14] sm:$0xf]
    %v565 = vld [vmem:[#allocation10 + $0x18] sm:$0xf]
    %v566 = vld [vmem:[#allocation10 + $0x1c] sm:$0xf]
    %v567 = vld [vmem:[#allocation10 + $0x20] sm:$0xf]
    %v568 = vld [vmem:[#allocation10 + $0x24] sm:$0xf]
    %v569 = vld [vmem:[#allocation10 + $0x28] sm:$0xf]
    %v570 = vld [vmem:[#allocation10 + $0x2c] sm:$0xf]
    %v571 = vld [vmem:[#allocation10 + $0x30] sm:$0xf]
    %v572 = vld [vmem:[#allocation10 + $0x34] sm:$0xf]
    %v573 = vld [vmem:[#allocation10 + $0x38] sm:$0xf]
    %v574 = vld [vmem:[#allocation10 + $0x3c] sm:$0xf]
    %v575 = vld [vmem:[%s14] sm:$0x1]
    %v577 = vlaneseq
    %v578 = vshrl.u32 %v577, 7
    %v579 = vsub.s32 0, %v578
    %v580 = vrot.slane %v575, %v579
    %v598 = vunpack.c.l.b16 %v559
    %v599 = vunpack.c.l.b16 %v560
    %v600 = vunpack.c.l.b16 %v561
    %v601 = vunpack.c.l.b16 %v562
    %v602 = vunpack.c.l.b16 %v563
    %v603 = vunpack.c.l.b16 %v564
    %v604 = vunpack.c.l.b16 %v565
    %v605 = vunpack.c.l.b16 %v566
    %v606 = vunpack.c.l.b16 %v567
    %v607 = vunpack.c.l.b16 %v568
    %v608 = vunpack.c.l.b16 %v569
    %v609 = vunpack.c.l.b16 %v570
    %v610 = vunpack.c.l.b16 %v571
    %v611 = vunpack.c.l.b16 %v572
    %v612 = vunpack.c.l.b16 %v573
    %v613 = vunpack.c.l.b16 %v574
    %v614 = vpack.c.b16 %v599, %v598
    %v615 = vpack.c.b16 %v601, %v600
    %v616 = vpack.c.b16 %v603, %v602
    %v617 = vpack.c.b16 %v605, %v604
    %v618 = vpack.c.b16 %v607, %v606
    %v619 = vpack.c.b16 %v609, %v608
    %v620 = vpack.c.b16 %v611, %v610
    %v621 = vpack.c.b16 %v613, %v612
    %630 = vmatprep.subr.bf16.mxu0 0
    %631 = vmatpush1.bf16.msra.mxu0 %v621
    %632 = vmatprep.subr.bf16.mxu0 0
    %633 = vmatpush1.bf16.msra.mxu0 %v620
    %634 = vmatprep.subr.bf16.mxu0 0
    %635 = vmatpush1.bf16.msra.mxu0 %v619
    %636 = vmatprep.subr.bf16.mxu0 0
    %637 = vmatpush1.bf16.msra.mxu0 %v618
    %638 = vmatprep.subr.bf16.mxu0 0
    %639 = vmatpush1.bf16.msra.mxu0 %v617
    %640 = vmatprep.subr.bf16.mxu0 0
    %641 = vmatpush1.bf16.msra.mxu0 %v616
    %642 = vmatprep.subr.bf16.mxu0 0
    %643 = vmatpush1.bf16.msra.mxu0 %v615
    %644 = vmatprep.subr.bf16.mxu0 0
    %645 = vmatpush1.bf16.msra.mxu0 %v614
    %646 = vmatprep.subr.bf16.mxu0 0
    %647 = vmatpush2.bf16.msra.mxu0 0
    %648 = vmatprep.subr.bf16.mxu0 0
    %649 = vmatpush2.bf16.msra.mxu0 0
    %650 = vmatprep.subr.bf16.mxu0 0
    %651 = vmatpush2.bf16.msra.mxu0 0
    %652 = vmatprep.subr.bf16.mxu0 0
    %653 = vmatpush2.bf16.msra.mxu0 0
    %654 = vmatprep.subr.bf16.mxu0 0
    %655 = vmatpush2.bf16.msra.mxu0 0
    %656 = vmatprep.subr.bf16.mxu0 0
    %657 = vmatpush2.bf16.msra.mxu0 0
    %658 = vmatprep.subr.bf16.mxu0 0
    %659 = vmatpush2.bf16.msra.mxu0 0
    %660 = vmatprep.subr.bf16.mxu0 0
    %661 = vmatpush2.bf16.msra.mxu0 0
    %662 = vmatprep.mubr.bf16.mxu0 0
    %663 = vmatmul.mubr.bf16.gmra.mxu0 %v558
    %v664 = vpop.f32.mrf.mxu0
    %v665 = vadd.f32 %v580, %v664
    %v666 = vpop.f32.mrf.mxu0
    %v667 = vpop.f32.mrf.mxu0
    %v668 = vpop.f32.mrf.mxu0
    %669 = vdwg.mxu0
    %v670 = vmax.f32 %v665, 0.0
    %671 = vst [vmem:[#allocation20 + $0x18] sm:$0xff] %v670
    %v672 = vpack.c.bf16 %v670, %v670
    %v673 = vld [vmem:[#allocation11] sm:$0xf]
    %v674 = vld [vmem:[#allocation11 + $0x4] sm:$0xf]
    %v675 = vld [vmem:[#allocation11 + $0x8] sm:$0xf]
    %v676 = vld [vmem:[#allocation11 + $0xc] sm:$0xf]
    %v677 = vld [vmem:[#allocation11 + $0x10] sm:$0xf]
    %v678 = vld [vmem:[#allocation11 + $0x14] sm:$0xf]
    %v679 = vld [vmem:[#allocation11 + $0x18] sm:$0xf]
    %v680 = vld [vmem:[#allocation11 + $0x1c] sm:$0xf]
    %v681 = vld [vmem:[#allocation11 + $0x20] sm:$0xf]
    %v682 = vld [vmem:[#allocation11 + $0x24] sm:$0xf]
    %v683 = vld [vmem:[#allocation11 + $0x28] sm:$0xf]
    %v684 = vld [vmem:[#allocation11 + $0x2c] sm:$0xf]
    %v685 = vld [vmem:[#allocation11 + $0x30] sm:$0xf]
    %v686 = vld [vmem:[#allocation11 + $0x34] sm:$0xf]
    %v687 = vld [vmem:[#allocation11 + $0x38] sm:$0xf]
    %v688 = vld [vmem:[#allocation11 + $0x3c] sm:$0xf]
    %v689 = vld [vmem:[%s15] sm:$0x1]
    %v691 = vlaneseq
    %v692 = vshrl.u32 %v691, 7
    %v693 = vsub.s32 0, %v692
    %v694 = vrot.slane %v689, %v693
    %v712 = vunpack.c.l.b16 %v673
    %v713 = vunpack.c.l.b16 %v674
    %v714 = vunpack.c.l.b16 %v675
    %v715 = vunpack.c.l.b16 %v676
    %v716 = vunpack.c.l.b16 %v677
    %v717 = vunpack.c.l.b16 %v678
    %v718 = vunpack.c.l.b16 %v679
    %v719 = vunpack.c.l.b16 %v680
    %v720 = vunpack.c.l.b16 %v681
    %v721 = vunpack.c.l.b16 %v682
    %v722 = vunpack.c.l.b16 %v683
    %v723 = vunpack.c.l.b16 %v684
    %v724 = vunpack.c.l.b16 %v685
    %v725 = vunpack.c.l.b16 %v686
    %v726 = vunpack.c.l.b16 %v687
    %v727 = vunpack.c.l.b16 %v688
    %v728 = vpack.c.b16 %v713, %v712
    %v729 = vpack.c.b16 %v715, %v714
    %v730 = vpack.c.b16 %v717, %v716
    %v731 = vpack.c.b16 %v719, %v718
    %v732 = vpack.c.b16 %v721, %v720
    %v733 = vpack.c.b16 %v723, %v722
    %v734 = vpack.c.b16 %v725, %v724
    %v735 = vpack.c.b16 %v727, %v726
    %744 = vmatprep.subr.bf16.mxu0 0
    %745 = vmatpush1.bf16.msra.mxu0 %v735
    %746 = vmatprep.subr.bf16.mxu0 0
    %747 = vmatpush1.bf16.msra.mxu0 %v734
    %748 = vmatprep.subr.bf16.mxu0 0
    %749 = vmatpush1.bf16.msra.mxu0 %v733
    %750 = vmatprep.subr.bf16.mxu0 0
    %751 = vmatpush1.bf16.msra.mxu0 %v732
    %752 = vmatprep.subr.bf16.mxu0 0
    %753 = vmatpush1.bf16.msra.mxu0 %v731
    %754 = vmatprep.subr.bf16.mxu0 0
    %755 = vmatpush1.bf16.msra.mxu0 %v730
    %756 = vmatprep.subr.bf16.mxu0 0
    %757 = vmatpush1.bf16.msra.mxu0 %v729
    %758 = vmatprep.subr.bf16.mxu0 0
    %759 = vmatpush1.bf16.msra.mxu0 %v728
    %760 = vmatprep.subr.bf16.mxu0 0
    %761 = vmatpush2.bf16.msra.mxu0 0
    %762 = vmatprep.subr.bf16.mxu0 0
    %763 = vmatpush2.bf16.msra.mxu0 0
    %764 = vmatprep.subr.bf16.mxu0 0
    %765 = vmatpush2.bf16.msra.mxu0 0
    %766 = vmatprep.subr.bf16.mxu0 0
    %767 = vmatpush2.bf16.msra.mxu0 0
    %768 = vmatprep.subr.bf16.mxu0 0
    %769 = vmatpush2.bf16.msra.mxu0 0
    %770 = vmatprep.subr.bf16.mxu0 0
    %771 = vmatpush2.bf16.msra.mxu0 0
    %772 = vmatprep.subr.bf16.mxu0 0
    %773 = vmatpush2.bf16.msra.mxu0 0
    %774 = vmatprep.subr.bf16.mxu0 0
    %775 = vmatpush2.bf16.msra.mxu0 0
    %776 = vmatprep.mubr.bf16.mxu0 0
    %777 = vmatmul.mubr.bf16.gmra.mxu0 %v672
    %v778 = vpop.f32.mrf.mxu0
    %v779 = vadd.f32 %v694, %v778
    %v780 = vpop.f32.mrf.mxu0
    %v781 = vpop.f32.mrf.mxu0
    %v782 = vpop.f32.mrf.mxu0
    %783 = vdwg.mxu0
    %784 = vst [vmem:[#allocation20 + $0x20] sm:$0xff] %v779
    %v785 = vpack.c.bf16 %v779, %v779
    %v786 = vld [vmem:[#allocation13] sm:$0xf]
    %v787 = vld [vmem:[#allocation13 + $0x4] sm:$0xf]
    %v788 = vld [vmem:[#allocation13 + $0x8] sm:$0xf]
    %v789 = vld [vmem:[#allocation13 + $0xc] sm:$0xf]
    %v790 = vld [vmem:[#allocation13 + $0x10] sm:$0xf]
    %v791 = vld [vmem:[#allocation13 + $0x14] sm:$0xf]
    %v792 = vld [vmem:[#allocation13 + $0x18] sm:$0xf]
    %v793 = vld [vmem:[#allocation13 + $0x1c] sm:$0xf]
    %v794 = vld [vmem:[#allocation13 + $0x20] sm:$0xf]
    %v795 = vld [vmem:[#allocation13 + $0x24] sm:$0xf]
    %v796 = vld [vmem:[#allocation13 + $0x28] sm:$0xf]
    %v797 = vld [vmem:[#allocation13 + $0x2c] sm:$0xf]
    %v798 = vld [vmem:[#allocation13 + $0x30] sm:$0xf]
    %v799 = vld [vmem:[#allocation13 + $0x34] sm:$0xf]
    %v800 = vld [vmem:[#allocation13 + $0x38] sm:$0xf]
    %v801 = vld [vmem:[#allocation13 + $0x3c] sm:$0xf]
    %v802 = vld [vmem:[%s16] sm:$0x1]
    %v804 = vlaneseq
    %v805 = vshrl.u32 %v804, 7
    %v806 = vsub.s32 0, %v805
    %v807 = vrot.slane %v802, %v806
    %v825 = vunpack.c.l.b16 %v786
    %v826 = vunpack.c.l.b16 %v787
    %v827 = vunpack.c.l.b16 %v788
    %v828 = vunpack.c.l.b16 %v789
    %v829 = vunpack.c.l.b16 %v790
    %v830 = vunpack.c.l.b16 %v791
    %v831 = vunpack.c.l.b16 %v792
    %v832 = vunpack.c.l.b16 %v793
    %v833 = vunpack.c.l.b16 %v794
    %v834 = vunpack.c.l.b16 %v795
    %v835 = vunpack.c.l.b16 %v796
    %v836 = vunpack.c.l.b16 %v797
    %v837 = vunpack.c.l.b16 %v798
    %v838 = vunpack.c.l.b16 %v799
    %v839 = vunpack.c.l.b16 %v800
    %v840 = vunpack.c.l.b16 %v801
    %v841 = vpack.c.b16 %v826, %v825
    %v842 = vpack.c.b16 %v828, %v827
    %v843 = vpack.c.b16 %v830, %v829
    %v844 = vpack.c.b16 %v832, %v831
    %v845 = vpack.c.b16 %v834, %v833
    %v846 = vpack.c.b16 %v836, %v835
    %v847 = vpack.c.b16 %v838, %v837
    %v848 = vpack.c.b16 %v840, %v839
    %857 = vmatprep.subr.bf16.mxu0 0
    %858 = vmatpush1.bf16.msra.mxu0 %v848
    %859 = vmatprep.subr.bf16.mxu0 0
    %860 = vmatpush1.bf16.msra.mxu0 %v847
    %861 = vmatprep.subr.bf16.mxu0 0
    %862 = vmatpush1.bf16.msra.mxu0 %v846
    %863 = vmatprep.subr.bf16.mxu0 0
    %864 = vmatpush1.bf16.msra.mxu0 %v845
    %865 = vmatprep.subr.bf16.mxu0 0
    %866 = vmatpush1.bf16.msra.mxu0 %v844
    %867 = vmatprep.subr.bf16.mxu0 0
    %868 = vmatpush1.bf16.msra.mxu0 %v843
    %869 = vmatprep.subr.bf16.mxu0 0
    %870 = vmatpush1.bf16.msra.mxu0 %v842
    %871 = vmatprep.subr.bf16.mxu0 0
    %872 = vmatpush1.bf16.msra.mxu0 %v841
    %873 = vmatprep.subr.bf16.mxu0 0
    %874 = vmatpush2.bf16.msra.mxu0 0
    %875 = vmatprep.subr.bf16.mxu0 0
    %876 = vmatpush2.bf16.msra.mxu0 0
    %877 = vmatprep.subr.bf16.mxu0 0
    %878 = vmatpush2.bf16.msra.mxu0 0
    %879 = vmatprep.subr.bf16.mxu0 0
    %880 = vmatpush2.bf16.msra.mxu0 0
    %881 = vmatprep.subr.bf16.mxu0 0
    %882 = vmatpush2.bf16.msra.mxu0 0
    %883 = vmatprep.subr.bf16.mxu0 0
    %884 = vmatpush2.bf16.msra.mxu0 0
    %885 = vmatprep.subr.bf16.mxu0 0
    %886 = vmatpush2.bf16.msra.mxu0 0
    %887 = vmatprep.subr.bf16.mxu0 0
    %888 = vmatpush2.bf16.msra.mxu0 0
    %889 = vmatprep.mubr.bf16.mxu0 0
    %890 = vmatmul.mubr.bf16.gmra.mxu0 %v785
    %v891 = vpop.f32.mrf.mxu0
    %v892 = vadd.f32 %v807, %v891
    %v893 = vpop.f32.mrf.mxu0
    %v894 = vpop.f32.mrf.mxu0
    %v895 = vpop.f32.mrf.mxu0
    %896 = vdwg.mxu0
    %v897 = vmax.f32 %v892, 0.0
    %v898 = vpack.c.bf16 %v897, %v897
    %v899 = vld [vmem:[#allocation14] sm:$0xf]
    %v900 = vld [vmem:[#allocation14 + $0x4] sm:$0xf]
    %v901 = vld [vmem:[#allocation14 + $0x8] sm:$0xf]
    %v902 = vld [vmem:[#allocation14 + $0xc] sm:$0xf]
    %v903 = vld [vmem:[#allocation14 + $0x10] sm:$0xf]
    %v904 = vld [vmem:[#allocation14 + $0x14] sm:$0xf]
    %v905 = vld [vmem:[#allocation14 + $0x18] sm:$0xf]
    %v906 = vld [vmem:[#allocation14 + $0x1c] sm:$0xf]
    %v907 = vld [vmem:[#allocation14 + $0x20] sm:$0xf]
    %v908 = vld [vmem:[#allocation14 + $0x24] sm:$0xf]
    %v909 = vld [vmem:[#allocation14 + $0x28] sm:$0xf]
    %v910 = vld [vmem:[#allocation14 + $0x2c] sm:$0xf]
    %v911 = vld [vmem:[#allocation14 + $0x30] sm:$0xf]
    %v912 = vld [vmem:[#allocation14 + $0x34] sm:$0xf]
    %v913 = vld [vmem:[#allocation14 + $0x38] sm:$0xf]
    %v914 = vld [vmem:[#allocation14 + $0x3c] sm:$0xf]
    %v915 = vld [vmem:[%s17] sm:$0x1]
    %v917 = vlaneseq
    %v918 = vshrl.u32 %v917, 7
    %v919 = vsub.s32 0, %v918
    %v920 = vrot.slane %v915, %v919
    %v938 = vunpack.c.l.b16 %v899
    %v939 = vunpack.c.l.b16 %v900
    %v940 = vunpack.c.l.b16 %v901
    %v941 = vunpack.c.l.b16 %v902
    %v942 = vunpack.c.l.b16 %v903
    %v943 = vunpack.c.l.b16 %v904
    %v944 = vunpack.c.l.b16 %v905
    %v945 = vunpack.c.l.b16 %v906
    %v946 = vunpack.c.l.b16 %v907
    %v947 = vunpack.c.l.b16 %v908
    %v948 = vunpack.c.l.b16 %v909
    %v949 = vunpack.c.l.b16 %v910
    %v950 = vunpack.c.l.b16 %v911
    %v951 = vunpack.c.l.b16 %v912
    %v952 = vunpack.c.l.b16 %v913
    %v953 = vunpack.c.l.b16 %v914
    %v954 = vpack.c.b16 %v939, %v938
    %v955 = vpack.c.b16 %v941, %v940
    %v956 = vpack.c.b16 %v943, %v942
    %v957 = vpack.c.b16 %v945, %v944
    %v958 = vpack.c.b16 %v947, %v946
    %v959 = vpack.c.b16 %v949, %v948
    %v960 = vpack.c.b16 %v951, %v950
    %v961 = vpack.c.b16 %v953, %v952
    %970 = vmatprep.subr.bf16.mxu0 0
    %971 = vmatpush1.bf16.msra.mxu0 %v961
    %972 = vmatprep.subr.bf16.mxu0 0
    %973 = vmatpush1.bf16.msra.mxu0 %v960
    %974 = vmatprep.subr.bf16.mxu0 0
    %975 = vmatpush1.bf16.msra.mxu0 %v959
    %976 = vmatprep.subr.bf16.mxu0 0
    %977 = vmatpush1.bf16.msra.mxu0 %v958
    %978 = vmatprep.subr.bf16.mxu0 0
    %979 = vmatpush1.bf16.msra.mxu0 %v957
    %980 = vmatprep.subr.bf16.mxu0 0
    %981 = vmatpush1.bf16.msra.mxu0 %v956
    %982 = vmatprep.subr.bf16.mxu0 0
    %983 = vmatpush1.bf16.msra.mxu0 %v955
    %984 = vmatprep.subr.bf16.mxu0 0
    %985 = vmatpush1.bf16.msra.mxu0 %v954
    %986 = vmatprep.subr.bf16.mxu0 0
    %987 = vmatpush2.bf16.msra.mxu0 0
    %988 = vmatprep.subr.bf16.mxu0 0
    %989 = vmatpush2.bf16.msra.mxu0 0
    %990 = vmatprep.subr.bf16.mxu0 0
    %991 = vmatpush2.bf16.msra.mxu0 0
    %992 = vmatprep.subr.bf16.mxu0 0
    %993 = vmatpush2.bf16.msra.mxu0 0
    %994 = vmatprep.subr.bf16.mxu0 0
    %995 = vmatpush2.bf16.msra.mxu0 0
    %996 = vmatprep.subr.bf16.mxu0 0
    %997 = vmatpush2.bf16.msra.mxu0 0
    %998 = vmatprep.subr.bf16.mxu0 0
    %999 = vmatpush2.bf16.msra.mxu0 0
    %1000 = vmatprep.subr.bf16.mxu0 0
    %1001 = vmatpush2.bf16.msra.mxu0 0
    %1002 = vmatprep.mubr.bf16.mxu0 0
    %1003 = vmatmul.mubr.bf16.gmra.mxu0 %v898
    %v1004 = vpop.f32.mrf.mxu0
    %v1005 = vadd.f32 %v920, %v1004
    %v1006 = vpop.f32.mrf.mxu0
    %v1007 = vpop.f32.mrf.mxu0
    %v1008 = vpop.f32.mrf.mxu0
    %1009 = vdwg.mxu0
    %v1010 = vmax.f32 %v1005, 0.0
    %v1011 = vpack.c.bf16 %v1010, %v1010
    %v1012 = vld [vmem:[#allocation16] sm:$0xf]
    %v1013 = vld [vmem:[#allocation16 + $0x4] sm:$0xf]
    %v1014 = vld [vmem:[#allocation16 + $0x8] sm:$0xf]
    %v1015 = vld [vmem:[#allocation16 + $0xc] sm:$0xf]
    %v1016 = vld [vmem:[#allocation16 + $0x10] sm:$0xf]
    %v1017 = vld [vmem:[#allocation16 + $0x14] sm:$0xf]
    %v1018 = vld [vmem:[#allocation16 + $0x18] sm:$0xf]
    %v1019 = vld [vmem:[#allocation16 + $0x1c] sm:$0xf]
    %v1020 = vld [vmem:[#allocation16 + $0x20] sm:$0xf]
    %v1021 = vld [vmem:[#allocation16 + $0x24] sm:$0xf]
    %v1022 = vld [vmem:[#allocation16 + $0x28] sm:$0xf]
    %v1023 = vld [vmem:[#allocation16 + $0x2c] sm:$0xf]
    %v1024 = vld [vmem:[#allocation16 + $0x30] sm:$0xf]
    %v1025 = vld [vmem:[#allocation16 + $0x34] sm:$0xf]
    %v1026 = vld [vmem:[#allocation16 + $0x38] sm:$0xf]
    %v1027 = vld [vmem:[#allocation16 + $0x3c] sm:$0xf]
    %v1028 = vld [vmem:[%s18] sm:$0x1]
    %v1030 = vlaneseq
    %v1031 = vshrl.u32 %v1030, 7
    %v1032 = vsub.s32 0, %v1031
    %v1033 = vrot.slane %v1028, %v1032
    %v1051 = vunpack.c.l.b16 %v1012
    %v1052 = vunpack.c.l.b16 %v1013
    %v1053 = vunpack.c.l.b16 %v1014
    %v1054 = vunpack.c.l.b16 %v1015
    %v1055 = vunpack.c.l.b16 %v1016
    %v1056 = vunpack.c.l.b16 %v1017
    %v1057 = vunpack.c.l.b16 %v1018
    %v1058 = vunpack.c.l.b16 %v1019
    %v1059 = vunpack.c.l.b16 %v1020
    %v1060 = vunpack.c.l.b16 %v1021
    %v1061 = vunpack.c.l.b16 %v1022
    %v1062 = vunpack.c.l.b16 %v1023
    %v1063 = vunpack.c.l.b16 %v1024
    %v1064 = vunpack.c.l.b16 %v1025
    %v1065 = vunpack.c.l.b16 %v1026
    %v1066 = vunpack.c.l.b16 %v1027
    %v1067 = vpack.c.b16 %v1052, %v1051
    %v1068 = vpack.c.b16 %v1054, %v1053
    %v1069 = vpack.c.b16 %v1056, %v1055
    %v1070 = vpack.c.b16 %v1058, %v1057
    %v1071 = vpack.c.b16 %v1060, %v1059
    %v1072 = vpack.c.b16 %v1062, %v1061
    %v1073 = vpack.c.b16 %v1064, %v1063
    %v1074 = vpack.c.b16 %v1066, %v1065
    %1083 = vmatprep.subr.bf16.mxu0 0
    %1084 = vmatpush1.bf16.msra.mxu0 %v1074
    %1085 = vmatprep.subr.bf16.mxu0 0
    %1086 = vmatpush1.bf16.msra.mxu0 %v1073
    %1087 = vmatprep.subr.bf16.mxu0 0
    %1088 = vmatpush1.bf16.msra.mxu0 %v1072
    %1089 = vmatprep.subr.bf16.mxu0 0
    %1090 = vmatpush1.bf16.msra.mxu0 %v1071
    %1091 = vmatprep.subr.bf16.mxu0 0
    %1092 = vmatpush1.bf16.msra.mxu0 %v1070
    %1093 = vmatprep.subr.bf16.mxu0 0
    %1094 = vmatpush1.bf16.msra.mxu0 %v1069
    %1095 = vmatprep.subr.bf16.mxu0 0
    %1096 = vmatpush1.bf16.msra.mxu0 %v1068
    %1097 = vmatprep.subr.bf16.mxu0 0
    %1098 = vmatpush1.bf16.msra.mxu0 %v1067
    %1099 = vmatprep.subr.bf16.mxu0 0
    %1100 = vmatpush2.bf16.msra.mxu0 0
    %1101 = vmatprep.subr.bf16.mxu0 0
    %1102 = vmatpush2.bf16.msra.mxu0 0
    %1103 = vmatprep.subr.bf16.mxu0 0
    %1104 = vmatpush2.bf16.msra.mxu0 0
    %1105 = vmatprep.subr.bf16.mxu0 0
    %1106 = vmatpush2.bf16.msra.mxu0 0
    %1107 = vmatprep.subr.bf16.mxu0 0
    %1108 = vmatpush2.bf16.msra.mxu0 0
    %1109 = vmatprep.subr.bf16.mxu0 0
    %1110 = vmatpush2.bf16.msra.mxu0 0
    %1111 = vmatprep.subr.bf16.mxu0 0
    %1112 = vmatpush2.bf16.msra.mxu0 0
    %1113 = vmatprep.subr.bf16.mxu0 0
    %1114 = vmatpush2.bf16.msra.mxu0 0
    %1115 = vmatprep.mubr.bf16.mxu0 0
    %1116 = vmatmul.mubr.bf16.gmra.mxu0 %v1011
    %v1117 = vpop.f32.mrf.mxu0
    %v1118 = vadd.f32 %v1033, %v1117
    %v1119 = vpop.f32.mrf.mxu0
    %v1120 = vpop.f32.mrf.mxu0
    %v1121 = vpop.f32.mrf.mxu0
    %1122 = vdwg.mxu0
    %v1123 = vmax.f32 %v1118, 0.0
    %v1124 = vpack.c.bf16 %v1123, %v1123
    %v1125 = vld [vmem:[#allocation17] sm:$0xf]
    %v1126 = vld [vmem:[#allocation17 + $0x4] sm:$0xf]
    %v1127 = vld [vmem:[#allocation17 + $0x8] sm:$0xf]
    %v1128 = vld [vmem:[#allocation17 + $0xc] sm:$0xf]
    %v1129 = vld [vmem:[#allocation17 + $0x10] sm:$0xf]
    %v1130 = vld [vmem:[#allocation17 + $0x14] sm:$0xf]
    %v1131 = vld [vmem:[#allocation17 + $0x18] sm:$0xf]
    %v1132 = vld [vmem:[#allocation17 + $0x1c] sm:$0xf]
    %v1133 = vld [vmem:[#allocation17 + $0x20] sm:$0xf]
    %v1134 = vld [vmem:[#allocation17 + $0x24] sm:$0xf]
    %v1135 = vld [vmem:[#allocation17 + $0x28] sm:$0xf]
    %v1136 = vld [vmem:[#allocation17 + $0x2c] sm:$0xf]
    %v1137 = vld [vmem:[#allocation17 + $0x30] sm:$0xf]
    %v1138 = vld [vmem:[#allocation17 + $0x34] sm:$0xf]
    %v1139 = vld [vmem:[#allocation17 + $0x38] sm:$0xf]
    %v1140 = vld [vmem:[#allocation17 + $0x3c] sm:$0xf]
    %v1141 = vld [vmem:[%s19] sm:$0x1]
    %v1143 = vlaneseq
    %v1144 = vshrl.u32 %v1143, 7
    %v1145 = vsub.s32 0, %v1144
    %v1146 = vrot.slane %v1141, %v1145
    %v1164 = vunpack.c.l.b16 %v1125
    %v1165 = vunpack.c.l.b16 %v1126
    %v1166 = vunpack.c.l.b16 %v1127
    %v1167 = vunpack.c.l.b16 %v1128
    %v1168 = vunpack.c.l.b16 %v1129
    %v1169 = vunpack.c.l.b16 %v1130
    %v1170 = vunpack.c.l.b16 %v1131
    %v1171 = vunpack.c.l.b16 %v1132
    %v1172 = vunpack.c.l.b16 %v1133
    %v1173 = vunpack.c.l.b16 %v1134
    %v1174 = vunpack.c.l.b16 %v1135
    %v1175 = vunpack.c.l.b16 %v1136
    %v1176 = vunpack.c.l.b16 %v1137
    %v1177 = vunpack.c.l.b16 %v1138
    %v1178 = vunpack.c.l.b16 %v1139
    %v1179 = vunpack.c.l.b16 %v1140
    %v1180 = vpack.c.b16 %v1165, %v1164
    %v1181 = vpack.c.b16 %v1167, %v1166
    %v1182 = vpack.c.b16 %v1169, %v1168
    %v1183 = vpack.c.b16 %v1171, %v1170
    %v1184 = vpack.c.b16 %v1173, %v1172
    %v1185 = vpack.c.b16 %v1175, %v1174
    %v1186 = vpack.c.b16 %v1177, %v1176
    %v1187 = vpack.c.b16 %v1179, %v1178
    %1196 = vmatprep.subr.bf16.mxu0 0
    %1197 = vmatpush1.bf16.msra.mxu0 %v1187
    %1198 = vmatprep.subr.bf16.mxu0 0
    %1199 = vmatpush1.bf16.msra.mxu0 %v1186
    %1200 = vmatprep.subr.bf16.mxu0 0
    %1201 = vmatpush1.bf16.msra.mxu0 %v1185
    %1202 = vmatprep.subr.bf16.mxu0 0
    %1203 = vmatpush1.bf16.msra.mxu0 %v1184
    %1204 = vmatprep.subr.bf16.mxu0 0
    %1205 = vmatpush1.bf16.msra.mxu0 %v1183
    %1206 = vmatprep.subr.bf16.mxu0 0
    %1207 = vmatpush1.bf16.msra.mxu0 %v1182
    %1208 = vmatprep.subr.bf16.mxu0 0
    %1209 = vmatpush1.bf16.msra.mxu0 %v1181
    %1210 = vmatprep.subr.bf16.mxu0 0
    %1211 = vmatpush1.bf16.msra.mxu0 %v1180
    %1212 = vmatprep.subr.bf16.mxu0 0
    %1213 = vmatpush2.bf16.msra.mxu0 0
    %1214 = vmatprep.subr.bf16.mxu0 0
    %1215 = vmatpush2.bf16.msra.mxu0 0
    %1216 = vmatprep.subr.bf16.mxu0 0
    %1217 = vmatpush2.bf16.msra.mxu0 0
    %1218 = vmatprep.subr.bf16.mxu0 0
    %1219 = vmatpush2.bf16.msra.mxu0 0
    %1220 = vmatprep.subr.bf16.mxu0 0
    %1221 = vmatpush2.bf16.msra.mxu0 0
    %1222 = vmatprep.subr.bf16.mxu0 0
    %1223 = vmatpush2.bf16.msra.mxu0 0
    %1224 = vmatprep.subr.bf16.mxu0 0
    %1225 = vmatpush2.bf16.msra.mxu0 0
    %1226 = vmatprep.subr.bf16.mxu0 0
    %1227 = vmatpush2.bf16.msra.mxu0 0
    %1228 = vmatprep.mubr.bf16.mxu0 0
    %1229 = vmatmul.mubr.bf16.gmra.mxu0 %v1124
    %v1230 = vpop.f32.mrf.mxu0
    %v1231 = vadd.f32 %v1146, %v1230
    %v1232 = vpop.f32.mrf.mxu0
    %v1233 = vpop.f32.mrf.mxu0
    %v1234 = vpop.f32.mrf.mxu0
    %1235 = vdwg.mxu0
    %v1236 = vmax.f32 %v1231, 0.0
    %v1237 = vpack.c.bf16 %v1236, %v1236
    %v1238 = vld [vmem:[#allocation19] sm:$0xf]
    %v1239 = vld [vmem:[#allocation19 + $0x4] sm:$0xf]
    %v1240 = vld [vmem:[#allocation19 + $0x8] sm:$0xf]
    %v1241 = vld [vmem:[#allocation19 + $0xc] sm:$0xf]
    %v1242 = vld [vmem:[#allocation19 + $0x10] sm:$0xf]
    %v1243 = vld [vmem:[#allocation19 + $0x14] sm:$0xf]
    %v1244 = vld [vmem:[#allocation19 + $0x18] sm:$0xf]
    %v1245 = vld [vmem:[#allocation19 + $0x1c] sm:$0xf]
    %v1246 = vld [vmem:[#allocation19 + $0x20] sm:$0xf]
    %v1247 = vld [vmem:[#allocation19 + $0x24] sm:$0xf]
    %v1248 = vld [vmem:[#allocation19 + $0x28] sm:$0xf]
    %v1249 = vld [vmem:[#allocation19 + $0x2c] sm:$0xf]
    %v1250 = vld [vmem:[#allocation19 + $0x30] sm:$0xf]
    %v1251 = vld [vmem:[#allocation19 + $0x34] sm:$0xf]
    %v1252 = vld [vmem:[#allocation19 + $0x38] sm:$0xf]
    %v1253 = vld [vmem:[#allocation19 + $0x3c] sm:$0xf]
    %v1254 = vld [vmem:[%s20] sm:$0x1]
    %v1256 = vlaneseq
    %v1257 = vshrl.u32 %v1256, 7
    %v1258 = vsub.s32 0, %v1257
    %v1259 = vrot.slane %v1254, %v1258
    %v1277 = vunpack.c.l.b16 %v1238
    %v1278 = vunpack.c.l.b16 %v1239
    %v1279 = vunpack.c.l.b16 %v1240
    %v1280 = vunpack.c.l.b16 %v1241
    %v1281 = vunpack.c.l.b16 %v1242
    %v1282 = vunpack.c.l.b16 %v1243
    %v1283 = vunpack.c.l.b16 %v1244
    %v1284 = vunpack.c.l.b16 %v1245
    %v1285 = vunpack.c.l.b16 %v1246
    %v1286 = vunpack.c.l.b16 %v1247
    %v1287 = vunpack.c.l.b16 %v1248
    %v1288 = vunpack.c.l.b16 %v1249
    %v1289 = vunpack.c.l.b16 %v1250
    %v1290 = vunpack.c.l.b16 %v1251
    %v1291 = vunpack.c.l.b16 %v1252
    %v1292 = vunpack.c.l.b16 %v1253
    %v1293 = vpack.c.b16 %v1278, %v1277
    %v1294 = vpack.c.b16 %v1280, %v1279
    %v1295 = vpack.c.b16 %v1282, %v1281
    %v1296 = vpack.c.b16 %v1284, %v1283
    %v1297 = vpack.c.b16 %v1286, %v1285
    %v1298 = vpack.c.b16 %v1288, %v1287
    %v1299 = vpack.c.b16 %v1290, %v1289
    %v1300 = vpack.c.b16 %v1292, %v1291
    %1309 = vmatprep.subr.bf16.mxu0 0
    %1310 = vmatpush1.bf16.msra.mxu0 %v1300
    %1311 = vmatprep.subr.bf16.mxu0 0
    %1312 = vmatpush1.bf16.msra.mxu0 %v1299
    %1313 = vmatprep.subr.bf16.mxu0 0
    %1314 = vmatpush1.bf16.msra.mxu0 %v1298
    %1315 = vmatprep.subr.bf16.mxu0 0
    %1316 = vmatpush1.bf16.msra.mxu0 %v1297
    %1317 = vmatprep.subr.bf16.mxu0 0
    %1318 = vmatpush1.bf16.msra.mxu0 %v1296
    %1319 = vmatprep.subr.bf16.mxu0 0
    %1320 = vmatpush1.bf16.msra.mxu0 %v1295
    %1321 = vmatprep.subr.bf16.mxu0 0
    %1322 = vmatpush1.bf16.msra.mxu0 %v1294
    %1323 = vmatprep.subr.bf16.mxu0 0
    %1324 = vmatpush1.bf16.msra.mxu0 %v1293
    %1325 = vmatprep.subr.bf16.mxu0 0
    %1326 = vmatpush2.bf16.msra.mxu0 0
    %1327 = vmatprep.subr.bf16.mxu0 0
    %1328 = vmatpush2.bf16.msra.mxu0 0
    %1329 = vmatprep.subr.bf16.mxu0 0
    %1330 = vmatpush2.bf16.msra.mxu0 0
    %1331 = vmatprep.subr.bf16.mxu0 0
    %1332 = vmatpush2.bf16.msra.mxu0 0
    %1333 = vmatprep.subr.bf16.mxu0 0
    %1334 = vmatpush2.bf16.msra.mxu0 0
    %1335 = vmatprep.subr.bf16.mxu0 0
    %1336 = vmatpush2.bf16.msra.mxu0 0
    %1337 = vmatprep.subr.bf16.mxu0 0
    %1338 = vmatpush2.bf16.msra.mxu0 0
    %1339 = vmatprep.subr.bf16.mxu0 0
    %1340 = vmatpush2.bf16.msra.mxu0 0
    %1341 = vmatprep.mubr.bf16.mxu0 0
    %1342 = vmatmul.mubr.bf16.gmra.mxu0 %v1237
    %v1343 = vpop.f32.mrf.mxu0
    %v1344 = vadd.f32 %v1259, %v1343
    %v1345 = vpop.f32.mrf.mxu0
    %v1346 = vpop.f32.mrf.mxu0
    %v1347 = vpop.f32.mrf.mxu0
    %1348 = vdwg.mxu0
    %1349 = vst [vmem:[#allocation20 + $0x28] sm:$0xff] %v1344
    // Predicated region
    $region130: #{tpu_custom_call.1} parent=1 // pred_check
      _
    $region131: #{tpu_custom_call.1} parent=1 // pred_check_branch
      %1351 = sbr.rel (0) target = $region133
    $region132: #{tpu_custom_call.1} parent=1 // pred_region
      %s1353 = ssub.s32 768, 768
      %1354 = vsyncadd [#allocation4], %s1353
      %s1356 = sshll.u32 [#allocation20], 4
      %s1357 = int_to_ptr.vmem [resolvable:$true] %s1356
      %1359 = dma.vmem_to_hbm [thread:$0]  %s1357, 768, %s21, [#allocation4]
    $region133: #{tpu_custom_call.1} parent=1 // pred_fallthru
      _
    // Predicated region
    $region134: #{tpu_custom_call.1} parent=1 // pred_check
      _
    $region135: #{tpu_custom_call.1} parent=1 // pred_check_branch
      %1361 = sbr.rel (0) target = $region137
    $region136: #{tpu_custom_call.1} parent=1 // pred_region
      %1362 = dma.done [#allocation4], 768
    $region137: #{tpu_custom_call.1} parent=1 // pred_fallthru
      _
    %1363 = vsyncpa [#allocation3], 1
    %1364 = vsyncpa [#allocation6], 1
    %1365 = vsyncpa [#allocation9], 1
    %1366 = vsyncpa [#allocation12], 1
    %1367 = vsyncpa [#allocation15], 1
    %1368 = vsyncpa [#allocation18], 1
    %1369 = vsyncpa [#allocation4], 1

// kernel: tpu_custom_call.1
$region0: #{tpu_custom_call.1}
  #allocation0 [shape = 'u32[]', space=smem, size = 0x4, offset = 0x4, fixed_abs, tag = 'smem constant byte address 0x4 - core index']
  #allocation1 [shape = 'u32[144,128]{1,0:T(1,128)}', space=vmem, size = 0x12000, scoped, tag = 'internal scratch']
  %s0 = inlined_call_operand.hbm [shape: bf16[8,128], index: 0, kind: input, shape index: {}]
  %s1 = inlined_call_operand.hbm [shape: bf16[128,128], index: 1, kind: input, shape index: {}]
  %s2 = inlined_call_operand.hbm [shape: bf16[128,128], index: 2, kind: input, shape index: {}]
  %s3 = inlined_call_operand.hbm [shape: bf16[128,128], index: 3, kind: input, shape index: {}]
  %s4 = inlined_call_operand.hbm [shape: bf16[128,128], index: 4, kind: input, shape index: {}]
  %s5 = inlined_call_operand.hbm [shape: bf16[128,128], index: 5, kind: input, shape index: {}]
  %s6 = inlined_call_operand.hbm [shape: bf16[128,128], index: 6, kind: input, shape index: {}]
  %s7 = inlined_call_operand.hbm [shape: bf16[128,128], index: 7, kind: input, shape index: {}]
  %s8 = inlined_call_operand.hbm [shape: bf16[128,128], index: 8, kind: input, shape index: {}]
  %s9 = inlined_call_operand.hbm [shape: bf16[128,128], index: 9, kind: input, shape index: {}]
  %s10 = inlined_call_operand.hbm [shape: bf16[128,128], index: 10, kind: input, shape index: {}]
  %s11 = inlined_call_operand.vmem [shape: f32[1,128], index: 11, kind: input, shape index: {}]
  %s12 = inlined_call_operand.vmem [shape: f32[1,128], index: 12, kind: input, shape index: {}]
  %s13 = inlined_call_operand.vmem [shape: f32[1,128], index: 13, kind: input, shape index: {}]
  %s14 = inlined_call_operand.vmem [shape: f32[1,128], index: 14, kind: input, shape index: {}]
  %s15 = inlined_call_operand.vmem [shape: f32[1,128], index: 15, kind: input, shape index: {}]
  %s16 = inlined_call_operand.vmem [shape: f32[1,128], index: 16, kind: input, shape index: {}]
  %s17 = inlined_call_operand.vmem [shape: f32[1,128], index: 17, kind: input, shape index: {}]
  %s18 = inlined_call_operand.vmem [shape: f32[1,128], index: 18, kind: input, shape index: {}]
  %s19 = inlined_call_operand.vmem [shape: f32[1,128], index: 19, kind: input, shape index: {}]
  %s20 = inlined_call_operand.vmem [shape: f32[1,128], index: 20, kind: input, shape index: {}]
  %s21 = inlined_call_operand.hbm [shape: f32[8,768], index: 21, kind: output, shape index: {}]
  %s22 = sld [smem:[#allocation0]]
  $region138: #{tpu_custom_call.1} parent=0
    _
  %s24 = ssub.s32 1, %s22
  %s25 = scalar_select 0, %s24, %s22
  $region1: #{tpu_custom_call.1} parent=0
    #allocation2 [shape = 'u8[2048]{0}', space=vmem, size = 0x800, scoped, tag = 'input window, operand 0, single buffered']
    #allocation3 [shape = 's32[1]{0}', space=sflag, size = 0x4, scoped, tag = 'scoped memory for tpu_custom_call.1']
    #allocation4 [shape = 's32[1]{0}', space=sflag, size = 0x4, scoped, tag = 'scoped memory for tpu_custom_call.1']
    #allocation5 [shape = 'u8[32768]{0}', space=vmem, size = 0x8000, scoped, tag = 'input window, operand 1, single buffered']
    #allocation6 [shape = 's32[1]{0}', space=sflag, size = 0x4, scoped, tag = 'scoped memory for tpu_custom_call.1']
    #allocation7 [shape = 'u8[32768]{0}', space=vmem, size = 0x8000, scoped, tag = 'input window, operand 2, single buffered']
    #allocation8 [shape = 'u8[32768]{0}', space=vmem, size = 0x8000, scoped, tag = 'input window, operand 3, single buffered']
    #allocation9 [shape = 's32[1]{0}', space=sflag, size = 0x4, scoped, tag = 'scoped memory for tpu_custom_call.1']
    #allocation10 [shape = 'u8[32768]{0}', space=vmem, size = 0x8000, scoped, tag = 'input window, operand 4, single buffered']
    #allocation11 [shape = 'u8[32768]{0}', space=vmem, size = 0x8000, scoped, tag = 'input window, operand 5, single buffered']
    #allocation12 [shape = 's32[1]{0}', space=sflag, size = 0x4, scoped, tag = 'scoped memory for tpu_custom_call.1']
    #allocation13 [shape = 'u8[32768]{0}', space=vmem, size = 0x8000, scoped, tag = 'input window, operand 6, single buffered']
    #allocation14 [shape = 'u8[32768]{0}', space=vmem, size = 0x8000, scoped, tag = 'input window, operand 7, single buffered']
    #allocation15 [shape = 's32[1]{0}', space=sflag, size = 0x4, scoped, tag = 'scoped memory for tpu_custom_call.1']
    #allocation16 [shape = 'u8[32768]{0}', space=vmem, size = 0x8000, scoped, tag = 'input window, operand 8, single buffered']
    #allocation17 [shape = 'u8[32768]{0}', space=vmem, size = 0x8000, scoped, tag = 'input window, operand 9, single buffered']
    #allocation18 [shape = 's32[1]{0}', space=sflag, size = 0x4, scoped, tag = 'scoped memory for tpu_custom_call.1']
    #allocation19 [shape = 'u8[32768]{0}', space=vmem, size = 0x8000, scoped, tag = 'input window, operand 10, single buffered']
    #allocation20 [shape = 'u8[24576]{0}', space=vmem, size = 0x6000, scoped, tag = 'output window, operand 0, single buffered']
    %26 = vsyncpa [#allocation3], 0
    %27 = vsyncpa [#allocation6], 0
    %28 = vsyncpa [#allocation9], 0
    %29 = vsyncpa [#allocation12], 0
    %30 = vsyncpa [#allocation15], 0
    %31 = vsyncpa [#allocation18], 0
    %32 = vsyncpa [#allocation4], 0
    // Predicated region
    $region2: #{tpu_custom_call.1} parent=1 // pred_check
      _
    $region3: #{tpu_custom_call.1} parent=1 // pred_check_branch
      %34 = sbr.rel (0) target = $region5
    $region4: #{tpu_custom_call.1} parent=1 // pred_region
      %s36 = ssub.s32 64, 64
      %37 = vsyncadd [#allocation3], %s36
      %s39 = sshll.u32 [#allocation2], 4
      %s40 = int_to_ptr.vmem [resolvable:$true] %s39
      %42 = dma.hbm_to_vmem [thread:$0]  %s0, 64, %s40, [#allocation3]
    $region5: #{tpu_custom_call.1} parent=1 // pred_fallthru
      _
    // Predicated region
    $region6: #{tpu_custom_call.1} parent=1 // pred_check
      _
    $region7: #{tpu_custom_call.1} parent=1 // pred_check_branch
      %44 = sbr.rel (0) target = $region9
    $region8: #{tpu_custom_call.1} parent=1 // pred_region
      %s46 = ssub.s32 1024, 1024
      %47 = vsyncadd [#allocation6], %s46
      %s48 = sshll.u32 [#allocation5], 4
      %s49 = int_to_ptr.vmem [resolvable:$true] %s48
      %54 = dma.hbm_to_vmem [thread:$0]  %s1, 1024, %s49, [#allocation6], 64, 64, 4
    $region9: #{tpu_custom_call.1} parent=1 // pred_fallthru
      _
    // Predicated region
    $region10: #{tpu_custom_call.1} parent=1 // pred_check
      _
    $region11: #{tpu_custom_call.1} parent=1 // pred_check_branch
      %56 = sbr.rel (0) target = $region13
    $region12: #{tpu_custom_call.1} parent=1 // pred_region
      %s58 = ssub.s32 1024, 1024
      %59 = vsyncadd [#allocation6], %s58
      %s60 = sshll.u32 [#allocation7], 4
      %s61 = int_to_ptr.vmem [resolvable:$true] %s60
      %66 = dma.hbm_to_vmem [thread:$0]  %s2, 1024, %s61, [#allocation6], 64, 64, 4
    $region13: #{tpu_custom_call.1} parent=1 // pred_fallthru
      _
    // Predicated region
    $region14: #{tpu_custom_call.1} parent=1 // pred_check
      _
    $region15: #{tpu_custom_call.1} parent=1 // pred_check_branch
      %68 = sbr.rel (0) target = $region17
    $region16: #{tpu_custom_call.1} parent=1 // pred_region
      %s70 = ssub.s32 1024, 1024
      %71 = vsyncadd [#allocation9], %s70
      %s72 = sshll.u32 [#allocation8], 4
      %s73 = int_to_ptr.vmem [resolvable:$true] %s72
      %78 = dma.hbm_to_vmem [thread:$0]  %s3, 1024, %s73, [#allocation9], 64, 64, 4
    $region17: #{tpu_custom_call.1} parent=1 // pred_fallthru
      _
    // Predicated region
    $region18: #{tpu_custom_call.1} parent=1 // pred_check
      _
    $region19: #{tpu_custom_call.1} parent=1 // pred_check_branch
      %80 = sbr.rel (0) target = $region21
    $region20: #{tpu_custom_call.1} parent=1 // pred_region
      %s82 = ssub.s32 1024, 1024
      %83 = vsyncadd [#allocation9], %s82
      %s84 = sshll.u32 [#allocation10], 4
      %s85 = int_to_ptr.vmem [resolvable:$true] %s84
      %90 = dma.hbm_to_vmem [thread:$0]  %s4, 1024, %s85, [#allocation9], 64, 64, 4
    $region21: #{tpu_custom_call.1} parent=1 // pred_fallthru
      _
    // Predicated region
    $region22: #{tpu_custom_call.1} parent=1 // pred_check
      _
    $region23: #{tpu_custom_call.1} parent=1 // pred_check_branch
      %92 = sbr.rel (0) target = $region25
    $region24: #{tpu_custom_call.1} parent=1 // pred_region
      %s94 = ssub.s32 1024, 1024
      %95 = vsyncadd [#allocation12], %s94
      %s96 = sshll.u32 [#allocation11], 4
      %s97 = int_to_ptr.vmem [resolvable:$true] %s96
      %102 = dma.hbm_to_vmem [thread:$0]  %s5, 1024, %s97, [#allocation12], 64, 64, 4
    $region25: #{tpu_custom_call.1} parent=1 // pred_fallthru
      _
    // Predicated region
    $region26: #{tpu_custom_call.1} parent=1 // pred_check
      _
    $region27: #{tpu_custom_call.1} parent=1 // pred_check_branch
      %104 = sbr.rel (0) target = $region29
    $region28: #{tpu_custom_call.1} parent=1 // pred_region
      %s106 = ssub.s32 1024, 1024
      %107 = vsyncadd [#allocation12], %s106
      %s108 = sshll.u32 [#allocation13], 4
      %s109 = int_to_ptr.vmem [resolvable:$true] %s108
      %114 = dma.hbm_to_vmem [thread:$0]  %s6, 1024, %s109, [#allocation12], 64, 64, 4
    $region29: #{tpu_custom_call.1} parent=1 // pred_fallthru
      _
    // Predicated region
    $region30: #{tpu_custom_call.1} parent=1 // pred_check
      _
    $region31: #{tpu_custom_call.1} parent=1 // pred_check_branch
      %116 = sbr.rel (0) target = $region33
    $region32: #{tpu_custom_call.1} parent=1 // pred_region
      %s118 = ssub.s32 1024, 1024
      %119 = vsyncadd [#allocation15], %s118
      %s120 = sshll.u32 [#allocation14], 4
      %s121 = int_to_ptr.vmem [resolvable:$true] %s120
      %126 = dma.hbm_to_vmem [thread:$0]  %s7, 1024, %s121, [#allocation15], 64, 64, 4
    $region33: #{tpu_custom_call.1} parent=1 // pred_fallthru
      _
    // Predicated region
    $region34: #{tpu_custom_call.1} parent=1 // pred_check
      _
    $region35: #{tpu_custom_call.1} parent=1 // pred_check_branch
      %128 = sbr.rel (0) target = $region37
    $region36: #{tpu_custom_call.1} parent=1 // pred_region
      %s130 = ssub.s32 1024, 1024
      %131 = vsyncadd [#allocation15], %s130
      %s132 = sshll.u32 [#allocation16], 4
      %s133 = int_to_ptr.vmem [resolvable:$true] %s132
      %138 = dma.hbm_to_vmem [thread:$0]  %s8, 1024, %s133, [#allocation15], 64, 64, 4
    $region37: #{tpu_custom_call.1} parent=1 // pred_fallthru
      _
    // Predicated region
    $region38: #{tpu_custom_call.1} parent=1 // pred_check
      _
    $region39: #{tpu_custom_call.1} parent=1 // pred_check_branch
      %140 = sbr.rel (0) target = $region41
    $region40: #{tpu_custom_call.1} parent=1 // pred_region
      %s142 = ssub.s32 1024, 1024
      %143 = vsyncadd [#allocation18], %s142
      %s144 = sshll.u32 [#allocation17], 4
      %s145 = int_to_ptr.vmem [resolvable:$true] %s144
      %150 = dma.hbm_to_vmem [thread:$0]  %s9, 1024, %s145, [#allocation18], 64, 64, 4
    $region41: #{tpu_custom_call.1} parent=1 // pred_fallthru
      _
    // Predicated region
    $region42: #{tpu_custom_call.1} parent=1 // pred_check
      _
    $region43: #{tpu_custom_call.1} parent=1 // pred_check_branch
      %152 = sbr.rel (0) target = $region45
    $region44: #{tpu_custom_call.1} parent=1 // pred_region
      %s154 = ssub.s32 1024, 1024
      %155 = vsyncadd [#allocation18], %s154
      %s156 = sshll.u32 [#allocation19], 4
      %s157 = int_to_ptr.vmem [resolvable:$true] %s156
      %162 = dma.hbm_to_vmem [thread:$0]  %s10, 1024, %s157, [#allocation18], 64, 64, 4
    $region45: #{tpu_custom_call.1} parent=1 // pred_fallthru
      _
    // Predicated region
    $region46: #{tpu_custom_call.1} parent=1 // pred_check
      _
    $region47: #{tpu_custom_call.1} parent=1 // pred_check_branch
      %164 = sbr.rel (0) target = $region49
    $region48: #{tpu_custom_call.1} parent=1 // pred_region
      _
    $region49: #{tpu_custom_call.1} parent=1 // pred_fallthru
      _
    // Predicated region
    $region50: #{tpu_custom_call.1} parent=1 // pred_check
      _
    $region51: #{tpu_custom_call.1} parent=1 // pred_check_branch
      %166 = sbr.rel (0) target = $region53
    $region52: #{tpu_custom_call.1} parent=1 // pred_region
      _
    $region53: #{tpu_custom_call.1} parent=1 // pred_fallthru
      _
    // Predicated region
    $region54: #{tpu_custom_call.1} parent=1 // pred_check
      _
    $region55: #{tpu_custom_call.1} parent=1 // pred_check_branch
      %168 = sbr.rel (0) target = $region57
    $region56: #{tpu_custom_call.1} parent=1 // pred_region
      _
    $region57: #{tpu_custom_call.1} parent=1 // pred_fallthru
      _
    // Predicated region
    $region58: #{tpu_custom_call.1} parent=1 // pred_check
      _
    $region59: #{tpu_custom_call.1} parent=1 // pred_check_branch
      %170 = sbr.rel (0) target = $region61
    $region60: #{tpu_custom_call.1} parent=1 // pred_region
      _
    $region61: #{tpu_custom_call.1} parent=1 // pred_fallthru
      _
    // Predicated region
    $region62: #{tpu_custom_call.1} parent=1 // pred_check
      _
    $region63: #{tpu_custom_call.1} parent=1 // pred_check_branch
      %172 = sbr.rel (0) target = $region65
    $region64: #{tpu_custom_call.1} parent=1 // pred_region
      _
    $region65: #{tpu_custom_call.1} parent=1 // pred_fallthru
      _
    // Predicated region
    $region66: #{tpu_custom_call.1} parent=1 // pred_check
      _
    $region67: #{tpu_custom_call.1} parent=1 // pred_check_branch
      %174 = sbr.rel (0) target = $region69
    $region68: #{tpu_custom_call.1} parent=1 // pred_region
      _
    $region69: #{tpu_custom_call.1} parent=1 // pred_fallthru
      _
    // Predicated region
    $region70: #{tpu_custom_call.1} parent=1 // pred_check
      _
    $region71: #{tpu_custom_call.1} parent=1 // pred_check_branch
      %176 = sbr.rel (0) target = $region73
    $region72: #{tpu_custom_call.1} parent=1 // pred_region
      _
    $region73: #{tpu_custom_call.1} parent=1 // pred_fallthru
      _
    // Predicated region
    $region74: #{tpu_custom_call.1} parent=1 // pred_check
      _
    $region75: #{tpu_custom_call.1} parent=1 // pred_check_branch
      %178 = sbr.rel (0) target = $region77
    $region76: #{tpu_custom_call.1} parent=1 // pred_region
      _
    $region77: #{tpu_custom_call.1} parent=1 // pred_fallthru
      _
    // Predicated region
    $region78: #{tpu_custom_call.1} parent=1 // pred_check
      _
    $region79: #{tpu_custom_call.1} parent=1 // pred_check_branch
      %180 = sbr.rel (0) target = $region81
    $region80: #{tpu_custom_call.1} parent=1 // pred_region
      _
    $region81: #{tpu_custom_call.1} parent=1 // pred_fallthru
      _
    // Predicated region
    $region82: #{tpu_custom_call.1} parent=1 // pred_check
      _
    $region83: #{tpu_custom_call.1} parent=1 // pred_check_branch
      %182 = sbr.rel (0) target = $region85
    $region84: #{tpu_custom_call.1} parent=1 // pred_region
      _
    $region85: #{tpu_custom_call.1} parent=1 // pred_fallthru
      _
    // Predicated region
    $region86: #{tpu_custom_call.1} parent=1 // pred_check
      _
    $region87: #{tpu_custom_call.1} parent=1 // pred_check_branch
      %184 = sbr.rel (0) target = $region89
    $region88: #{tpu_custom_call.1} parent=1 // pred_region
      %185 = dma.done [#allocation3], 64
    $region89: #{tpu_custom_call.1} parent=1 // pred_fallthru
      _
    // Predicated region
    $region90: #{tpu_custom_call.1} parent=1 // pred_check
      _
    $region91: #{tpu_custom_call.1} parent=1 // pred_check_branch
      %187 = sbr.rel (0) target = $region93
    $region92: #{tpu_custom_call.1} parent=1 // pred_region
      %188 = dma.done [#allocation6], 1024
    $region93: #{tpu_custom_call.1} parent=1 // pred_fallthru
      _
    // Predicated region
    $region94: #{tpu_custom_call.1} parent=1 // pred_check
      _
    $region95: #{tpu_custom_call.1} parent=1 // pred_check_branch
      %190 = sbr.rel (0) target = $region97
    $region96: #{tpu_custom_call.1} parent=1 // pred_region
      %191 = dma.done [#allocation6], 1024
    $region97: #{tpu_custom_call.1} parent=1 // pred_fallthru
      _
    // Predicated region
    $region98: #{tpu_custom_call.1} parent=1 // pred_check
      _
    $region99: #{tpu_custom_call.1} parent=1 // pred_check_branch
      %193 = sbr.rel (0) target = $region101
    $region100: #{tpu_custom_call.1} parent=1 // pred_region
      %194 = dma.done [#allocation9], 1024
    $region101: #{tpu_custom_call.1} parent=1 // pred_fallthru
      _
    // Predicated region
    $region102: #{tpu_custom_call.1} parent=1 // pred_check
      _
    $region103: #{tpu_custom_call.1} parent=1 // pred_check_branch
      %196 = sbr.rel (0) target = $region105
    $region104: #{tpu_custom_call.1} parent=1 // pred_region
      %197 = dma.done [#allocation9], 1024
    $region105: #{tpu_custom_call.1} parent=1 // pred_fallthru
      _
    // Predicated region
    $region106: #{tpu_custom_call.1} parent=1 // pred_check
      _
    $region107: #{tpu_custom_call.1} parent=1 // pred_check_branch
      %199 = sbr.rel (0) target = $region109
    $region108: #{tpu_custom_call.1} parent=1 // pred_region
      %200 = dma.done [#allocation12], 1024
    $region109: #{tpu_custom_call.1} parent=1 // pred_fallthru
      _
    // Predicated region
    $region110: #{tpu_custom_call.1} parent=1 // pred_check
      _
    $region111: #{tpu_custom_call.1} parent=1 // pred_check_branch
      %202 = sbr.rel (0) target = $region113
    $region112: #{tpu_custom_call.1} parent=1 // pred_region
      %203 = dma.done [#allocation12], 1024
    $region113: #{tpu_custom_call.1} parent=1 // pred_fallthru
      _
    // Predicated region
    $region114: #{tpu_custom_call.1} parent=1 // pred_check
      _
    $region115: #{tpu_custom_call.1} parent=1 // pred_check_branch
      %205 = sbr.rel (0) target = $region117
    $region116: #{tpu_custom_call.1} parent=1 // pred_region
      %206 = dma.done [#allocation15], 1024
    $region117: #{tpu_custom_call.1} parent=1 // pred_fallthru
      _
    // Predicated region
    $region118: #{tpu_custom_call.1} parent=1 // pred_check
      _
    $region119: #{tpu_custom_call.1} parent=1 // pred_check_branch
      %208 = sbr.rel (0) target = $region121
    $region120: #{tpu_custom_call.1} parent=1 // pred_region
      %209 = dma.done [#allocation15], 1024
    $region121: #{tpu_custom_call.1} parent=1 // pred_fallthru
      _
    // Predicated region
    $region122: #{tpu_custom_call.1} parent=1 // pred_check
      _
    $region123: #{tpu_custom_call.1} parent=1 // pred_check_branch
      %211 = sbr.rel (0) target = $region125
    $region124: #{tpu_custom_call.1} parent=1 // pred_region
      %212 = dma.done [#allocation18], 1024
    $region125: #{tpu_custom_call.1} parent=1 // pred_fallthru
      _
    // Predicated region
    $region126: #{tpu_custom_call.1} parent=1 // pred_check
      _
    $region127: #{tpu_custom_call.1} parent=1 // pred_check_branch
      %214 = sbr.rel (0) target = $region129
    $region128: #{tpu_custom_call.1} parent=1 // pred_region
      %215 = dma.done [#allocation18], 1024
    $region129: #{tpu_custom_call.1} parent=1 // pred_fallthru
      _
    %v217 = vld [vmem:[#allocation2] sm:$0xf]
    %v218 = vld [vmem:[#allocation5] sm:$0xf]
    %v219 = vld [vmem:[#allocation5 + $0x4] sm:$0xf]
    %v220 = vld [vmem:[#allocation5 + $0x8] sm:$0xf]
    %v221 = vld [vmem:[#allocation5 + $0xc] sm:$0xf]
    %v222 = vld [vmem:[#allocation5 + $0x10] sm:$0xf]
    %v223 = vld [vmem:[#allocation5 + $0x14] sm:$0xf]
    %v224 = vld [vmem:[#allocation5 + $0x18] sm:$0xf]
    %v225 = vld [vmem:[#allocation5 + $0x1c] sm:$0xf]
    %v226 = vld [vmem:[#allocation5 + $0x20] sm:$0xf]
    %v227 = vld [vmem:[#allocation5 + $0x24] sm:$0xf]
    %v228 = vld [vmem:[#allocation5 + $0x28] sm:$0xf]
    %v229 = vld [vmem:[#allocation5 + $0x2c] sm:$0xf]
    %v230 = vld [vmem:[#allocation5 + $0x30] sm:$0xf]
    %v231 = vld [vmem:[#allocation5 + $0x34] sm:$0xf]
    %v232 = vld [vmem:[#allocation5 + $0x38] sm:$0xf]
    %v233 = vld [vmem:[#allocation5 + $0x3c] sm:$0xf]
    %v234 = vld [vmem:[%s11] sm:$0x1]
    %v236 = vlaneseq
    %v237 = vshrl.u32 %v236, 7
    %v238 = vsub.s32 0, %v237
    %v239 = vrot.slane %v234, %v238
    %v257 = vunpack.c.l.b16 %v218
    %v258 = vunpack.c.l.b16 %v219
    %v259 = vunpack.c.l.b16 %v220
    %v260 = vunpack.c.l.b16 %v221
    %v261 = vunpack.c.l.b16 %v222
    %v262 = vunpack.c.l.b16 %v223
    %v263 = vunpack.c.l.b16 %v224
    %v264 = vunpack.c.l.b16 %v225
    %v265 = vunpack.c.l.b16 %v226
    %v266 = vunpack.c.l.b16 %v227
    %v267 = vunpack.c.l.b16 %v228
    %v268 = vunpack.c.l.b16 %v229
    %v269 = vunpack.c.l.b16 %v230
    %v270 = vunpack.c.l.b16 %v231
    %v271 = vunpack.c.l.b16 %v232
    %v272 = vunpack.c.l.b16 %v233
    %v273 = vpack.c.b16 %v258, %v257
    %v274 = vpack.c.b16 %v260, %v259
    %v275 = vpack.c.b16 %v262, %v261
    %v276 = vpack.c.b16 %v264, %v263
    %v277 = vpack.c.b16 %v266, %v265
    %v278 = vpack.c.b16 %v268, %v267
    %v279 = vpack.c.b16 %v270, %v269
    %v280 = vpack.c.b16 %v272, %v271
    %289 = vmatprep.subr.bf16.mxu0 0
    %290 = vmatpush1.bf16.msra.mxu0 %v280
    %291 = vmatprep.subr.bf16.mxu0 0
    %292 = vmatpush1.bf16.msra.mxu0 %v279
    %293 = vmatprep.subr.bf16.mxu0 0
    %294 = vmatpush1.bf16.msra.mxu0 %v278
    %295 = vmatprep.subr.bf16.mxu0 0
    %296 = vmatpush1.bf16.msra.mxu0 %v277
    %297 = vmatprep.subr.bf16.mxu0 0
    %298 = vmatpush1.bf16.msra.mxu0 %v276
    %299 = vmatprep.subr.bf16.mxu0 0
    %300 = vmatpush1.bf16.msra.mxu0 %v275
    %301 = vmatprep.subr.bf16.mxu0 0
    %302 = vmatpush1.bf16.msra.mxu0 %v274
    %303 = vmatprep.subr.bf16.mxu0 0
    %304 = vmatpush1.bf16.msra.mxu0 %v273
    %305 = vmatprep.subr.bf16.mxu0 0
    %306 = vmatpush2.bf16.msra.mxu0 0
    %307 = vmatprep.subr.bf16.mxu0 0
    %308 = vmatpush2.bf16.msra.mxu0 0
    %309 = vmatprep.subr.bf16.mxu0 0
    %310 = vmatpush2.bf16.msra.mxu0 0
    %311 = vmatprep.subr.bf16.mxu0 0
    %312 = vmatpush2.bf16.msra.mxu0 0
    %313 = vmatprep.subr.bf16.mxu0 0
    %314 = vmatpush2.bf16.msra.mxu0 0
    %315 = vmatprep.subr.bf16.mxu0 0
    %316 = vmatpush2.bf16.msra.mxu0 0
    %317 = vmatprep.subr.bf16.mxu0 0
    %318 = vmatpush2.bf16.msra.mxu0 0
    %319 = vmatprep.subr.bf16.mxu0 0
    %320 = vmatpush2.bf16.msra.mxu0 0
    %321 = vmatprep.mubr.bf16.mxu0 0
    %322 = vmatmul.mubr.bf16.gmra.mxu0 %v217
    %v323 = vpop.f32.mrf.mxu0
    %v324 = vadd.f32 %v239, %v323
    %v325 = vpop.f32.mrf.mxu0
    %v326 = vpop.f32.mrf.mxu0
    %v327 = vpop.f32.mrf.mxu0
    %328 = vdwg.mxu0
    %329 = vst [vmem:[#allocation20] sm:$0xff] %v324
    %v330 = vpack.c.bf16 %v324, %v324
    %v331 = vld [vmem:[#allocation7] sm:$0xf]
    %v332 = vld [vmem:[#allocation7 + $0x4] sm:$0xf]
    %v333 = vld [vmem:[#allocation7 + $0x8] sm:$0xf]
    %v334 = vld [vmem:[#allocation7 + $0xc] sm:$0xf]
    %v335 = vld [vmem:[#allocation7 + $0x10] sm:$0xf]
    %v336 = vld [vmem:[#allocation7 + $0x14] sm:$0xf]
    %v337 = vld [vmem:[#allocation7 + $0x18] sm:$0xf]
    %v338 = vld [vmem:[#allocation7 + $0x1c] sm:$0xf]
    %v339 = vld [vmem:[#allocation7 + $0x20] sm:$0xf]
    %v340 = vld [vmem:[#allocation7 + $0x24] sm:$0xf]
    %v341 = vld [vmem:[#allocation7 + $0x28] sm:$0xf]
    %v342 = vld [vmem:[#allocation7 + $0x2c] sm:$0xf]
    %v343 = vld [vmem:[#allocation7 + $0x30] sm:$0xf]
    %v344 = vld [vmem:[#allocation7 + $0x34] sm:$0xf]
    %v345 = vld [vmem:[#allocation7 + $0x38] sm:$0xf]
    %v346 = vld [vmem:[#allocation7 + $0x3c] sm:$0xf]
    %v347 = vld [vmem:[%s12] sm:$0x1]
    %v349 = vlaneseq
    %v350 = vshrl.u32 %v349, 7
    %v351 = vsub.s32 0, %v350
    %v352 = vrot.slane %v347, %v351
    %v370 = vunpack.c.l.b16 %v331
    %v371 = vunpack.c.l.b16 %v332
    %v372 = vunpack.c.l.b16 %v333
    %v373 = vunpack.c.l.b16 %v334
    %v374 = vunpack.c.l.b16 %v335
    %v375 = vunpack.c.l.b16 %v336
    %v376 = vunpack.c.l.b16 %v337
    %v377 = vunpack.c.l.b16 %v338
    %v378 = vunpack.c.l.b16 %v339
    %v379 = vunpack.c.l.b16 %v340
    %v380 = vunpack.c.l.b16 %v341
    %v381 = vunpack.c.l.b16 %v342
    %v382 = vunpack.c.l.b16 %v343
    %v383 = vunpack.c.l.b16 %v344
    %v384 = vunpack.c.l.b16 %v345
    %v385 = vunpack.c.l.b16 %v346
    %v386 = vpack.c.b16 %v371, %v370
    %v387 = vpack.c.b16 %v373, %v372
    %v388 = vpack.c.b16 %v375, %v374
    %v389 = vpack.c.b16 %v377, %v376
    %v390 = vpack.c.b16 %v379, %v378
    %v391 = vpack.c.b16 %v381, %v380
    %v392 = vpack.c.b16 %v383, %v382
    %v393 = vpack.c.b16 %v385, %v384
    %402 = vmatprep.subr.bf16.mxu0 0
    %403 = vmatpush1.bf16.msra.mxu0 %v393
    %404 = vmatprep.subr.bf16.mxu0 0
    %405 = vmatpush1.bf16.msra.mxu0 %v392
    %406 = vmatprep.subr.bf16.mxu0 0
    %407 = vmatpush1.bf16.msra.mxu0 %v391
    %408 = vmatprep.subr.bf16.mxu0 0
    %409 = vmatpush1.bf16.msra.mxu0 %v390
    %410 = vmatprep.subr.bf16.mxu0 0
    %411 = vmatpush1.bf16.msra.mxu0 %v389
    %412 = vmatprep.subr.bf16.mxu0 0
    %413 = vmatpush1.bf16.msra.mxu0 %v388
    %414 = vmatprep.subr.bf16.mxu0 0
    %415 = vmatpush1.bf16.msra.mxu0 %v387
    %416 = vmatprep.subr.bf16.mxu0 0
    %417 = vmatpush1.bf16.msra.mxu0 %v386
    %418 = vmatprep.subr.bf16.mxu0 0
    %419 = vmatpush2.bf16.msra.mxu0 0
    %420 = vmatprep.subr.bf16.mxu0 0
    %421 = vmatpush2.bf16.msra.mxu0 0
    %422 = vmatprep.subr.bf16.mxu0 0
    %423 = vmatpush2.bf16.msra.mxu0 0
    %424 = vmatprep.subr.bf16.mxu0 0
    %425 = vmatpush2.bf16.msra.mxu0 0
    %426 = vmatprep.subr.bf16.mxu0 0
    %427 = vmatpush2.bf16.msra.mxu0 0
    %428 = vmatprep.subr.bf16.mxu0 0
    %429 = vmatpush2.bf16.msra.mxu0 0
    %430 = vmatprep.subr.bf16.mxu0 0
    %431 = vmatpush2.bf16.msra.mxu0 0
    %432 = vmatprep.subr.bf16.mxu0 0
    %433 = vmatpush2.bf16.msra.mxu0 0
    %434 = vmatprep.mubr.bf16.mxu0 0
    %435 = vmatmul.mubr.bf16.gmra.mxu0 %v330
    %v436 = vpop.f32.mrf.mxu0
    %v437 = vadd.f32 %v352, %v436
    %v438 = vpop.f32.mrf.mxu0
    %v439 = vpop.f32.mrf.mxu0
    %v440 = vpop.f32.mrf.mxu0
    %441 = vdwg.mxu0
    %v442 = vmax.f32 %v437, 0.0
    %443 = vst [vmem:[#allocation20 + $0x8] sm:$0xff] %v442
    %v444 = vpack.c.bf16 %v442, %v442
    %v445 = vld [vmem:[#allocation8] sm:$0xf]
    %v446 = vld [vmem:[#allocation8 + $0x4] sm:$0xf]
    %v447 = vld [vmem:[#allocation8 + $0x8] sm:$0xf]
    %v448 = vld [vmem:[#allocation8 + $0xc] sm:$0xf]
    %v449 = vld [vmem:[#allocation8 + $0x10] sm:$0xf]
    %v450 = vld [vmem:[#allocation8 + $0x14] sm:$0xf]
    %v451 = vld [vmem:[#allocation8 + $0x18] sm:$0xf]
    %v452 = vld [vmem:[#allocation8 + $0x1c] sm:$0xf]
    %v453 = vld [vmem:[#allocation8 + $0x20] sm:$0xf]
    %v454 = vld [vmem:[#allocation8 + $0x24] sm:$0xf]
    %v455 = vld [vmem:[#allocation8 + $0x28] sm:$0xf]
    %v456 = vld [vmem:[#allocation8 + $0x2c] sm:$0xf]
    %v457 = vld [vmem:[#allocation8 + $0x30] sm:$0xf]
    %v458 = vld [vmem:[#allocation8 + $0x34] sm:$0xf]
    %v459 = vld [vmem:[#allocation8 + $0x38] sm:$0xf]
    %v460 = vld [vmem:[#allocation8 + $0x3c] sm:$0xf]
    %v461 = vld [vmem:[%s13] sm:$0x1]
    %v463 = vlaneseq
    %v464 = vshrl.u32 %v463, 7
    %v465 = vsub.s32 0, %v464
    %v466 = vrot.slane %v461, %v465
    %v484 = vunpack.c.l.b16 %v445
    %v485 = vunpack.c.l.b16 %v446
    %v486 = vunpack.c.l.b16 %v447
    %v487 = vunpack.c.l.b16 %v448
    %v488 = vunpack.c.l.b16 %v449
    %v489 = vunpack.c.l.b16 %v450
    %v490 = vunpack.c.l.b16 %v451
    %v491 = vunpack.c.l.b16 %v452
    %v492 = vunpack.c.l.b16 %v453
    %v493 = vunpack.c.l.b16 %v454
    %v494 = vunpack.c.l.b16 %v455
    %v495 = vunpack.c.l.b16 %v456
    %v496 = vunpack.c.l.b16 %v457
    %v497 = vunpack.c.l.b16 %v458
    %v498 = vunpack.c.l.b16 %v459
    %v499 = vunpack.c.l.b16 %v460
    %v500 = vpack.c.b16 %v485, %v484
    %v501 = vpack.c.b16 %v487, %v486
    %v502 = vpack.c.b16 %v489, %v488
    %v503 = vpack.c.b16 %v491, %v490
    %v504 = vpack.c.b16 %v493, %v492
    %v505 = vpack.c.b16 %v495, %v494
    %v506 = vpack.c.b16 %v497, %v496
    %v507 = vpack.c.b16 %v499, %v498
    %516 = vmatprep.subr.bf16.mxu0 0
    %517 = vmatpush1.bf16.msra.mxu0 %v507
    %518 = vmatprep.subr.bf16.mxu0 0
    %519 = vmatpush1.bf16.msra.mxu0 %v506
    %520 = vmatprep.subr.bf16.mxu0 0
    %521 = vmatpush1.bf16.msra.mxu0 %v505
    %522 = vmatprep.subr.bf16.mxu0 0
    %523 = vmatpush1.bf16.msra.mxu0 %v504
    %524 = vmatprep.subr.bf16.mxu0 0
    %525 = vmatpush1.bf16.msra.mxu0 %v503
    %526 = vmatprep.subr.bf16.mxu0 0
    %527 = vmatpush1.bf16.msra.mxu0 %v502
    %528 = vmatprep.subr.bf16.mxu0 0
    %529 = vmatpush1.bf16.msra.mxu0 %v501
    %530 = vmatprep.subr.bf16.mxu0 0
    %531 = vmatpush1.bf16.msra.mxu0 %v500
    %532 = vmatprep.subr.bf16.mxu0 0
    %533 = vmatpush2.bf16.msra.mxu0 0
    %534 = vmatprep.subr.bf16.mxu0 0
    %535 = vmatpush2.bf16.msra.mxu0 0
    %536 = vmatprep.subr.bf16.mxu0 0
    %537 = vmatpush2.bf16.msra.mxu0 0
    %538 = vmatprep.subr.bf16.mxu0 0
    %539 = vmatpush2.bf16.msra.mxu0 0
    %540 = vmatprep.subr.bf16.mxu0 0
    %541 = vmatpush2.bf16.msra.mxu0 0
    %542 = vmatprep.subr.bf16.mxu0 0
    %543 = vmatpush2.bf16.msra.mxu0 0
    %544 = vmatprep.subr.bf16.mxu0 0
    %545 = vmatpush2.bf16.msra.mxu0 0
    %546 = vmatprep.subr.bf16.mxu0 0
    %547 = vmatpush2.bf16.msra.mxu0 0
    %548 = vmatprep.mubr.bf16.mxu0 0
    %549 = vmatmul.mubr.bf16.gmra.mxu0 %v444
    %v550 = vpop.f32.mrf.mxu0
    %v551 = vadd.f32 %v466, %v550
    %v552 = vpop.f32.mrf.mxu0
    %v553 = vpop.f32.mrf.mxu0
    %v554 = vpop.f32.mrf.mxu0
    %555 = vdwg.mxu0
    %v556 = vmax.f32 %v551, 0.0
    %557 = vst [vmem:[#allocation20 + $0x10] sm:$0xff] %v556
    %v558 = vpack.c.bf16 %v556, %v556
    %v559 = vld [vmem:[#allocation10] sm:$0xf]
    %v560 = vld [vmem:[#allocation10 + $0x4] sm:$0xf]
    %v561 = vld [vmem:[#allocation10 + $0x8] sm:$0xf]
    %v562 = vld [vmem:[#allocation10 + $0xc] sm:$0xf]
    %v563 = vld [vmem:[#allocation10 + $0x10] sm:$0xf]
    %v564 = vld [vmem:[#allocation10 + $0x14] sm:$0xf]
    %v565 = vld [vmem:[#allocation10 + $0x18] sm:$0xf]
    %v566 = vld [vmem:[#allocation10 + $0x1c] sm:$0xf]
    %v567 = vld [vmem:[#allocation10 + $0x20] sm:$0xf]
    %v568 = vld [vmem:[#allocation10 + $0x24] sm:$0xf]
    %v569 = vld [vmem:[#allocation10 + $0x28] sm:$0xf]
    %v570 = vld [vmem:[#allocation10 + $0x2c] sm:$0xf]
    %v571 = vld [vmem:[#allocation10 + $0x30] sm:$0xf]
    %v572 = vld [vmem:[#allocation10 + $0x34] sm:$0xf]
    %v573 = vld [vmem:[#allocation10 + $0x38] sm:$0xf]
    %v574 = vld [vmem:[#allocation10 + $0x3c] sm:$0xf]
    %v575 = vld [vmem:[%s14] sm:$0x1]
    %v577 = vlaneseq
    %v578 = vshrl.u32 %v577, 7
    %v579 = vsub.s32 0, %v578
    %v580 = vrot.slane %v575, %v579
    %v598 = vunpack.c.l.b16 %v559
    %v599 = vunpack.c.l.b16 %v560
    %v600 = vunpack.c.l.b16 %v561
    %v601 = vunpack.c.l.b16 %v562
    %v602 = vunpack.c.l.b16 %v563
    %v603 = vunpack.c.l.b16 %v564
    %v604 = vunpack.c.l.b16 %v565
    %v605 = vunpack.c.l.b16 %v566
    %v606 = vunpack.c.l.b16 %v567
    %v607 = vunpack.c.l.b16 %v568
    %v608 = vunpack.c.l.b16 %v569
    %v609 = vunpack.c.l.b16 %v570
    %v610 = vunpack.c.l.b16 %v571
    %v611 = vunpack.c.l.b16 %v572
    %v612 = vunpack.c.l.b16 %v573
    %v613 = vunpack.c.l.b16 %v574
    %v614 = vpack.c.b16 %v599, %v598
    %v615 = vpack.c.b16 %v601, %v600
    %v616 = vpack.c.b16 %v603, %v602
    %v617 = vpack.c.b16 %v605, %v604
    %v618 = vpack.c.b16 %v607, %v606
    %v619 = vpack.c.b16 %v609, %v608
    %v620 = vpack.c.b16 %v611, %v610
    %v621 = vpack.c.b16 %v613, %v612
    %630 = vmatprep.subr.bf16.mxu0 0
    %631 = vmatpush1.bf16.msra.mxu0 %v621
    %632 = vmatprep.subr.bf16.mxu0 0
    %633 = vmatpush1.bf16.msra.mxu0 %v620
    %634 = vmatprep.subr.bf16.mxu0 0
    %635 = vmatpush1.bf16.msra.mxu0 %v619
    %636 = vmatprep.subr.bf16.mxu0 0
    %637 = vmatpush1.bf16.msra.mxu0 %v618
    %638 = vmatprep.subr.bf16.mxu0 0
    %639 = vmatpush1.bf16.msra.mxu0 %v617
    %640 = vmatprep.subr.bf16.mxu0 0
    %641 = vmatpush1.bf16.msra.mxu0 %v616
    %642 = vmatprep.subr.bf16.mxu0 0
    %643 = vmatpush1.bf16.msra.mxu0 %v615
    %644 = vmatprep.subr.bf16.mxu0 0
    %645 = vmatpush1.bf16.msra.mxu0 %v614
    %646 = vmatprep.subr.bf16.mxu0 0
    %647 = vmatpush2.bf16.msra.mxu0 0
    %648 = vmatprep.subr.bf16.mxu0 0
    %649 = vmatpush2.bf16.msra.mxu0 0
    %650 = vmatprep.subr.bf16.mxu0 0
    %651 = vmatpush2.bf16.msra.mxu0 0
    %652 = vmatprep.subr.bf16.mxu0 0
    %653 = vmatpush2.bf16.msra.mxu0 0
    %654 = vmatprep.subr.bf16.mxu0 0
    %655 = vmatpush2.bf16.msra.mxu0 0
    %656 = vmatprep.subr.bf16.mxu0 0
    %657 = vmatpush2.bf16.msra.mxu0 0
    %658 = vmatprep.subr.bf16.mxu0 0
    %659 = vmatpush2.bf16.msra.mxu0 0
    %660 = vmatprep.subr.bf16.mxu0 0
    %661 = vmatpush2.bf16.msra.mxu0 0
    %662 = vmatprep.mubr.bf16.mxu0 0
    %663 = vmatmul.mubr.bf16.gmra.mxu0 %v558
    %v664 = vpop.f32.mrf.mxu0
    %v665 = vadd.f32 %v580, %v664
    %v666 = vpop.f32.mrf.mxu0
    %v667 = vpop.f32.mrf.mxu0
    %v668 = vpop.f32.mrf.mxu0
    %669 = vdwg.mxu0
    %v670 = vmax.f32 %v665, 0.0
    %671 = vst [vmem:[#allocation20 + $0x18] sm:$0xff] %v670
    %v672 = vpack.c.bf16 %v670, %v670
    %v673 = vld [vmem:[#allocation11] sm:$0xf]
    %v674 = vld [vmem:[#allocation11 + $0x4] sm:$0xf]
    %v675 = vld [vmem:[#allocation11 + $0x8] sm:$0xf]
    %v676 = vld [vmem:[#allocation11 + $0xc] sm:$0xf]
    %v677 = vld [vmem:[#allocation11 + $0x10] sm:$0xf]
    %v678 = vld [vmem:[#allocation11 + $0x14] sm:$0xf]
    %v679 = vld [vmem:[#allocation11 + $0x18] sm:$0xf]
    %v680 = vld [vmem:[#allocation11 + $0x1c] sm:$0xf]
    %v681 = vld [vmem:[#allocation11 + $0x20] sm:$0xf]
    %v682 = vld [vmem:[#allocation11 + $0x24] sm:$0xf]
    %v683 = vld [vmem:[#allocation11 + $0x28] sm:$0xf]
    %v684 = vld [vmem:[#allocation11 + $0x2c] sm:$0xf]
    %v685 = vld [vmem:[#allocation11 + $0x30] sm:$0xf]
    %v686 = vld [vmem:[#allocation11 + $0x34] sm:$0xf]
    %v687 = vld [vmem:[#allocation11 + $0x38] sm:$0xf]
    %v688 = vld [vmem:[#allocation11 + $0x3c] sm:$0xf]
    %v689 = vld [vmem:[%s15] sm:$0x1]
    %v691 = vlaneseq
    %v692 = vshrl.u32 %v691, 7
    %v693 = vsub.s32 0, %v692
    %v694 = vrot.slane %v689, %v693
    %v712 = vunpack.c.l.b16 %v673
    %v713 = vunpack.c.l.b16 %v674
    %v714 = vunpack.c.l.b16 %v675
    %v715 = vunpack.c.l.b16 %v676
    %v716 = vunpack.c.l.b16 %v677
    %v717 = vunpack.c.l.b16 %v678
    %v718 = vunpack.c.l.b16 %v679
    %v719 = vunpack.c.l.b16 %v680
    %v720 = vunpack.c.l.b16 %v681
    %v721 = vunpack.c.l.b16 %v682
    %v722 = vunpack.c.l.b16 %v683
    %v723 = vunpack.c.l.b16 %v684
    %v724 = vunpack.c.l.b16 %v685
    %v725 = vunpack.c.l.b16 %v686
    %v726 = vunpack.c.l.b16 %v687
    %v727 = vunpack.c.l.b16 %v688
    %v728 = vpack.c.b16 %v713, %v712
    %v729 = vpack.c.b16 %v715, %v714
    %v730 = vpack.c.b16 %v717, %v716
    %v731 = vpack.c.b16 %v719, %v718
    %v732 = vpack.c.b16 %v721, %v720
    %v733 = vpack.c.b16 %v723, %v722
    %v734 = vpack.c.b16 %v725, %v724
    %v735 = vpack.c.b16 %v727, %v726
    %744 = vmatprep.subr.bf16.mxu0 0
    %745 = vmatpush1.bf16.msra.mxu0 %v735
    %746 = vmatprep.subr.bf16.mxu0 0
    %747 = vmatpush1.bf16.msra.mxu0 %v734
    %748 = vmatprep.subr.bf16.mxu0 0
    %749 = vmatpush1.bf16.msra.mxu0 %v733
    %750 = vmatprep.subr.bf16.mxu0 0
    %751 = vmatpush1.bf16.msra.mxu0 %v732
    %752 = vmatprep.subr.bf16.mxu0 0
    %753 = vmatpush1.bf16.msra.mxu0 %v731
    %754 = vmatprep.subr.bf16.mxu0 0
    %755 = vmatpush1.bf16.msra.mxu0 %v730
    %756 = vmatprep.subr.bf16.mxu0 0
    %757 = vmatpush1.bf16.msra.mxu0 %v729
    %758 = vmatprep.subr.bf16.mxu0 0
    %759 = vmatpush1.bf16.msra.mxu0 %v728
    %760 = vmatprep.subr.bf16.mxu0 0
    %761 = vmatpush2.bf16.msra.mxu0 0
    %762 = vmatprep.subr.bf16.mxu0 0
    %763 = vmatpush2.bf16.msra.mxu0 0
    %764 = vmatprep.subr.bf16.mxu0 0
    %765 = vmatpush2.bf16.msra.mxu0 0
    %766 = vmatprep.subr.bf16.mxu0 0
    %767 = vmatpush2.bf16.msra.mxu0 0
    %768 = vmatprep.subr.bf16.mxu0 0
    %769 = vmatpush2.bf16.msra.mxu0 0
    %770 = vmatprep.subr.bf16.mxu0 0
    %771 = vmatpush2.bf16.msra.mxu0 0
    %772 = vmatprep.subr.bf16.mxu0 0
    %773 = vmatpush2.bf16.msra.mxu0 0
    %774 = vmatprep.subr.bf16.mxu0 0
    %775 = vmatpush2.bf16.msra.mxu0 0
    %776 = vmatprep.mubr.bf16.mxu0 0
    %777 = vmatmul.mubr.bf16.gmra.mxu0 %v672
    %v778 = vpop.f32.mrf.mxu0
    %v779 = vadd.f32 %v694, %v778
    %v780 = vpop.f32.mrf.mxu0
    %v781 = vpop.f32.mrf.mxu0
    %v782 = vpop.f32.mrf.mxu0
    %783 = vdwg.mxu0
    %784 = vst [vmem:[#allocation20 + $0x20] sm:$0xff] %v779
    %v785 = vpack.c.bf16 %v779, %v779
    %v786 = vld [vmem:[#allocation13] sm:$0xf]
    %v787 = vld [vmem:[#allocation13 + $0x4] sm:$0xf]
    %v788 = vld [vmem:[#allocation13 + $0x8] sm:$0xf]
    %v789 = vld [vmem:[#allocation13 + $0xc] sm:$0xf]
    %v790 = vld [vmem:[#allocation13 + $0x10] sm:$0xf]
    %v791 = vld [vmem:[#allocation13 + $0x14] sm:$0xf]
    %v792 = vld [vmem:[#allocation13 + $0x18] sm:$0xf]
    %v793 = vld [vmem:[#allocation13 + $0x1c] sm:$0xf]
    %v794 = vld [vmem:[#allocation13 + $0x20] sm:$0xf]
    %v795 = vld [vmem:[#allocation13 + $0x24] sm:$0xf]
    %v796 = vld [vmem:[#allocation13 + $0x28] sm:$0xf]
    %v797 = vld [vmem:[#allocation13 + $0x2c] sm:$0xf]
    %v798 = vld [vmem:[#allocation13 + $0x30] sm:$0xf]
    %v799 = vld [vmem:[#allocation13 + $0x34] sm:$0xf]
    %v800 = vld [vmem:[#allocation13 + $0x38] sm:$0xf]
    %v801 = vld [vmem:[#allocation13 + $0x3c] sm:$0xf]
    %v802 = vld [vmem:[%s16] sm:$0x1]
    %v804 = vlaneseq
    %v805 = vshrl.u32 %v804, 7
    %v806 = vsub.s32 0, %v805
    %v807 = vrot.slane %v802, %v806
    %v825 = vunpack.c.l.b16 %v786
    %v826 = vunpack.c.l.b16 %v787
    %v827 = vunpack.c.l.b16 %v788
    %v828 = vunpack.c.l.b16 %v789
    %v829 = vunpack.c.l.b16 %v790
    %v830 = vunpack.c.l.b16 %v791
    %v831 = vunpack.c.l.b16 %v792
    %v832 = vunpack.c.l.b16 %v793
    %v833 = vunpack.c.l.b16 %v794
    %v834 = vunpack.c.l.b16 %v795
    %v835 = vunpack.c.l.b16 %v796
    %v836 = vunpack.c.l.b16 %v797
    %v837 = vunpack.c.l.b16 %v798
    %v838 = vunpack.c.l.b16 %v799
    %v839 = vunpack.c.l.b16 %v800
    %v840 = vunpack.c.l.b16 %v801
    %v841 = vpack.c.b16 %v826, %v825
    %v842 = vpack.c.b16 %v828, %v827
    %v843 = vpack.c.b16 %v830, %v829
    %v844 = vpack.c.b16 %v832, %v831
    %v845 = vpack.c.b16 %v834, %v833
    %v846 = vpack.c.b16 %v836, %v835
    %v847 = vpack.c.b16 %v838, %v837
    %v848 = vpack.c.b16 %v840, %v839
    %857 = vmatprep.subr.bf16.mxu0 0
    %858 = vmatpush1.bf16.msra.mxu0 %v848
    %859 = vmatprep.subr.bf16.mxu0 0
    %860 = vmatpush1.bf16.msra.mxu0 %v847
    %861 = vmatprep.subr.bf16.mxu0 0
    %862 = vmatpush1.bf16.msra.mxu0 %v846
    %863 = vmatprep.subr.bf16.mxu0 0
    %864 = vmatpush1.bf16.msra.mxu0 %v845
    %865 = vmatprep.subr.bf16.mxu0 0
    %866 = vmatpush1.bf16.msra.mxu0 %v844
    %867 = vmatprep.subr.bf16.mxu0 0
    %868 = vmatpush1.bf16.msra.mxu0 %v843
    %869 = vmatprep.subr.bf16.mxu0 0
    %870 = vmatpush1.bf16.msra.mxu0 %v842
    %871 = vmatprep.subr.bf16.mxu0 0
    %872 = vmatpush1.bf16.msra.mxu0 %v841
    %873 = vmatprep.subr.bf16.mxu0 0
    %874 = vmatpush2.bf16.msra.mxu0 0
    %875 = vmatprep.subr.bf16.mxu0 0
    %876 = vmatpush2.bf16.msra.mxu0 0
    %877 = vmatprep.subr.bf16.mxu0 0
    %878 = vmatpush2.bf16.msra.mxu0 0
    %879 = vmatprep.subr.bf16.mxu0 0
    %880 = vmatpush2.bf16.msra.mxu0 0
    %881 = vmatprep.subr.bf16.mxu0 0
    %882 = vmatpush2.bf16.msra.mxu0 0
    %883 = vmatprep.subr.bf16.mxu0 0
    %884 = vmatpush2.bf16.msra.mxu0 0
    %885 = vmatprep.subr.bf16.mxu0 0
    %886 = vmatpush2.bf16.msra.mxu0 0
    %887 = vmatprep.subr.bf16.mxu0 0
    %888 = vmatpush2.bf16.msra.mxu0 0
    %889 = vmatprep.mubr.bf16.mxu0 0
    %890 = vmatmul.mubr.bf16.gmra.mxu0 %v785
    %v891 = vpop.f32.mrf.mxu0
    %v892 = vadd.f32 %v807, %v891
    %v893 = vpop.f32.mrf.mxu0
    %v894 = vpop.f32.mrf.mxu0
    %v895 = vpop.f32.mrf.mxu0
    %896 = vdwg.mxu0
    %v897 = vmax.f32 %v892, 0.0
    %v898 = vpack.c.bf16 %v897, %v897
    %v899 = vld [vmem:[#allocation14] sm:$0xf]
    %v900 = vld [vmem:[#allocation14 + $0x4] sm:$0xf]
    %v901 = vld [vmem:[#allocation14 + $0x8] sm:$0xf]
    %v902 = vld [vmem:[#allocation14 + $0xc] sm:$0xf]
    %v903 = vld [vmem:[#allocation14 + $0x10] sm:$0xf]
    %v904 = vld [vmem:[#allocation14 + $0x14] sm:$0xf]
    %v905 = vld [vmem:[#allocation14 + $0x18] sm:$0xf]
    %v906 = vld [vmem:[#allocation14 + $0x1c] sm:$0xf]
    %v907 = vld [vmem:[#allocation14 + $0x20] sm:$0xf]
    %v908 = vld [vmem:[#allocation14 + $0x24] sm:$0xf]
    %v909 = vld [vmem:[#allocation14 + $0x28] sm:$0xf]
    %v910 = vld [vmem:[#allocation14 + $0x2c] sm:$0xf]
    %v911 = vld [vmem:[#allocation14 + $0x30] sm:$0xf]
    %v912 = vld [vmem:[#allocation14 + $0x34] sm:$0xf]
    %v913 = vld [vmem:[#allocation14 + $0x38] sm:$0xf]
    %v914 = vld [vmem:[#allocation14 + $0x3c] sm:$0xf]
    %v915 = vld [vmem:[%s17] sm:$0x1]
    %v917 = vlaneseq
    %v918 = vshrl.u32 %v917, 7
    %v919 = vsub.s32 0, %v918
    %v920 = vrot.slane %v915, %v919
    %v938 = vunpack.c.l.b16 %v899
    %v939 = vunpack.c.l.b16 %v900
    %v940 = vunpack.c.l.b16 %v901
    %v941 = vunpack.c.l.b16 %v902
    %v942 = vunpack.c.l.b16 %v903
    %v943 = vunpack.c.l.b16 %v904
    %v944 = vunpack.c.l.b16 %v905
    %v945 = vunpack.c.l.b16 %v906
    %v946 = vunpack.c.l.b16 %v907
    %v947 = vunpack.c.l.b16 %v908
    %v948 = vunpack.c.l.b16 %v909
    %v949 = vunpack.c.l.b16 %v910
    %v950 = vunpack.c.l.b16 %v911
    %v951 = vunpack.c.l.b16 %v912
    %v952 = vunpack.c.l.b16 %v913
    %v953 = vunpack.c.l.b16 %v914
    %v954 = vpack.c.b16 %v939, %v938
    %v955 = vpack.c.b16 %v941, %v940
    %v956 = vpack.c.b16 %v943, %v942
    %v957 = vpack.c.b16 %v945, %v944
    %v958 = vpack.c.b16 %v947, %v946
    %v959 = vpack.c.b16 %v949, %v948
    %v960 = vpack.c.b16 %v951, %v950
    %v961 = vpack.c.b16 %v953, %v952
    %970 = vmatprep.subr.bf16.mxu0 0
    %971 = vmatpush1.bf16.msra.mxu0 %v961
    %972 = vmatprep.subr.bf16.mxu0 0
    %973 = vmatpush1.bf16.msra.mxu0 %v960
    %974 = vmatprep.subr.bf16.mxu0 0
    %975 = vmatpush1.bf16.msra.mxu0 %v959
    %976 = vmatprep.subr.bf16.mxu0 0
    %977 = vmatpush1.bf16.msra.mxu0 %v958
    %978 = vmatprep.subr.bf16.mxu0 0
    %979 = vmatpush1.bf16.msra.mxu0 %v957
    %980 = vmatprep.subr.bf16.mxu0 0
    %981 = vmatpush1.bf16.msra.mxu0 %v956
    %982 = vmatprep.subr.bf16.mxu0 0
    %983 = vmatpush1.bf16.msra.mxu0 %v955
    %984 = vmatprep.subr.bf16.mxu0 0
    %985 = vmatpush1.bf16.msra.mxu0 %v954
    %986 = vmatprep.subr.bf16.mxu0 0
    %987 = vmatpush2.bf16.msra.mxu0 0
    %988 = vmatprep.subr.bf16.mxu0 0
    %989 = vmatpush2.bf16.msra.mxu0 0
    %990 = vmatprep.subr.bf16.mxu0 0
    %991 = vmatpush2.bf16.msra.mxu0 0
    %992 = vmatprep.subr.bf16.mxu0 0
    %993 = vmatpush2.bf16.msra.mxu0 0
    %994 = vmatprep.subr.bf16.mxu0 0
    %995 = vmatpush2.bf16.msra.mxu0 0
    %996 = vmatprep.subr.bf16.mxu0 0
    %997 = vmatpush2.bf16.msra.mxu0 0
    %998 = vmatprep.subr.bf16.mxu0 0
    %999 = vmatpush2.bf16.msra.mxu0 0
    %1000 = vmatprep.subr.bf16.mxu0 0
    %1001 = vmatpush2.bf16.msra.mxu0 0
    %1002 = vmatprep.mubr.bf16.mxu0 0
    %1003 = vmatmul.mubr.bf16.gmra.mxu0 %v898
    %v1004 = vpop.f32.mrf.mxu0
    %v1005 = vadd.f32 %v920, %v1004
    %v1006 = vpop.f32.mrf.mxu0
    %v1007 = vpop.f32.mrf.mxu0
    %v1008 = vpop.f32.mrf.mxu0
    %1009 = vdwg.mxu0
    %v1010 = vmax.f32 %v1005, 0.0
    %v1011 = vpack.c.bf16 %v1010, %v1010
    %v1012 = vld [vmem:[#allocation16] sm:$0xf]
    %v1013 = vld [vmem:[#allocation16 + $0x4] sm:$0xf]
    %v1014 = vld [vmem:[#allocation16 + $0x8] sm:$0xf]
    %v1015 = vld [vmem:[#allocation16 + $0xc] sm:$0xf]
    %v1016 = vld [vmem:[#allocation16 + $0x10] sm:$0xf]
    %v1017 = vld [vmem:[#allocation16 + $0x14] sm:$0xf]
    %v1018 = vld [vmem:[#allocation16 + $0x18] sm:$0xf]
    %v1019 = vld [vmem:[#allocation16 + $0x1c] sm:$0xf]
    %v1020 = vld [vmem:[#allocation16 + $0x20] sm:$0xf]
    %v1021 = vld [vmem:[#allocation16 + $0x24] sm:$0xf]
    %v1022 = vld [vmem:[#allocation16 + $0x28] sm:$0xf]
    %v1023 = vld [vmem:[#allocation16 + $0x2c] sm:$0xf]
    %v1024 = vld [vmem:[#allocation16 + $0x30] sm:$0xf]
    %v1025 = vld [vmem:[#allocation16 + $0x34] sm:$0xf]
    %v1026 = vld [vmem:[#allocation16 + $0x38] sm:$0xf]
    %v1027 = vld [vmem:[#allocation16 + $0x3c] sm:$0xf]
    %v1028 = vld [vmem:[%s18] sm:$0x1]
    %v1030 = vlaneseq
    %v1031 = vshrl.u32 %v1030, 7
    %v1032 = vsub.s32 0, %v1031
    %v1033 = vrot.slane %v1028, %v1032
    %v1051 = vunpack.c.l.b16 %v1012
    %v1052 = vunpack.c.l.b16 %v1013
    %v1053 = vunpack.c.l.b16 %v1014
    %v1054 = vunpack.c.l.b16 %v1015
    %v1055 = vunpack.c.l.b16 %v1016
    %v1056 = vunpack.c.l.b16 %v1017
    %v1057 = vunpack.c.l.b16 %v1018
    %v1058 = vunpack.c.l.b16 %v1019
    %v1059 = vunpack.c.l.b16 %v1020
    %v1060 = vunpack.c.l.b16 %v1021
    %v1061 = vunpack.c.l.b16 %v1022
    %v1062 = vunpack.c.l.b16 %v1023
    %v1063 = vunpack.c.l.b16 %v1024
    %v1064 = vunpack.c.l.b16 %v1025
    %v1065 = vunpack.c.l.b16 %v1026
    %v1066 = vunpack.c.l.b16 %v1027
    %v1067 = vpack.c.b16 %v1052, %v1051
    %v1068 = vpack.c.b16 %v1054, %v1053
    %v1069 = vpack.c.b16 %v1056, %v1055
    %v1070 = vpack.c.b16 %v1058, %v1057
    %v1071 = vpack.c.b16 %v1060, %v1059
    %v1072 = vpack.c.b16 %v1062, %v1061
    %v1073 = vpack.c.b16 %v1064, %v1063
    %v1074 = vpack.c.b16 %v1066, %v1065
    %1083 = vmatprep.subr.bf16.mxu0 0
    %1084 = vmatpush1.bf16.msra.mxu0 %v1074
    %1085 = vmatprep.subr.bf16.mxu0 0
    %1086 = vmatpush1.bf16.msra.mxu0 %v1073
    %1087 = vmatprep.subr.bf16.mxu0 0
    %1088 = vmatpush1.bf16.msra.mxu0 %v1072
    %1089 = vmatprep.subr.bf16.mxu0 0
    %1090 = vmatpush1.bf16.msra.mxu0 %v1071
    %1091 = vmatprep.subr.bf16.mxu0 0
    %1092 = vmatpush1.bf16.msra.mxu0 %v1070
    %1093 = vmatprep.subr.bf16.mxu0 0
    %1094 = vmatpush1.bf16.msra.mxu0 %v1069
    %1095 = vmatprep.subr.bf16.mxu0 0
    %1096 = vmatpush1.bf16.msra.mxu0 %v1068
    %1097 = vmatprep.subr.bf16.mxu0 0
    %1098 = vmatpush1.bf16.msra.mxu0 %v1067
    %1099 = vmatprep.subr.bf16.mxu0 0
    %1100 = vmatpush2.bf16.msra.mxu0 0
    %1101 = vmatprep.subr.bf16.mxu0 0
    %1102 = vmatpush2.bf16.msra.mxu0 0
    %1103 = vmatprep.subr.bf16.mxu0 0
    %1104 = vmatpush2.bf16.msra.mxu0 0
    %1105 = vmatprep.subr.bf16.mxu0 0
    %1106 = vmatpush2.bf16.msra.mxu0 0
    %1107 = vmatprep.subr.bf16.mxu0 0
    %1108 = vmatpush2.bf16.msra.mxu0 0
    %1109 = vmatprep.subr.bf16.mxu0 0
    %1110 = vmatpush2.bf16.msra.mxu0 0
    %1111 = vmatprep.subr.bf16.mxu0 0
    %1112 = vmatpush2.bf16.msra.mxu0 0
    %1113 = vmatprep.subr.bf16.mxu0 0
    %1114 = vmatpush2.bf16.msra.mxu0 0
    %1115 = vmatprep.mubr.bf16.mxu0 0
    %1116 = vmatmul.mubr.bf16.gmra.mxu0 %v1011
    %v1117 = vpop.f32.mrf.mxu0
    %v1118 = vadd.f32 %v1033, %v1117
    %v1119 = vpop.f32.mrf.mxu0
    %v1120 = vpop.f32.mrf.mxu0
    %v1121 = vpop.f32.mrf.mxu0
    %1122 = vdwg.mxu0
    %v1123 = vmax.f32 %v1118, 0.0
    %v1124 = vpack.c.bf16 %v1123, %v1123
    %v1125 = vld [vmem:[#allocation17] sm:$0xf]
    %v1126 = vld [vmem:[#allocation17 + $0x4] sm:$0xf]
    %v1127 = vld [vmem:[#allocation17 + $0x8] sm:$0xf]
    %v1128 = vld [vmem:[#allocation17 + $0xc] sm:$0xf]
    %v1129 = vld [vmem:[#allocation17 + $0x10] sm:$0xf]
    %v1130 = vld [vmem:[#allocation17 + $0x14] sm:$0xf]
    %v1131 = vld [vmem:[#allocation17 + $0x18] sm:$0xf]
    %v1132 = vld [vmem:[#allocation17 + $0x1c] sm:$0xf]
    %v1133 = vld [vmem:[#allocation17 + $0x20] sm:$0xf]
    %v1134 = vld [vmem:[#allocation17 + $0x24] sm:$0xf]
    %v1135 = vld [vmem:[#allocation17 + $0x28] sm:$0xf]
    %v1136 = vld [vmem:[#allocation17 + $0x2c] sm:$0xf]
    %v1137 = vld [vmem:[#allocation17 + $0x30] sm:$0xf]
    %v1138 = vld [vmem:[#allocation17 + $0x34] sm:$0xf]
    %v1139 = vld [vmem:[#allocation17 + $0x38] sm:$0xf]
    %v1140 = vld [vmem:[#allocation17 + $0x3c] sm:$0xf]
    %v1141 = vld [vmem:[%s19] sm:$0x1]
    %v1143 = vlaneseq
    %v1144 = vshrl.u32 %v1143, 7
    %v1145 = vsub.s32 0, %v1144
    %v1146 = vrot.slane %v1141, %v1145
    %v1164 = vunpack.c.l.b16 %v1125
    %v1165 = vunpack.c.l.b16 %v1126
    %v1166 = vunpack.c.l.b16 %v1127
    %v1167 = vunpack.c.l.b16 %v1128
    %v1168 = vunpack.c.l.b16 %v1129
    %v1169 = vunpack.c.l.b16 %v1130
    %v1170 = vunpack.c.l.b16 %v1131
    %v1171 = vunpack.c.l.b16 %v1132
    %v1172 = vunpack.c.l.b16 %v1133
    %v1173 = vunpack.c.l.b16 %v1134
    %v1174 = vunpack.c.l.b16 %v1135
    %v1175 = vunpack.c.l.b16 %v1136
    %v1176 = vunpack.c.l.b16 %v1137
    %v1177 = vunpack.c.l.b16 %v1138
    %v1178 = vunpack.c.l.b16 %v1139
    %v1179 = vunpack.c.l.b16 %v1140
    %v1180 = vpack.c.b16 %v1165, %v1164
    %v1181 = vpack.c.b16 %v1167, %v1166
    %v1182 = vpack.c.b16 %v1169, %v1168
    %v1183 = vpack.c.b16 %v1171, %v1170
    %v1184 = vpack.c.b16 %v1173, %v1172
    %v1185 = vpack.c.b16 %v1175, %v1174
    %v1186 = vpack.c.b16 %v1177, %v1176
    %v1187 = vpack.c.b16 %v1179, %v1178
    %1196 = vmatprep.subr.bf16.mxu0 0
    %1197 = vmatpush1.bf16.msra.mxu0 %v1187
    %1198 = vmatprep.subr.bf16.mxu0 0
    %1199 = vmatpush1.bf16.msra.mxu0 %v1186
    %1200 = vmatprep.subr.bf16.mxu0 0
    %1201 = vmatpush1.bf16.msra.mxu0 %v1185
    %1202 = vmatprep.subr.bf16.mxu0 0
    %1203 = vmatpush1.bf16.msra.mxu0 %v1184
    %1204 = vmatprep.subr.bf16.mxu0 0
    %1205 = vmatpush1.bf16.msra.mxu0 %v1183
    %1206 = vmatprep.subr.bf16.mxu0 0
    %1207 = vmatpush1.bf16.msra.mxu0 %v1182
    %1208 = vmatprep.subr.bf16.mxu0 0
    %1209 = vmatpush1.bf16.msra.mxu0 %v1181
    %1210 = vmatprep.subr.bf16.mxu0 0
    %1211 = vmatpush1.bf16.msra.mxu0 %v1180
    %1212 = vmatprep.subr.bf16.mxu0 0
    %1213 = vmatpush2.bf16.msra.mxu0 0
    %1214 = vmatprep.subr.bf16.mxu0 0
    %1215 = vmatpush2.bf16.msra.mxu0 0
    %1216 = vmatprep.subr.bf16.mxu0 0
    %1217 = vmatpush2.bf16.msra.mxu0 0
    %1218 = vmatprep.subr.bf16.mxu0 0
    %1219 = vmatpush2.bf16.msra.mxu0 0
    %1220 = vmatprep.subr.bf16.mxu0 0
    %1221 = vmatpush2.bf16.msra.mxu0 0
    %1222 = vmatprep.subr.bf16.mxu0 0
    %1223 = vmatpush2.bf16.msra.mxu0 0
    %1224 = vmatprep.subr.bf16.mxu0 0
    %1225 = vmatpush2.bf16.msra.mxu0 0
    %1226 = vmatprep.subr.bf16.mxu0 0
    %1227 = vmatpush2.bf16.msra.mxu0 0
    %1228 = vmatprep.mubr.bf16.mxu0 0
    %1229 = vmatmul.mubr.bf16.gmra.mxu0 %v1124
    %v1230 = vpop.f32.mrf.mxu0
    %v1231 = vadd.f32 %v1146, %v1230
    %v1232 = vpop.f32.mrf.mxu0
    %v1233 = vpop.f32.mrf.mxu0
    %v1234 = vpop.f32.mrf.mxu0
    %1235 = vdwg.mxu0
    %v1236 = vmax.f32 %v1231, 0.0
    %v1237 = vpack.c.bf16 %v1236, %v1236
    %v1238 = vld [vmem:[#allocation19] sm:$0xf]
    %v1239 = vld [vmem:[#allocation19 + $0x4] sm:$0xf]
    %v1240 = vld [vmem:[#allocation19 + $0x8] sm:$0xf]
    %v1241 = vld [vmem:[#allocation19 + $0xc] sm:$0xf]
    %v1242 = vld [vmem:[#allocation19 + $0x10] sm:$0xf]
    %v1243 = vld [vmem:[#allocation19 + $0x14] sm:$0xf]
    %v1244 = vld [vmem:[#allocation19 + $0x18] sm:$0xf]
    %v1245 = vld [vmem:[#allocation19 + $0x1c] sm:$0xf]
    %v1246 = vld [vmem:[#allocation19 + $0x20] sm:$0xf]
    %v1247 = vld [vmem:[#allocation19 + $0x24] sm:$0xf]
    %v1248 = vld [vmem:[#allocation19 + $0x28] sm:$0xf]
    %v1249 = vld [vmem:[#allocation19 + $0x2c] sm:$0xf]
    %v1250 = vld [vmem:[#allocation19 + $0x30] sm:$0xf]
    %v1251 = vld [vmem:[#allocation19 + $0x34] sm:$0xf]
    %v1252 = vld [vmem:[#allocation19 + $0x38] sm:$0xf]
    %v1253 = vld [vmem:[#allocation19 + $0x3c] sm:$0xf]
    %v1254 = vld [vmem:[%s20] sm:$0x1]
    %v1256 = vlaneseq
    %v1257 = vshrl.u32 %v1256, 7
    %v1258 = vsub.s32 0, %v1257
    %v1259 = vrot.slane %v1254, %v1258
    %v1277 = vunpack.c.l.b16 %v1238
    %v1278 = vunpack.c.l.b16 %v1239
    %v1279 = vunpack.c.l.b16 %v1240
    %v1280 = vunpack.c.l.b16 %v1241
    %v1281 = vunpack.c.l.b16 %v1242
    %v1282 = vunpack.c.l.b16 %v1243
    %v1283 = vunpack.c.l.b16 %v1244
    %v1284 = vunpack.c.l.b16 %v1245
    %v1285 = vunpack.c.l.b16 %v1246
    %v1286 = vunpack.c.l.b16 %v1247
    %v1287 = vunpack.c.l.b16 %v1248
    %v1288 = vunpack.c.l.b16 %v1249
    %v1289 = vunpack.c.l.b16 %v1250
    %v1290 = vunpack.c.l.b16 %v1251
    %v1291 = vunpack.c.l.b16 %v1252
    %v1292 = vunpack.c.l.b16 %v1253
    %v1293 = vpack.c.b16 %v1278, %v1277
    %v1294 = vpack.c.b16 %v1280, %v1279
    %v1295 = vpack.c.b16 %v1282, %v1281
    %v1296 = vpack.c.b16 %v1284, %v1283
    %v1297 = vpack.c.b16 %v1286, %v1285
    %v1298 = vpack.c.b16 %v1288, %v1287
    %v1299 = vpack.c.b16 %v1290, %v1289
    %v1300 = vpack.c.b16 %v1292, %v1291
    %1309 = vmatprep.subr.bf16.mxu0 0
    %1310 = vmatpush1.bf16.msra.mxu0 %v1300
    %1311 = vmatprep.subr.bf16.mxu0 0
    %1312 = vmatpush1.bf16.msra.mxu0 %v1299
    %1313 = vmatprep.subr.bf16.mxu0 0
    %1314 = vmatpush1.bf16.msra.mxu0 %v1298
    %1315 = vmatprep.subr.bf16.mxu0 0
    %1316 = vmatpush1.bf16.msra.mxu0 %v1297
    %1317 = vmatprep.subr.bf16.mxu0 0
    %1318 = vmatpush1.bf16.msra.mxu0 %v1296
    %1319 = vmatprep.subr.bf16.mxu0 0
    %1320 = vmatpush1.bf16.msra.mxu0 %v1295
    %1321 = vmatprep.subr.bf16.mxu0 0
    %1322 = vmatpush1.bf16.msra.mxu0 %v1294
    %1323 = vmatprep.subr.bf16.mxu0 0
    %1324 = vmatpush1.bf16.msra.mxu0 %v1293
    %1325 = vmatprep.subr.bf16.mxu0 0
    %1326 = vmatpush2.bf16.msra.mxu0 0
    %1327 = vmatprep.subr.bf16.mxu0 0
    %1328 = vmatpush2.bf16.msra.mxu0 0
    %1329 = vmatprep.subr.bf16.mxu0 0
    %1330 = vmatpush2.bf16.msra.mxu0 0
    %1331 = vmatprep.subr.bf16.mxu0 0
    %1332 = vmatpush2.bf16.msra.mxu0 0
    %1333 = vmatprep.subr.bf16.mxu0 0
    %1334 = vmatpush2.bf16.msra.mxu0 0
    %1335 = vmatprep.subr.bf16.mxu0 0
    %1336 = vmatpush2.bf16.msra.mxu0 0
    %1337 = vmatprep.subr.bf16.mxu0 0
    %1338 = vmatpush2.bf16.msra.mxu0 0
    %1339 = vmatprep.subr.bf16.mxu0 0
    %1340 = vmatpush2.bf16.msra.mxu0 0
    %1341 = vmatprep.mubr.bf16.mxu0 0
    %1342 = vmatmul.mubr.bf16.gmra.mxu0 %v1237
    %v1343 = vpop.f32.mrf.mxu0
    %v1344 = vadd.f32 %v1259, %v1343
    %v1345 = vpop.f32.mrf.mxu0
    %v1346 = vpop.f32.mrf.mxu0
    %v1347 = vpop.f32.mrf.mxu0
    %1348 = vdwg.mxu0
    %1349 = vst [vmem:[#allocation20 + $0x28] sm:$0xff] %v1344
    // Predicated region
    $region130: #{tpu_custom_call.1} parent=1 // pred_check
      _
    $region131: #{tpu_custom_call.1} parent=1 // pred_check_branch
      %1351 = sbr.rel (0) target = $region133
    $region132: #{tpu_custom_call.1} parent=1 // pred_region
      %s1353 = ssub.s32 768, 768
      %1354 = vsyncadd [#allocation4], %s1353
      %s1356 = sshll.u32 [#allocation20], 4
      %s1357 = int_to_ptr.vmem [resolvable:$true] %s1356
      %1359 = dma.vmem_to_hbm [thread:$0]  %s1357, 768, %s21, [#allocation4]
    $region133: #{tpu_custom_call.1} parent=1 // pred_fallthru
      _
    // Predicated region
    $region134: #{tpu_custom_call.1} parent=1 // pred_check
      _
    $region135: #{tpu_custom_call.1} parent=1 // pred_check_branch
      %1361 = sbr.rel (0) target = $region137
    $region136: #{tpu_custom_call.1} parent=1 // pred_region
      %1362 = dma.done [#allocation4], 768
    $region137: #{tpu_custom_call.1} parent=1 // pred_fallthru
      _
    %1363 = vsyncpa [#allocation3], 1
    %1364 = vsyncpa [#allocation6], 1
    %1365 = vsyncpa [#allocation9], 1
    %1366 = vsyncpa [#allocation12], 1
    %1367 = vsyncpa [#allocation15], 1
    %1368 = vsyncpa [#allocation18], 1
    %1369 = vsyncpa [#allocation4], 1

</llo_original>
